<compile_context>
chip_gen: v7x
topology: tpu7x:2x2x1
jax: 0.10.0
libtpu: 0.0.40
codegen_flags: <defaults>
</compile_context>

<pallas_src>
import functools
import math

import jax
import jax.numpy as jnp
from jax.experimental import pallas as pl
from jax.experimental.pallas import tpu as pltpu


_VMEM = pl.BlockSpec(memory_space=pltpu.MemorySpace.VMEM)


# ------------------------------ LSTM cell ----------------------------------- #

def _lstm_cell(gin_t, h, c, whh, H):
    """One LSTM step. gin_t: (Bp, 4H) precomputed x@Wih + b. Gate column order: i, f, o, g."""
    g = gin_t + jnp.dot(h, whh, preferred_element_type=jnp.float32)      # (Bp, 4H)
    sig = jax.nn.sigmoid(g[:, :3 * H])                                    # one 3H-lane EUP op
    i_g = sig[:, 0 * H:1 * H]
    f_g = sig[:, 1 * H:2 * H]
    o_g = sig[:, 2 * H:3 * H]
    g_g = jnp.tanh(g[:, 3 * H:4 * H])
    c_new = f_g * c + i_g * g_g
    h_new = o_g * jnp.tanh(c_new)
    return h_new, c_new


# ------------------------------ Fused kernel --------------------------------- #

def fused_sentiment_kernel(ids_ref, table_ref,
                           w0ih_ref, whh0f_ref, whh0b_ref, b0_ref,
                           w1ih_ref, whh1f_ref, whh1b_ref, b1_ref,
                           fcw_ref, fcb_ref, logits_ref,
                           *, seq_len, batch_pad, hidden):
    """Embedding -> 2-layer biLSTM -> Linear, all in one kernel.

    ids_ref:   (S*Bp, 1) int32 token ids, time-major rows (batch padded to Bp=8)
    table_ref: (Vp, E)   embedding table, rows zero-padded to Vp (multiple of 128)
    w0ih:      (E, 8H)   layer-0 input proj, fused fwd|bwd gate columns (each dir: i,f,o,g)
    whh0_*:    (H, 4H)   layer-0 recurrent weights per direction
    b0:        (1, 8H)   layer-0 fused biases (b_ih + b_hh)
    w1ih:      (2, H, 8H) layer-1 input proj split by fwd/bwd input row-halves
    whh1_*:    (H, 4H), b1: (1, 8H)
    fcw:       (2, H, O) fc weight split by fwd/bwd row halves; fcb: (1, O)
    logits_ref:(Bp, O)
    """
    H = hidden
    Bp = batch_pad
    S = seq_len
    G = 4 * H
    SBp = S * Bp

    # ---- Embedding gather as a one-hot MXU matmul (no XLA gather dispatch) ----
    vocab_pad = table_ref.shape[0]
    ids = ids_ref[...]                                                    # (SBp, 1) int32
    lane = jax.lax.broadcasted_iota(jnp.int32, (SBp, vocab_pad), 1)
    onehot = jnp.where(ids == lane, 1.0, 0.0).astype(jnp.float32)         # (SBp, Vp)
    emb = jnp.dot(onehot, table_ref[...], preferred_element_type=jnp.float32)   # (SBp, E)

    # ---- Layer 0: fused fwd+bwd input projection, hoisted out of the time loop ----
    gin0 = jnp.dot(emb, w0ih_ref[...], preferred_element_type=jnp.float32) + b0_ref[...]

    whh0f = whh0f_ref[...]
    whh0b = whh0b_ref[...]
    zeros = jnp.zeros((Bp, H), jnp.float32)
    h_f = c_f = zeros
    h_b = c_b = zeros
    seq_f = [None] * S
    seq_b = [None] * S
    for t in range(S):                                 # fully unrolled recurrence
        tb = S - 1 - t
        h_f, c_f = _lstm_cell(gin0[t * Bp:(t + 1) * Bp, :G], h_f, c_f, whh0f, H)
        h_b, c_b = _lstm_cell(gin0[tb * Bp:(tb + 1) * Bp, G:], h_b, c_b, whh0b, H)
        seq_f[t] = h_f
        seq_b[tb] = h_b

    # Layer-0 output sequences stay on-chip (vregs); single concat, no per-step stores.
    xf = jnp.concatenate(seq_f, axis=0)                # (SBp, H) forward time order
    xb = jnp.concatenate(seq_b, axis=0)                # (SBp, H) forward time order

    # ---- Layer 1: fused input projection (fwd/bwd input halves pre-split, no concat) ----
    gin1 = (jnp.dot(xf, w1ih_ref[0], preferred_element_type=jnp.float32)
            + jnp.dot(xb, w1ih_ref[1], preferred_element_type=jnp.float32)
            + b1_ref[...])

    whh1f = whh1f_ref[...]
    whh1b = whh1b_ref[...]
    h_f = c_f = zeros
    h_b = c_b = zeros
    for t in range(S):                                 # fully unrolled recurrence
        tb = S - 1 - t
        h_f, c_f = _lstm_cell(gin1[t * Bp:(t + 1) * Bp, :G], h_f, c_f, whh1f, H)
        h_b, c_b = _lstm_cell(gin1[tb * Bp:(tb + 1) * Bp, G:], h_b, c_b, whh1b, H)

    # ---- Fused fc on final hidden states (PyTorch cat(hidden[-2], hidden[-1]) @ W + b) ----
    logits_ref[...] = (jnp.dot(h_f, fcw_ref[0], preferred_element_type=jnp.float32)
                       + jnp.dot(h_b, fcw_ref[1], preferred_element_type=jnp.float32)
                       + fcb_ref[...])


# ------------------------------- Wrapper -------------------------------------- #

def sentiment_pallas(params, ids_padded, *, seq_len, batch_pad):
    SBp = ids_padded.shape[0]
    Vp, E = params["table"].shape
    H = params["whh0_f"].shape[0]
    O = params["fc_w"].shape[-1]

    flops = (2 * SBp * Vp * E                       # one-hot gather matmul
             + 2 * SBp * E * 8 * H                  # layer-0 input proj
             + 2 * 2 * SBp * H * 8 * H              # layer-1 input proj (2 halves)
             + 2 * 2 * seq_len * 2 * batch_pad * H * 4 * H   # recurrent, 2 layers x 2 dirs
             + 2 * 2 * batch_pad * H * O)           # fc
    transc = 2 * 2 * seq_len * batch_pad * 5 * H
    bytes_acc = 4 * (SBp + Vp * E + E * 8 * H + 2 * H * 4 * H + 8 * H
                     + 2 * H * 8 * H + 2 * H * 4 * H + 8 * H
                     + 2 * H * O + O + batch_pad * O)

    kernel = functools.partial(fused_sentiment_kernel, seq_len=seq_len,
                               batch_pad=batch_pad, hidden=H)
    return pl.pallas_call(
        kernel,
        out_shape=jax.ShapeDtypeStruct((batch_pad, O), jnp.float32),
        in_specs=[_VMEM] * 12,
        out_specs=_VMEM,
        cost_estimate=pl.CostEstimate(flops=flops, transcendentals=transc,
                                      bytes_accessed=bytes_acc),
    )(ids_padded, params["table"],
      params["w0_ih"], params["whh0_f"], params["whh0_b"], params["b0"],
      params["w1_ih"], params["whh1_f"], params["whh1_b"], params["b1"],
      params["fc_w"], params["fc_b"])


# ---------------------------- Parameter setup -------------------------------- #

def _uniform(key, shape, bound):
    return jax.random.uniform(key, shape, jnp.float32, -bound, bound)


def _reorder_gates(w, H):
    """Reorder PyTorch gate blocks [i, f, g, o] (along axis 0) -> [i, f, o, g]."""
    return jnp.concatenate([w[:2 * H], w[3 * H:4 * H], w[2 * H:3 * H]], axis=0)


def init_params(key, vocab_size, embedding_dim, hidden_dim, output_dim):
    """Parameters mirroring the PyTorch module, stored in kernel-friendly layout.

    Per LSTM direction: wih transposed to (in, 4H) with gate column order i,f,o,g,
    whh (H, 4H), fused bias b_ih + b_hh.  Directions fused along columns -> 8H.
    Layer-1 wih additionally split into (2, H, 8H) fwd/bwd input row halves; fc weight
    split into (2, H, O).  Embedding table zero-padded to 128 rows (one-hot lane width).
    """
    H = hidden_dim
    kit = iter(jax.random.split(key, 24))

    table = jax.random.normal(next(kit), (vocab_size, embedding_dim), jnp.float32)
    vocab_pad = max(128, ((vocab_size + 127) // 128) * 128)
    table = jnp.pad(table, ((0, vocab_pad - vocab_size), (0, 0)))

    bound = 1.0 / math.sqrt(H)

    def direction(in_feat):
        w_ih = _uniform(next(kit), (4 * H, in_feat), bound)      # PyTorch layout (4H, in)
        w_hh = _uniform(next(kit), (4 * H, H), bound)
        b_ih = _uniform(next(kit), (4 * H,), bound)
        b_hh = _uniform(next(kit), (4 * H,), bound)
        wih = jnp.transpose(_reorder_gates(w_ih, H))             # (in, 4H), cols i,f,o,g
        whh = jnp.transpose(_reorder_gates(w_hh, H))             # (H, 4H)
        b = _reorder_gates(b_ih + b_hh, H).reshape(1, 4 * H)
        return wih, whh, b

    w0f, whh0f, b0f = direction(embedding_dim)
    w0b, whh0b, b0b = direction(embedding_dim)
    w1f, whh1f, b1f = direction(2 * H)
    w1b, whh1b, b1b = direction(2 * H)

    fc_bound = 1.0 / math.sqrt(2 * H)
    fc_w = _uniform(next(kit), (output_dim, 2 * H), fc_bound)    # PyTorch (O, 2H)
    fc_b = _uniform(next(kit), (output_dim,), fc_bound)

    return {
        "table": table,                                                    # (Vp, E)
        "w0_ih": jnp.concatenate([w0f, w0b], axis=1),                      # (E, 8H)
        "whh0_f": whh0f, "whh0_b": whh0b,                                  # (H, 4H)
        "b0": jnp.concatenate([b0f, b0b], axis=1),                         # (1, 8H)
        "w1_ih": jnp.concatenate([w1f, w1b], axis=1).reshape(2, H, 8 * H), # (2, H, 8H)
        "whh1_f": whh1f, "whh1_b": whh1b,                                  # (H, 4H)
        "b1": jnp.concatenate([b1f, b1b], axis=1),                         # (1, 8H)
        "fc_w": jnp.transpose(fc_w).reshape(2, H, output_dim),             # (2, H, O)
        "fc_b": fc_b.reshape(1, output_dim),                               # (1, O)
    }


# ------------------------------ Forward pass ---------------------------------- #

@functools.partial(jax.jit, static_argnames=("batch_pad",))
def sentiment_forward(params, text, batch_pad=8):
    """text: (S, B) int32 token ids -> logits (B, output_dim).  Dropout = identity (eval)."""
    S, B = text.shape
    pad = batch_pad - B
    text_p = jnp.pad(text, ((0, 0), (0, pad))) if pad > 0 else text       # pad batch to 8 sublanes
    ids = text_p.reshape(S * batch_pad, 1).astype(jnp.int32)              # time-major flat rows
    logits = sentiment_pallas(params, ids, seq_len=S, batch_pad=batch_pad)
    return logits[:B]


# ---------------------------------- Main --------------------------------------- #

if __name__ == "__main__":
    # Small, module-consistent shapes (hidden_dim=32 -> per-direction fused gate dim 4H = 128 lanes).
    vocab_size = 50
    embedding_dim = 16
    hidden_dim = 32
    output_dim = 1
    seq_len = 8
    batch = 2

    key = jax.random.PRNGKey(0)
    pkey, tkey = jax.random.split(key)

    params = init_params(pkey, vocab_size, embedding_dim, hidden_dim, output_dim)
    text = jax.random.randint(tkey, (seq_len, batch), 0, vocab_size, dtype=jnp.int32)

    logits = sentiment_forward(params, text)
    jax.block_until_ready(logits)

    assert logits.shape == (batch, output_dim), logits.shape
    assert logits.dtype == jnp.float32
    assert bool(jnp.all(jnp.isfinite(logits)))
    print("KERNEL_OK")
</pallas_src>

<mosaic_0001>
module attributes {stable_mosaic.version = 11 : i64} {
  func.func @fused_sentiment_kernel(%arg0: memref<64x1xi32, #tpu.memory_space<vmem>>, %arg1: memref<128x16xf32, #tpu.memory_space<vmem>>, %arg2: memref<16x256xf32, #tpu.memory_space<vmem>>, %arg3: memref<32x128xf32, #tpu.memory_space<vmem>>, %arg4: memref<32x128xf32, #tpu.memory_space<vmem>>, %arg5: memref<1x256xf32, #tpu.memory_space<vmem>>, %arg6: memref<2x32x256xf32, #tpu.memory_space<vmem>>, %arg7: memref<32x128xf32, #tpu.memory_space<vmem>>, %arg8: memref<32x128xf32, #tpu.memory_space<vmem>>, %arg9: memref<1x256xf32, #tpu.memory_space<vmem>>, %arg10: memref<2x32x1xf32, #tpu.memory_space<vmem>>, %arg11: memref<1x1xf32, #tpu.memory_space<vmem>>, %arg12: memref<8x1xf32, #tpu.memory_space<vmem>>) attributes {dimension_semantics = [], scalar_prefetch = 0 : i64, scratch_operands = 0 : i64, tpu.core_type = #tpu.core_type<tc>} {
    %c0 = arith.constant 0 : index
    %c0_0 = arith.constant 0 : index
    %0 = vector.load %arg0[%c0, %c0_0] : memref<64x1xi32, #tpu.memory_space<vmem>>, vector<64x1xi32>
    %1 = tpu.iota {dimensions = array<i32: 1>} : vector<64x128xi32>
    %2 = vector.broadcast %0 : vector<64x1xi32> to vector<64x128xi32>
    %3 = arith.cmpi eq, %2, %1 : vector<64x128xi32>
    %cst = arith.constant 1.000000e+00 : f32
    %cst_1 = arith.constant 0.000000e+00 : f32
    %4 = vector.broadcast %cst : f32 to vector<64x128xf32>
    %5 = vector.broadcast %cst_1 : f32 to vector<64x128xf32>
    %6 = arith.select %3, %4, %5 : vector<64x128xi1>, vector<64x128xf32>
    %c0_2 = arith.constant 0 : index
    %c0_3 = arith.constant 0 : index
    %7 = vector.load %arg1[%c0_2, %c0_3] : memref<128x16xf32, #tpu.memory_space<vmem>>, vector<128x16xf32>
    %cst_4 = arith.constant dense<0.000000e+00> : vector<64x16xf32>
    %8 = tpu.matmul %6, %7, %cst_4 {dimension_numbers = #tpu.dot_dimension_numbers<[1], [0], [0], [1], [0, 0, 1, 1], [], []>} : vector<64x128xf32>, vector<128x16xf32>, vector<64x16xf32> -> vector<64x16xf32>
    %c0_5 = arith.constant 0 : index
    %c0_6 = arith.constant 0 : index
    %9 = vector.load %arg2[%c0_5, %c0_6] : memref<16x256xf32, #tpu.memory_space<vmem>>, vector<16x256xf32>
    %cst_7 = arith.constant dense<0.000000e+00> : vector<64x256xf32>
    %10 = tpu.matmul %8, %9, %cst_7 {dimension_numbers = #tpu.dot_dimension_numbers<[1], [0], [0], [1], [0, 0, 1, 1], [], []>} : vector<64x16xf32>, vector<16x256xf32>, vector<64x256xf32> -> vector<64x256xf32>
    %c0_8 = arith.constant 0 : index
    %c0_9 = arith.constant 0 : index
    %11 = vector.load %arg5[%c0_8, %c0_9] : memref<1x256xf32, #tpu.memory_space<vmem>>, vector<1x256xf32>
    %12 = vector.broadcast %11 : vector<1x256xf32> to vector<64x256xf32>
    %13 = arith.addf %10, %12 : vector<64x256xf32>
    %c0_10 = arith.constant 0 : index
    %c0_11 = arith.constant 0 : index
    %14 = vector.load %arg3[%c0_10, %c0_11] : memref<32x128xf32, #tpu.memory_space<vmem>>, vector<32x128xf32>
    %c0_12 = arith.constant 0 : index
    %c0_13 = arith.constant 0 : index
    %15 = vector.load %arg4[%c0_12, %c0_13] : memref<32x128xf32, #tpu.memory_space<vmem>>, vector<32x128xf32>
    %cst_14 = arith.constant 0.000000e+00 : f32
    %16 = vector.broadcast %cst_14 : f32 to vector<8x32xf32>
    %17 = vector.extract_strided_slice %13 {offsets = [0, 0], sizes = [8, 128], strides = [1, 1]} : vector<64x256xf32> to vector<8x128xf32>
    %cst_15 = arith.constant dense<0.000000e+00> : vector<8x128xf32>
    %18 = tpu.matmul %16, %14, %cst_15 {dimension_numbers = #tpu.dot_dimension_numbers<[1], [0], [0], [1], [0, 0, 1, 1], [], []>} : vector<8x32xf32>, vector<32x128xf32>, vector<8x128xf32> -> vector<8x128xf32>
    %19 = arith.addf %17, %18 : vector<8x128xf32>
    %20 = vector.extract_strided_slice %19 {offsets = [0, 0], sizes = [8, 96], strides = [1, 1]} : vector<8x128xf32> to vector<8x96xf32>
    %21 = arith.negf %20 : vector<8x96xf32>
    %22 = math.exp %21 : vector<8x96xf32>
    %cst_16 = arith.constant 1.000000e+00 : f32
    %23 = vector.broadcast %cst_16 : f32 to vector<8x96xf32>
    %24 = arith.addf %23, %22 : vector<8x96xf32>
    %25 = arith.divf %23, %24 : vector<8x96xf32>
    %26 = vector.extract_strided_slice %25 {offsets = [0, 0], sizes = [8, 32], strides = [1, 1]} : vector<8x96xf32> to vector<8x32xf32>
    %27 = vector.extract_strided_slice %25 {offsets = [0, 32], sizes = [8, 32], strides = [1, 1]} : vector<8x96xf32> to vector<8x32xf32>
    %28 = vector.extract_strided_slice %25 {offsets = [0, 64], sizes = [8, 32], strides = [1, 1]} : vector<8x96xf32> to vector<8x32xf32>
    %29 = vector.extract_strided_slice %19 {offsets = [0, 96], sizes = [8, 32], strides = [1, 1]} : vector<8x128xf32> to vector<8x32xf32>
    %30 = math.tanh %29 : vector<8x32xf32>
    %31 = arith.mulf %27, %16 : vector<8x32xf32>
    %32 = arith.mulf %26, %30 : vector<8x32xf32>
    %33 = arith.addf %31, %32 : vector<8x32xf32>
    %34 = math.tanh %33 : vector<8x32xf32>
    %35 = arith.mulf %28, %34 : vector<8x32xf32>
    %36 = vector.extract_strided_slice %13 {offsets = [56, 128], sizes = [8, 128], strides = [1, 1]} : vector<64x256xf32> to vector<8x128xf32>
    %cst_17 = arith.constant dense<0.000000e+00> : vector<8x128xf32>
    %37 = tpu.matmul %16, %15, %cst_17 {dimension_numbers = #tpu.dot_dimension_numbers<[1], [0], [0], [1], [0, 0, 1, 1], [], []>} : vector<8x32xf32>, vector<32x128xf32>, vector<8x128xf32> -> vector<8x128xf32>
    %38 = arith.addf %36, %37 : vector<8x128xf32>
    %39 = vector.extract_strided_slice %38 {offsets = [0, 0], sizes = [8, 96], strides = [1, 1]} : vector<8x128xf32> to vector<8x96xf32>
    %40 = arith.negf %39 : vector<8x96xf32>
    %41 = math.exp %40 : vector<8x96xf32>
    %cst_18 = arith.constant 1.000000e+00 : f32
    %42 = vector.broadcast %cst_18 : f32 to vector<8x96xf32>
    %43 = arith.addf %42, %41 : vector<8x96xf32>
    %44 = arith.divf %42, %43 : vector<8x96xf32>
    %45 = vector.extract_strided_slice %44 {offsets = [0, 0], sizes = [8, 32], strides = [1, 1]} : vector<8x96xf32> to vector<8x32xf32>
    %46 = vector.extract_strided_slice %44 {offsets = [0, 32], sizes = [8, 32], strides = [1, 1]} : vector<8x96xf32> to vector<8x32xf32>
    %47 = vector.extract_strided_slice %44 {offsets = [0, 64], sizes = [8, 32], strides = [1, 1]} : vector<8x96xf32> to vector<8x32xf32>
    %48 = vector.extract_strided_slice %38 {offsets = [0, 96], sizes = [8, 32], strides = [1, 1]} : vector<8x128xf32> to vector<8x32xf32>
    %49 = math.tanh %48 : vector<8x32xf32>
    %50 = arith.mulf %46, %16 : vector<8x32xf32>
    %51 = arith.mulf %45, %49 : vector<8x32xf32>
    %52 = arith.addf %50, %51 : vector<8x32xf32>
    %53 = math.tanh %52 : vector<8x32xf32>
    %54 = arith.mulf %47, %53 : vector<8x32xf32>
    %55 = vector.extract_strided_slice %13 {offsets = [8, 0], sizes = [8, 128], strides = [1, 1]} : vector<64x256xf32> to vector<8x128xf32>
    %cst_19 = arith.constant dense<0.000000e+00> : vector<8x128xf32>
    %56 = tpu.matmul %35, %14, %cst_19 {dimension_numbers = #tpu.dot_dimension_numbers<[1], [0], [0], [1], [0, 0, 1, 1], [], []>} : vector<8x32xf32>, vector<32x128xf32>, vector<8x128xf32> -> vector<8x128xf32>
    %57 = arith.addf %55, %56 : vector<8x128xf32>
    %58 = vector.extract_strided_slice %57 {offsets = [0, 0], sizes = [8, 96], strides = [1, 1]} : vector<8x128xf32> to vector<8x96xf32>
    %59 = arith.negf %58 : vector<8x96xf32>
    %60 = math.exp %59 : vector<8x96xf32>
    %cst_20 = arith.constant 1.000000e+00 : f32
    %61 = vector.broadcast %cst_20 : f32 to vector<8x96xf32>
    %62 = arith.addf %61, %60 : vector<8x96xf32>
    %63 = arith.divf %61, %62 : vector<8x96xf32>
    %64 = vector.extract_strided_slice %63 {offsets = [0, 0], sizes = [8, 32], strides = [1, 1]} : vector<8x96xf32> to vector<8x32xf32>
    %65 = vector.extract_strided_slice %63 {offsets = [0, 32], sizes = [8, 32], strides = [1, 1]} : vector<8x96xf32> to vector<8x32xf32>
    %66 = vector.extract_strided_slice %63 {offsets = [0, 64], sizes = [8, 32], strides = [1, 1]} : vector<8x96xf32> to vector<8x32xf32>
    %67 = vector.extract_strided_slice %57 {offsets = [0, 96], sizes = [8, 32], strides = [1, 1]} : vector<8x128xf32> to vector<8x32xf32>
    %68 = math.tanh %67 : vector<8x32xf32>
    %69 = arith.mulf %65, %33 : vector<8x32xf32>
    %70 = arith.mulf %64, %68 : vector<8x32xf32>
    %71 = arith.addf %69, %70 : vector<8x32xf32>
    %72 = math.tanh %71 : vector<8x32xf32>
    %73 = arith.mulf %66, %72 : vector<8x32xf32>
    %74 = vector.extract_strided_slice %13 {offsets = [48, 128], sizes = [8, 128], strides = [1, 1]} : vector<64x256xf32> to vector<8x128xf32>
    %cst_21 = arith.constant dense<0.000000e+00> : vector<8x128xf32>
    %75 = tpu.matmul %54, %15, %cst_21 {dimension_numbers = #tpu.dot_dimension_numbers<[1], [0], [0], [1], [0, 0, 1, 1], [], []>} : vector<8x32xf32>, vector<32x128xf32>, vector<8x128xf32> -> vector<8x128xf32>
    %76 = arith.addf %74, %75 : vector<8x128xf32>
    %77 = vector.extract_strided_slice %76 {offsets = [0, 0], sizes = [8, 96], strides = [1, 1]} : vector<8x128xf32> to vector<8x96xf32>
    %78 = arith.negf %77 : vector<8x96xf32>
    %79 = math.exp %78 : vector<8x96xf32>
    %cst_22 = arith.constant 1.000000e+00 : f32
    %80 = vector.broadcast %cst_22 : f32 to vector<8x96xf32>
    %81 = arith.addf %80, %79 : vector<8x96xf32>
    %82 = arith.divf %80, %81 : vector<8x96xf32>
    %83 = vector.extract_strided_slice %82 {offsets = [0, 0], sizes = [8, 32], strides = [1, 1]} : vector<8x96xf32> to vector<8x32xf32>
    %84 = vector.extract_strided_slice %82 {offsets = [0, 32], sizes = [8, 32], strides = [1, 1]} : vector<8x96xf32> to vector<8x32xf32>
    %85 = vector.extract_strided_slice %82 {offsets = [0, 64], sizes = [8, 32], strides = [1, 1]} : vector<8x96xf32> to vector<8x32xf32>
    %86 = vector.extract_strided_slice %76 {offsets = [0, 96], sizes = [8, 32], strides = [1, 1]} : vector<8x128xf32> to vector<8x32xf32>
    %87 = math.tanh %86 : vector<8x32xf32>
    %88 = arith.mulf %84, %52 : vector<8x32xf32>
    %89 = arith.mulf %83, %87 : vector<8x32xf32>
    %90 = arith.addf %88, %89 : vector<8x32xf32>
    %91 = math.tanh %90 : vector<8x32xf32>
    %92 = arith.mulf %85, %91 : vector<8x32xf32>
    %93 = vector.extract_strided_slice %13 {offsets = [16, 0], sizes = [8, 128], strides = [1, 1]} : vector<64x256xf32> to vector<8x128xf32>
    %cst_23 = arith.constant dense<0.000000e+00> : vector<8x128xf32>
    %94 = tpu.matmul %73, %14, %cst_23 {dimension_numbers = #tpu.dot_dimension_numbers<[1], [0], [0], [1], [0, 0, 1, 1], [], []>} : vector<8x32xf32>, vector<32x128xf32>, vector<8x128xf32> -> vector<8x128xf32>
    %95 = arith.addf %93, %94 : vector<8x128xf32>
    %96 = vector.extract_strided_slice %95 {offsets = [0, 0], sizes = [8, 96], strides = [1, 1]} : vector<8x128xf32> to vector<8x96xf32>
    %97 = arith.negf %96 : vector<8x96xf32>
    %98 = math.exp %97 : vector<8x96xf32>
    %cst_24 = arith.constant 1.000000e+00 : f32
    %99 = vector.broadcast %cst_24 : f32 to vector<8x96xf32>
    %100 = arith.addf %99, %98 : vector<8x96xf32>
    %101 = arith.divf %99, %100 : vector<8x96xf32>
    %102 = vector.extract_strided_slice %101 {offsets = [0, 0], sizes = [8, 32], strides = [1, 1]} : vector<8x96xf32> to vector<8x32xf32>
    %103 = vector.extract_strided_slice %101 {offsets = [0, 32], sizes = [8, 32], strides = [1, 1]} : vector<8x96xf32> to vector<8x32xf32>
    %104 = vector.extract_strided_slice %101 {offsets = [0, 64], sizes = [8, 32], strides = [1, 1]} : vector<8x96xf32> to vector<8x32xf32>
    %105 = vector.extract_strided_slice %95 {offsets = [0, 96], sizes = [8, 32], strides = [1, 1]} : vector<8x128xf32> to vector<8x32xf32>
    %106 = math.tanh %105 : vector<8x32xf32>
    %107 = arith.mulf %103, %71 : vector<8x32xf32>
    %108 = arith.mulf %102, %106 : vector<8x32xf32>
    %109 = arith.addf %107, %108 : vector<8x32xf32>
    %110 = math.tanh %109 : vector<8x32xf32>
    %111 = arith.mulf %104, %110 : vector<8x32xf32>
    %112 = vector.extract_strided_slice %13 {offsets = [40, 128], sizes = [8, 128], strides = [1, 1]} : vector<64x256xf32> to vector<8x128xf32>
    %cst_25 = arith.constant dense<0.000000e+00> : vector<8x128xf32>
    %113 = tpu.matmul %92, %15, %cst_25 {dimension_numbers = #tpu.dot_dimension_numbers<[1], [0], [0], [1], [0, 0, 1, 1], [], []>} : vector<8x32xf32>, vector<32x128xf32>, vector<8x128xf32> -> vector<8x128xf32>
    %114 = arith.addf %112, %113 : vector<8x128xf32>
    %115 = vector.extract_strided_slice %114 {offsets = [0, 0], sizes = [8, 96], strides = [1, 1]} : vector<8x128xf32> to vector<8x96xf32>
    %116 = arith.negf %115 : vector<8x96xf32>
    %117 = math.exp %116 : vector<8x96xf32>
    %cst_26 = arith.constant 1.000000e+00 : f32
    %118 = vector.broadcast %cst_26 : f32 to vector<8x96xf32>
    %119 = arith.addf %118, %117 : vector<8x96xf32>
    %120 = arith.divf %118, %119 : vector<8x96xf32>
    %121 = vector.extract_strided_slice %120 {offsets = [0, 0], sizes = [8, 32], strides = [1, 1]} : vector<8x96xf32> to vector<8x32xf32>
    %122 = vector.extract_strided_slice %120 {offsets = [0, 32], sizes = [8, 32], strides = [1, 1]} : vector<8x96xf32> to vector<8x32xf32>
    %123 = vector.extract_strided_slice %120 {offsets = [0, 64], sizes = [8, 32], strides = [1, 1]} : vector<8x96xf32> to vector<8x32xf32>
    %124 = vector.extract_strided_slice %114 {offsets = [0, 96], sizes = [8, 32], strides = [1, 1]} : vector<8x128xf32> to vector<8x32xf32>
    %125 = math.tanh %124 : vector<8x32xf32>
    %126 = arith.mulf %122, %90 : vector<8x32xf32>
    %127 = arith.mulf %121, %125 : vector<8x32xf32>
    %128 = arith.addf %126, %127 : vector<8x32xf32>
    %129 = math.tanh %128 : vector<8x32xf32>
    %130 = arith.mulf %123, %129 : vector<8x32xf32>
    %131 = vector.extract_strided_slice %13 {offsets = [24, 0], sizes = [8, 128], strides = [1, 1]} : vector<64x256xf32> to vector<8x128xf32>
    %cst_27 = arith.constant dense<0.000000e+00> : vector<8x128xf32>
    %132 = tpu.matmul %111, %14, %cst_27 {dimension_numbers = #tpu.dot_dimension_numbers<[1], [0], [0], [1], [0, 0, 1, 1], [], []>} : vector<8x32xf32>, vector<32x128xf32>, vector<8x128xf32> -> vector<8x128xf32>
    %133 = arith.addf %131, %132 : vector<8x128xf32>
    %134 = vector.extract_strided_slice %133 {offsets = [0, 0], sizes = [8, 96], strides = [1, 1]} : vector<8x128xf32> to vector<8x96xf32>
    %135 = arith.negf %134 : vector<8x96xf32>
    %136 = math.exp %135 : vector<8x96xf32>
    %cst_28 = arith.constant 1.000000e+00 : f32
    %137 = vector.broadcast %cst_28 : f32 to vector<8x96xf32>
    %138 = arith.addf %137, %136 : vector<8x96xf32>
    %139 = arith.divf %137, %138 : vector<8x96xf32>
    %140 = vector.extract_strided_slice %139 {offsets = [0, 0], sizes = [8, 32], strides = [1, 1]} : vector<8x96xf32> to vector<8x32xf32>
    %141 = vector.extract_strided_slice %139 {offsets = [0, 32], sizes = [8, 32], strides = [1, 1]} : vector<8x96xf32> to vector<8x32xf32>
    %142 = vector.extract_strided_slice %139 {offsets = [0, 64], sizes = [8, 32], strides = [1, 1]} : vector<8x96xf32> to vector<8x32xf32>
    %143 = vector.extract_strided_slice %133 {offsets = [0, 96], sizes = [8, 32], strides = [1, 1]} : vector<8x128xf32> to vector<8x32xf32>
    %144 = math.tanh %143 : vector<8x32xf32>
    %145 = arith.mulf %141, %109 : vector<8x32xf32>
    %146 = arith.mulf %140, %144 : vector<8x32xf32>
    %147 = arith.addf %145, %146 : vector<8x32xf32>
    %148 = math.tanh %147 : vector<8x32xf32>
    %149 = arith.mulf %142, %148 : vector<8x32xf32>
    %150 = vector.extract_strided_slice %13 {offsets = [32, 128], sizes = [8, 128], strides = [1, 1]} : vector<64x256xf32> to vector<8x128xf32>
    %cst_29 = arith.constant dense<0.000000e+00> : vector<8x128xf32>
    %151 = tpu.matmul %130, %15, %cst_29 {dimension_numbers = #tpu.dot_dimension_numbers<[1], [0], [0], [1], [0, 0, 1, 1], [], []>} : vector<8x32xf32>, vector<32x128xf32>, vector<8x128xf32> -> vector<8x128xf32>
    %152 = arith.addf %150, %151 : vector<8x128xf32>
    %153 = vector.extract_strided_slice %152 {offsets = [0, 0], sizes = [8, 96], strides = [1, 1]} : vector<8x128xf32> to vector<8x96xf32>
    %154 = arith.negf %153 : vector<8x96xf32>
    %155 = math.exp %154 : vector<8x96xf32>
    %cst_30 = arith.constant 1.000000e+00 : f32
    %156 = vector.broadcast %cst_30 : f32 to vector<8x96xf32>
    %157 = arith.addf %156, %155 : vector<8x96xf32>
    %158 = arith.divf %156, %157 : vector<8x96xf32>
    %159 = vector.extract_strided_slice %158 {offsets = [0, 0], sizes = [8, 32], strides = [1, 1]} : vector<8x96xf32> to vector<8x32xf32>
    %160 = vector.extract_strided_slice %158 {offsets = [0, 32], sizes = [8, 32], strides = [1, 1]} : vector<8x96xf32> to vector<8x32xf32>
    %161 = vector.extract_strided_slice %158 {offsets = [0, 64], sizes = [8, 32], strides = [1, 1]} : vector<8x96xf32> to vector<8x32xf32>
    %162 = vector.extract_strided_slice %152 {offsets = [0, 96], sizes = [8, 32], strides = [1, 1]} : vector<8x128xf32> to vector<8x32xf32>
    %163 = math.tanh %162 : vector<8x32xf32>
    %164 = arith.mulf %160, %128 : vector<8x32xf32>
    %165 = arith.mulf %159, %163 : vector<8x32xf32>
    %166 = arith.addf %164, %165 : vector<8x32xf32>
    %167 = math.tanh %166 : vector<8x32xf32>
    %168 = arith.mulf %161, %167 : vector<8x32xf32>
    %169 = vector.extract_strided_slice %13 {offsets = [32, 0], sizes = [8, 128], strides = [1, 1]} : vector<64x256xf32> to vector<8x128xf32>
    %cst_31 = arith.constant dense<0.000000e+00> : vector<8x128xf32>
    %170 = tpu.matmul %149, %14, %cst_31 {dimension_numbers = #tpu.dot_dimension_numbers<[1], [0], [0], [1], [0, 0, 1, 1], [], []>} : vector<8x32xf32>, vector<32x128xf32>, vector<8x128xf32> -> vector<8x128xf32>
    %171 = arith.addf %169, %170 : vector<8x128xf32>
    %172 = vector.extract_strided_slice %171 {offsets = [0, 0], sizes = [8, 96], strides = [1, 1]} : vector<8x128xf32> to vector<8x96xf32>
    %173 = arith.negf %172 : vector<8x96xf32>
    %174 = math.exp %173 : vector<8x96xf32>
    %cst_32 = arith.constant 1.000000e+00 : f32
    %175 = vector.broadcast %cst_32 : f32 to vector<8x96xf32>
    %176 = arith.addf %175, %174 : vector<8x96xf32>
    %177 = arith.divf %175, %176 : vector<8x96xf32>
    %178 = vector.extract_strided_slice %177 {offsets = [0, 0], sizes = [8, 32], strides = [1, 1]} : vector<8x96xf32> to vector<8x32xf32>
    %179 = vector.extract_strided_slice %177 {offsets = [0, 32], sizes = [8, 32], strides = [1, 1]} : vector<8x96xf32> to vector<8x32xf32>
    %180 = vector.extract_strided_slice %177 {offsets = [0, 64], sizes = [8, 32], strides = [1, 1]} : vector<8x96xf32> to vector<8x32xf32>
    %181 = vector.extract_strided_slice %171 {offsets = [0, 96], sizes = [8, 32], strides = [1, 1]} : vector<8x128xf32> to vector<8x32xf32>
    %182 = math.tanh %181 : vector<8x32xf32>
    %183 = arith.mulf %179, %147 : vector<8x32xf32>
    %184 = arith.mulf %178, %182 : vector<8x32xf32>
    %185 = arith.addf %183, %184 : vector<8x32xf32>
    %186 = math.tanh %185 : vector<8x32xf32>
    %187 = arith.mulf %180, %186 : vector<8x32xf32>
    %188 = vector.extract_strided_slice %13 {offsets = [24, 128], sizes = [8, 128], strides = [1, 1]} : vector<64x256xf32> to vector<8x128xf32>
    %cst_33 = arith.constant dense<0.000000e+00> : vector<8x128xf32>
    %189 = tpu.matmul %168, %15, %cst_33 {dimension_numbers = #tpu.dot_dimension_numbers<[1], [0], [0], [1], [0, 0, 1, 1], [], []>} : vector<8x32xf32>, vector<32x128xf32>, vector<8x128xf32> -> vector<8x128xf32>
    %190 = arith.addf %188, %189 : vector<8x128xf32>
    %191 = vector.extract_strided_slice %190 {offsets = [0, 0], sizes = [8, 96], strides = [1, 1]} : vector<8x128xf32> to vector<8x96xf32>
    %192 = arith.negf %191 : vector<8x96xf32>
    %193 = math.exp %192 : vector<8x96xf32>
    %cst_34 = arith.constant 1.000000e+00 : f32
    %194 = vector.broadcast %cst_34 : f32 to vector<8x96xf32>
    %195 = arith.addf %194, %193 : vector<8x96xf32>
    %196 = arith.divf %194, %195 : vector<8x96xf32>
    %197 = vector.extract_strided_slice %196 {offsets = [0, 0], sizes = [8, 32], strides = [1, 1]} : vector<8x96xf32> to vector<8x32xf32>
    %198 = vector.extract_strided_slice %196 {offsets = [0, 32], sizes = [8, 32], strides = [1, 1]} : vector<8x96xf32> to vector<8x32xf32>
    %199 = vector.extract_strided_slice %196 {offsets = [0, 64], sizes = [8, 32], strides = [1, 1]} : vector<8x96xf32> to vector<8x32xf32>
    %200 = vector.extract_strided_slice %190 {offsets = [0, 96], sizes = [8, 32], strides = [1, 1]} : vector<8x128xf32> to vector<8x32xf32>
    %201 = math.tanh %200 : vector<8x32xf32>
    %202 = arith.mulf %198, %166 : vector<8x32xf32>
    %203 = arith.mulf %197, %201 : vector<8x32xf32>
    %204 = arith.addf %202, %203 : vector<8x32xf32>
    %205 = math.tanh %204 : vector<8x32xf32>
    %206 = arith.mulf %199, %205 : vector<8x32xf32>
    %207 = vector.extract_strided_slice %13 {offsets = [40, 0], sizes = [8, 128], strides = [1, 1]} : vector<64x256xf32> to vector<8x128xf32>
    %cst_35 = arith.constant dense<0.000000e+00> : vector<8x128xf32>
    %208 = tpu.matmul %187, %14, %cst_35 {dimension_numbers = #tpu.dot_dimension_numbers<[1], [0], [0], [1], [0, 0, 1, 1], [], []>} : vector<8x32xf32>, vector<32x128xf32>, vector<8x128xf32> -> vector<8x128xf32>
    %209 = arith.addf %207, %208 : vector<8x128xf32>
    %210 = vector.extract_strided_slice %209 {offsets = [0, 0], sizes = [8, 96], strides = [1, 1]} : vector<8x128xf32> to vector<8x96xf32>
    %211 = arith.negf %210 : vector<8x96xf32>
    %212 = math.exp %211 : vector<8x96xf32>
    %cst_36 = arith.constant 1.000000e+00 : f32
    %213 = vector.broadcast %cst_36 : f32 to vector<8x96xf32>
    %214 = arith.addf %213, %212 : vector<8x96xf32>
    %215 = arith.divf %213, %214 : vector<8x96xf32>
    %216 = vector.extract_strided_slice %215 {offsets = [0, 0], sizes = [8, 32], strides = [1, 1]} : vector<8x96xf32> to vector<8x32xf32>
    %217 = vector.extract_strided_slice %215 {offsets = [0, 32], sizes = [8, 32], strides = [1, 1]} : vector<8x96xf32> to vector<8x32xf32>
    %218 = vector.extract_strided_slice %215 {offsets = [0, 64], sizes = [8, 32], strides = [1, 1]} : vector<8x96xf32> to vector<8x32xf32>
    %219 = vector.extract_strided_slice %209 {offsets = [0, 96], sizes = [8, 32], strides = [1, 1]} : vector<8x128xf32> to vector<8x32xf32>
    %220 = math.tanh %219 : vector<8x32xf32>
    %221 = arith.mulf %217, %185 : vector<8x32xf32>
    %222 = arith.mulf %216, %220 : vector<8x32xf32>
    %223 = arith.addf %221, %222 : vector<8x32xf32>
    %224 = math.tanh %223 : vector<8x32xf32>
    %225 = arith.mulf %218, %224 : vector<8x32xf32>
    %226 = vector.extract_strided_slice %13 {offsets = [16, 128], sizes = [8, 128], strides = [1, 1]} : vector<64x256xf32> to vector<8x128xf32>
    %cst_37 = arith.constant dense<0.000000e+00> : vector<8x128xf32>
    %227 = tpu.matmul %206, %15, %cst_37 {dimension_numbers = #tpu.dot_dimension_numbers<[1], [0], [0], [1], [0, 0, 1, 1], [], []>} : vector<8x32xf32>, vector<32x128xf32>, vector<8x128xf32> -> vector<8x128xf32>
    %228 = arith.addf %226, %227 : vector<8x128xf32>
    %229 = vector.extract_strided_slice %228 {offsets = [0, 0], sizes = [8, 96], strides = [1, 1]} : vector<8x128xf32> to vector<8x96xf32>
    %230 = arith.negf %229 : vector<8x96xf32>
    %231 = math.exp %230 : vector<8x96xf32>
    %cst_38 = arith.constant 1.000000e+00 : f32
    %232 = vector.broadcast %cst_38 : f32 to vector<8x96xf32>
    %233 = arith.addf %232, %231 : vector<8x96xf32>
    %234 = arith.divf %232, %233 : vector<8x96xf32>
    %235 = vector.extract_strided_slice %234 {offsets = [0, 0], sizes = [8, 32], strides = [1, 1]} : vector<8x96xf32> to vector<8x32xf32>
    %236 = vector.extract_strided_slice %234 {offsets = [0, 32], sizes = [8, 32], strides = [1, 1]} : vector<8x96xf32> to vector<8x32xf32>
    %237 = vector.extract_strided_slice %234 {offsets = [0, 64], sizes = [8, 32], strides = [1, 1]} : vector<8x96xf32> to vector<8x32xf32>
    %238 = vector.extract_strided_slice %228 {offsets = [0, 96], sizes = [8, 32], strides = [1, 1]} : vector<8x128xf32> to vector<8x32xf32>
    %239 = math.tanh %238 : vector<8x32xf32>
    %240 = arith.mulf %236, %204 : vector<8x32xf32>
    %241 = arith.mulf %235, %239 : vector<8x32xf32>
    %242 = arith.addf %240, %241 : vector<8x32xf32>
    %243 = math.tanh %242 : vector<8x32xf32>
    %244 = arith.mulf %237, %243 : vector<8x32xf32>
    %245 = vector.extract_strided_slice %13 {offsets = [48, 0], sizes = [8, 128], strides = [1, 1]} : vector<64x256xf32> to vector<8x128xf32>
    %cst_39 = arith.constant dense<0.000000e+00> : vector<8x128xf32>
    %246 = tpu.matmul %225, %14, %cst_39 {dimension_numbers = #tpu.dot_dimension_numbers<[1], [0], [0], [1], [0, 0, 1, 1], [], []>} : vector<8x32xf32>, vector<32x128xf32>, vector<8x128xf32> -> vector<8x128xf32>
    %247 = arith.addf %245, %246 : vector<8x128xf32>
    %248 = vector.extract_strided_slice %247 {offsets = [0, 0], sizes = [8, 96], strides = [1, 1]} : vector<8x128xf32> to vector<8x96xf32>
    %249 = arith.negf %248 : vector<8x96xf32>
    %250 = math.exp %249 : vector<8x96xf32>
    %cst_40 = arith.constant 1.000000e+00 : f32
    %251 = vector.broadcast %cst_40 : f32 to vector<8x96xf32>
    %252 = arith.addf %251, %250 : vector<8x96xf32>
    %253 = arith.divf %251, %252 : vector<8x96xf32>
    %254 = vector.extract_strided_slice %253 {offsets = [0, 0], sizes = [8, 32], strides = [1, 1]} : vector<8x96xf32> to vector<8x32xf32>
    %255 = vector.extract_strided_slice %253 {offsets = [0, 32], sizes = [8, 32], strides = [1, 1]} : vector<8x96xf32> to vector<8x32xf32>
    %256 = vector.extract_strided_slice %253 {offsets = [0, 64], sizes = [8, 32], strides = [1, 1]} : vector<8x96xf32> to vector<8x32xf32>
    %257 = vector.extract_strided_slice %247 {offsets = [0, 96], sizes = [8, 32], strides = [1, 1]} : vector<8x128xf32> to vector<8x32xf32>
    %258 = math.tanh %257 : vector<8x32xf32>
    %259 = arith.mulf %255, %223 : vector<8x32xf32>
    %260 = arith.mulf %254, %258 : vector<8x32xf32>
    %261 = arith.addf %259, %260 : vector<8x32xf32>
    %262 = math.tanh %261 : vector<8x32xf32>
    %263 = arith.mulf %256, %262 : vector<8x32xf32>
    %264 = vector.extract_strided_slice %13 {offsets = [8, 128], sizes = [8, 128], strides = [1, 1]} : vector<64x256xf32> to vector<8x128xf32>
    %cst_41 = arith.constant dense<0.000000e+00> : vector<8x128xf32>
    %265 = tpu.matmul %244, %15, %cst_41 {dimension_numbers = #tpu.dot_dimension_numbers<[1], [0], [0], [1], [0, 0, 1, 1], [], []>} : vector<8x32xf32>, vector<32x128xf32>, vector<8x128xf32> -> vector<8x128xf32>
    %266 = arith.addf %264, %265 : vector<8x128xf32>
    %267 = vector.extract_strided_slice %266 {offsets = [0, 0], sizes = [8, 96], strides = [1, 1]} : vector<8x128xf32> to vector<8x96xf32>
    %268 = arith.negf %267 : vector<8x96xf32>
    %269 = math.exp %268 : vector<8x96xf32>
    %cst_42 = arith.constant 1.000000e+00 : f32
    %270 = vector.broadcast %cst_42 : f32 to vector<8x96xf32>
    %271 = arith.addf %270, %269 : vector<8x96xf32>
    %272 = arith.divf %270, %271 : vector<8x96xf32>
    %273 = vector.extract_strided_slice %272 {offsets = [0, 0], sizes = [8, 32], strides = [1, 1]} : vector<8x96xf32> to vector<8x32xf32>
    %274 = vector.extract_strided_slice %272 {offsets = [0, 32], sizes = [8, 32], strides = [1, 1]} : vector<8x96xf32> to vector<8x32xf32>
    %275 = vector.extract_strided_slice %272 {offsets = [0, 64], sizes = [8, 32], strides = [1, 1]} : vector<8x96xf32> to vector<8x32xf32>
    %276 = vector.extract_strided_slice %266 {offsets = [0, 96], sizes = [8, 32], strides = [1, 1]} : vector<8x128xf32> to vector<8x32xf32>
    %277 = math.tanh %276 : vector<8x32xf32>
    %278 = arith.mulf %274, %242 : vector<8x32xf32>
    %279 = arith.mulf %273, %277 : vector<8x32xf32>
    %280 = arith.addf %278, %279 : vector<8x32xf32>
    %281 = math.tanh %280 : vector<8x32xf32>
    %282 = arith.mulf %275, %281 : vector<8x32xf32>
    %283 = vector.extract_strided_slice %13 {offsets = [56, 0], sizes = [8, 128], strides = [1, 1]} : vector<64x256xf32> to vector<8x128xf32>
    %cst_43 = arith.constant dense<0.000000e+00> : vector<8x128xf32>
    %284 = tpu.matmul %263, %14, %cst_43 {dimension_numbers = #tpu.dot_dimension_numbers<[1], [0], [0], [1], [0, 0, 1, 1], [], []>} : vector<8x32xf32>, vector<32x128xf32>, vector<8x128xf32> -> vector<8x128xf32>
    %285 = arith.addf %283, %284 : vector<8x128xf32>
    %286 = vector.extract_strided_slice %285 {offsets = [0, 0], sizes = [8, 96], strides = [1, 1]} : vector<8x128xf32> to vector<8x96xf32>
    %287 = arith.negf %286 : vector<8x96xf32>
    %288 = math.exp %287 : vector<8x96xf32>
    %cst_44 = arith.constant 1.000000e+00 : f32
    %289 = vector.broadcast %cst_44 : f32 to vector<8x96xf32>
    %290 = arith.addf %289, %288 : vector<8x96xf32>
    %291 = arith.divf %289, %290 : vector<8x96xf32>
    %292 = vector.extract_strided_slice %291 {offsets = [0, 0], sizes = [8, 32], strides = [1, 1]} : vector<8x96xf32> to vector<8x32xf32>
    %293 = vector.extract_strided_slice %291 {offsets = [0, 32], sizes = [8, 32], strides = [1, 1]} : vector<8x96xf32> to vector<8x32xf32>
    %294 = vector.extract_strided_slice %291 {offsets = [0, 64], sizes = [8, 32], strides = [1, 1]} : vector<8x96xf32> to vector<8x32xf32>
    %295 = vector.extract_strided_slice %285 {offsets = [0, 96], sizes = [8, 32], strides = [1, 1]} : vector<8x128xf32> to vector<8x32xf32>
    %296 = math.tanh %295 : vector<8x32xf32>
    %297 = arith.mulf %293, %261 : vector<8x32xf32>
    %298 = arith.mulf %292, %296 : vector<8x32xf32>
    %299 = arith.addf %297, %298 : vector<8x32xf32>
    %300 = math.tanh %299 : vector<8x32xf32>
    %301 = arith.mulf %294, %300 : vector<8x32xf32>
    %302 = vector.extract_strided_slice %13 {offsets = [0, 128], sizes = [8, 128], strides = [1, 1]} : vector<64x256xf32> to vector<8x128xf32>
    %cst_45 = arith.constant dense<0.000000e+00> : vector<8x128xf32>
    %303 = tpu.matmul %282, %15, %cst_45 {dimension_numbers = #tpu.dot_dimension_numbers<[1], [0], [0], [1], [0, 0, 1, 1], [], []>} : vector<8x32xf32>, vector<32x128xf32>, vector<8x128xf32> -> vector<8x128xf32>
    %304 = arith.addf %302, %303 : vector<8x128xf32>
    %305 = vector.extract_strided_slice %304 {offsets = [0, 0], sizes = [8, 96], strides = [1, 1]} : vector<8x128xf32> to vector<8x96xf32>
    %306 = arith.negf %305 : vector<8x96xf32>
    %307 = math.exp %306 : vector<8x96xf32>
    %cst_46 = arith.constant 1.000000e+00 : f32
    %308 = vector.broadcast %cst_46 : f32 to vector<8x96xf32>
    %309 = arith.addf %308, %307 : vector<8x96xf32>
    %310 = arith.divf %308, %309 : vector<8x96xf32>
    %311 = vector.extract_strided_slice %310 {offsets = [0, 0], sizes = [8, 32], strides = [1, 1]} : vector<8x96xf32> to vector<8x32xf32>
    %312 = vector.extract_strided_slice %310 {offsets = [0, 32], sizes = [8, 32], strides = [1, 1]} : vector<8x96xf32> to vector<8x32xf32>
    %313 = vector.extract_strided_slice %310 {offsets = [0, 64], sizes = [8, 32], strides = [1, 1]} : vector<8x96xf32> to vector<8x32xf32>
    %314 = vector.extract_strided_slice %304 {offsets = [0, 96], sizes = [8, 32], strides = [1, 1]} : vector<8x128xf32> to vector<8x32xf32>
    %315 = math.tanh %314 : vector<8x32xf32>
    %316 = arith.mulf %312, %280 : vector<8x32xf32>
    %317 = arith.mulf %311, %315 : vector<8x32xf32>
    %318 = arith.addf %316, %317 : vector<8x32xf32>
    %319 = math.tanh %318 : vector<8x32xf32>
    %320 = arith.mulf %313, %319 : vector<8x32xf32>
    %321 = tpu.concatenate %35, %73, %111, %149, %187, %225, %263, %301 in 0 : vector<8x32xf32>, vector<8x32xf32>, vector<8x32xf32>, vector<8x32xf32>, vector<8x32xf32>, vector<8x32xf32>, vector<8x32xf32>, vector<8x32xf32> -> vector<64x32xf32>
    %322 = tpu.concatenate %320, %282, %244, %206, %168, %130, %92, %54 in 0 : vector<8x32xf32>, vector<8x32xf32>, vector<8x32xf32>, vector<8x32xf32>, vector<8x32xf32>, vector<8x32xf32>, vector<8x32xf32>, vector<8x32xf32> -> vector<64x32xf32>
    %c0_47 = arith.constant 0 : index
    %c0_48 = arith.constant 0 : index
    %c0_49 = arith.constant 0 : index
    %323 = vector.load %arg6[%c0_47, %c0_48, %c0_49] : memref<2x32x256xf32, #tpu.memory_space<vmem>>, vector<1x32x256xf32>
    %324 = vector.shape_cast %323 : vector<1x32x256xf32> to vector<32x256xf32>
    %cst_50 = arith.constant dense<0.000000e+00> : vector<64x256xf32>
    %325 = tpu.matmul %321, %324, %cst_50 {dimension_numbers = #tpu.dot_dimension_numbers<[1], [0], [0], [1], [0, 0, 1, 1], [], []>} : vector<64x32xf32>, vector<32x256xf32>, vector<64x256xf32> -> vector<64x256xf32>
    %c1 = arith.constant 1 : index
    %c0_51 = arith.constant 0 : index
    %c0_52 = arith.constant 0 : index
    %326 = vector.load %arg6[%c1, %c0_51, %c0_52] : memref<2x32x256xf32, #tpu.memory_space<vmem>>, vector<1x32x256xf32>
    %327 = vector.shape_cast %326 : vector<1x32x256xf32> to vector<32x256xf32>
    %cst_53 = arith.constant dense<0.000000e+00> : vector<64x256xf32>
    %328 = tpu.matmul %322, %327, %cst_53 {dimension_numbers = #tpu.dot_dimension_numbers<[1], [0], [0], [1], [0, 0, 1, 1], [], []>} : vector<64x32xf32>, vector<32x256xf32>, vector<64x256xf32> -> vector<64x256xf32>
    %329 = arith.addf %325, %328 : vector<64x256xf32>
    %c0_54 = arith.constant 0 : index
    %c0_55 = arith.constant 0 : index
    %330 = vector.load %arg9[%c0_54, %c0_55] : memref<1x256xf32, #tpu.memory_space<vmem>>, vector<1x256xf32>
    %331 = vector.broadcast %330 : vector<1x256xf32> to vector<64x256xf32>
    %332 = arith.addf %329, %331 : vector<64x256xf32>
    %c0_56 = arith.constant 0 : index
    %c0_57 = arith.constant 0 : index
    %333 = vector.load %arg7[%c0_56, %c0_57] : memref<32x128xf32, #tpu.memory_space<vmem>>, vector<32x128xf32>
    %c0_58 = arith.constant 0 : index
    %c0_59 = arith.constant 0 : index
    %334 = vector.load %arg8[%c0_58, %c0_59] : memref<32x128xf32, #tpu.memory_space<vmem>>, vector<32x128xf32>
    %335 = vector.extract_strided_slice %332 {offsets = [0, 0], sizes = [8, 128], strides = [1, 1]} : vector<64x256xf32> to vector<8x128xf32>
    %cst_60 = arith.constant dense<0.000000e+00> : vector<8x128xf32>
    %336 = tpu.matmul %16, %333, %cst_60 {dimension_numbers = #tpu.dot_dimension_numbers<[1], [0], [0], [1], [0, 0, 1, 1], [], []>} : vector<8x32xf32>, vector<32x128xf32>, vector<8x128xf32> -> vector<8x128xf32>
    %337 = arith.addf %335, %336 : vector<8x128xf32>
    %338 = vector.extract_strided_slice %337 {offsets = [0, 0], sizes = [8, 96], strides = [1, 1]} : vector<8x128xf32> to vector<8x96xf32>
    %339 = arith.negf %338 : vector<8x96xf32>
    %340 = math.exp %339 : vector<8x96xf32>
    %cst_61 = arith.constant 1.000000e+00 : f32
    %341 = vector.broadcast %cst_61 : f32 to vector<8x96xf32>
    %342 = arith.addf %341, %340 : vector<8x96xf32>
    %343 = arith.divf %341, %342 : vector<8x96xf32>
    %344 = vector.extract_strided_slice %343 {offsets = [0, 0], sizes = [8, 32], strides = [1, 1]} : vector<8x96xf32> to vector<8x32xf32>
    %345 = vector.extract_strided_slice %343 {offsets = [0, 32], sizes = [8, 32], strides = [1, 1]} : vector<8x96xf32> to vector<8x32xf32>
    %346 = vector.extract_strided_slice %343 {offsets = [0, 64], sizes = [8, 32], strides = [1, 1]} : vector<8x96xf32> to vector<8x32xf32>
    %347 = vector.extract_strided_slice %337 {offsets = [0, 96], sizes = [8, 32], strides = [1, 1]} : vector<8x128xf32> to vector<8x32xf32>
    %348 = math.tanh %347 : vector<8x32xf32>
    %349 = arith.mulf %345, %16 : vector<8x32xf32>
    %350 = arith.mulf %344, %348 : vector<8x32xf32>
    %351 = arith.addf %349, %350 : vector<8x32xf32>
    %352 = math.tanh %351 : vector<8x32xf32>
    %353 = arith.mulf %346, %352 : vector<8x32xf32>
    %354 = vector.extract_strided_slice %332 {offsets = [56, 128], sizes = [8, 128], strides = [1, 1]} : vector<64x256xf32> to vector<8x128xf32>
    %cst_62 = arith.constant dense<0.000000e+00> : vector<8x128xf32>
    %355 = tpu.matmul %16, %334, %cst_62 {dimension_numbers = #tpu.dot_dimension_numbers<[1], [0], [0], [1], [0, 0, 1, 1], [], []>} : vector<8x32xf32>, vector<32x128xf32>, vector<8x128xf32> -> vector<8x128xf32>
    %356 = arith.addf %354, %355 : vector<8x128xf32>
    %357 = vector.extract_strided_slice %356 {offsets = [0, 0], sizes = [8, 96], strides = [1, 1]} : vector<8x128xf32> to vector<8x96xf32>
    %358 = arith.negf %357 : vector<8x96xf32>
    %359 = math.exp %358 : vector<8x96xf32>
    %cst_63 = arith.constant 1.000000e+00 : f32
    %360 = vector.broadcast %cst_63 : f32 to vector<8x96xf32>
    %361 = arith.addf %360, %359 : vector<8x96xf32>
    %362 = arith.divf %360, %361 : vector<8x96xf32>
    %363 = vector.extract_strided_slice %362 {offsets = [0, 0], sizes = [8, 32], strides = [1, 1]} : vector<8x96xf32> to vector<8x32xf32>
    %364 = vector.extract_strided_slice %362 {offsets = [0, 32], sizes = [8, 32], strides = [1, 1]} : vector<8x96xf32> to vector<8x32xf32>
    %365 = vector.extract_strided_slice %362 {offsets = [0, 64], sizes = [8, 32], strides = [1, 1]} : vector<8x96xf32> to vector<8x32xf32>
    %366 = vector.extract_strided_slice %356 {offsets = [0, 96], sizes = [8, 32], strides = [1, 1]} : vector<8x128xf32> to vector<8x32xf32>
    %367 = math.tanh %366 : vector<8x32xf32>
    %368 = arith.mulf %364, %16 : vector<8x32xf32>
    %369 = arith.mulf %363, %367 : vector<8x32xf32>
    %370 = arith.addf %368, %369 : vector<8x32xf32>
    %371 = math.tanh %370 : vector<8x32xf32>
    %372 = arith.mulf %365, %371 : vector<8x32xf32>
    %373 = vector.extract_strided_slice %332 {offsets = [8, 0], sizes = [8, 128], strides = [1, 1]} : vector<64x256xf32> to vector<8x128xf32>
    %cst_64 = arith.constant dense<0.000000e+00> : vector<8x128xf32>
    %374 = tpu.matmul %353, %333, %cst_64 {dimension_numbers = #tpu.dot_dimension_numbers<[1], [0], [0], [1], [0, 0, 1, 1], [], []>} : vector<8x32xf32>, vector<32x128xf32>, vector<8x128xf32> -> vector<8x128xf32>
    %375 = arith.addf %373, %374 : vector<8x128xf32>
    %376 = vector.extract_strided_slice %375 {offsets = [0, 0], sizes = [8, 96], strides = [1, 1]} : vector<8x128xf32> to vector<8x96xf32>
    %377 = arith.negf %376 : vector<8x96xf32>
    %378 = math.exp %377 : vector<8x96xf32>
    %cst_65 = arith.constant 1.000000e+00 : f32
    %379 = vector.broadcast %cst_65 : f32 to vector<8x96xf32>
    %380 = arith.addf %379, %378 : vector<8x96xf32>
    %381 = arith.divf %379, %380 : vector<8x96xf32>
    %382 = vector.extract_strided_slice %381 {offsets = [0, 0], sizes = [8, 32], strides = [1, 1]} : vector<8x96xf32> to vector<8x32xf32>
    %383 = vector.extract_strided_slice %381 {offsets = [0, 32], sizes = [8, 32], strides = [1, 1]} : vector<8x96xf32> to vector<8x32xf32>
    %384 = vector.extract_strided_slice %381 {offsets = [0, 64], sizes = [8, 32], strides = [1, 1]} : vector<8x96xf32> to vector<8x32xf32>
    %385 = vector.extract_strided_slice %375 {offsets = [0, 96], sizes = [8, 32], strides = [1, 1]} : vector<8x128xf32> to vector<8x32xf32>
    %386 = math.tanh %385 : vector<8x32xf32>
    %387 = arith.mulf %383, %351 : vector<8x32xf32>
    %388 = arith.mulf %382, %386 : vector<8x32xf32>
    %389 = arith.addf %387, %388 : vector<8x32xf32>
    %390 = math.tanh %389 : vector<8x32xf32>
    %391 = arith.mulf %384, %390 : vector<8x32xf32>
    %392 = vector.extract_strided_slice %332 {offsets = [48, 128], sizes = [8, 128], strides = [1, 1]} : vector<64x256xf32> to vector<8x128xf32>
    %cst_66 = arith.constant dense<0.000000e+00> : vector<8x128xf32>
    %393 = tpu.matmul %372, %334, %cst_66 {dimension_numbers = #tpu.dot_dimension_numbers<[1], [0], [0], [1], [0, 0, 1, 1], [], []>} : vector<8x32xf32>, vector<32x128xf32>, vector<8x128xf32> -> vector<8x128xf32>
    %394 = arith.addf %392, %393 : vector<8x128xf32>
    %395 = vector.extract_strided_slice %394 {offsets = [0, 0], sizes = [8, 96], strides = [1, 1]} : vector<8x128xf32> to vector<8x96xf32>
    %396 = arith.negf %395 : vector<8x96xf32>
    %397 = math.exp %396 : vector<8x96xf32>
    %cst_67 = arith.constant 1.000000e+00 : f32
    %398 = vector.broadcast %cst_67 : f32 to vector<8x96xf32>
    %399 = arith.addf %398, %397 : vector<8x96xf32>
    %400 = arith.divf %398, %399 : vector<8x96xf32>
    %401 = vector.extract_strided_slice %400 {offsets = [0, 0], sizes = [8, 32], strides = [1, 1]} : vector<8x96xf32> to vector<8x32xf32>
    %402 = vector.extract_strided_slice %400 {offsets = [0, 32], sizes = [8, 32], strides = [1, 1]} : vector<8x96xf32> to vector<8x32xf32>
    %403 = vector.extract_strided_slice %400 {offsets = [0, 64], sizes = [8, 32], strides = [1, 1]} : vector<8x96xf32> to vector<8x32xf32>
    %404 = vector.extract_strided_slice %394 {offsets = [0, 96], sizes = [8, 32], strides = [1, 1]} : vector<8x128xf32> to vector<8x32xf32>
    %405 = math.tanh %404 : vector<8x32xf32>
    %406 = arith.mulf %402, %370 : vector<8x32xf32>
    %407 = arith.mulf %401, %405 : vector<8x32xf32>
    %408 = arith.addf %406, %407 : vector<8x32xf32>
    %409 = math.tanh %408 : vector<8x32xf32>
    %410 = arith.mulf %403, %409 : vector<8x32xf32>
    %411 = vector.extract_strided_slice %332 {offsets = [16, 0], sizes = [8, 128], strides = [1, 1]} : vector<64x256xf32> to vector<8x128xf32>
    %cst_68 = arith.constant dense<0.000000e+00> : vector<8x128xf32>
    %412 = tpu.matmul %391, %333, %cst_68 {dimension_numbers = #tpu.dot_dimension_numbers<[1], [0], [0], [1], [0, 0, 1, 1], [], []>} : vector<8x32xf32>, vector<32x128xf32>, vector<8x128xf32> -> vector<8x128xf32>
    %413 = arith.addf %411, %412 : vector<8x128xf32>
    %414 = vector.extract_strided_slice %413 {offsets = [0, 0], sizes = [8, 96], strides = [1, 1]} : vector<8x128xf32> to vector<8x96xf32>
    %415 = arith.negf %414 : vector<8x96xf32>
    %416 = math.exp %415 : vector<8x96xf32>
    %cst_69 = arith.constant 1.000000e+00 : f32
    %417 = vector.broadcast %cst_69 : f32 to vector<8x96xf32>
    %418 = arith.addf %417, %416 : vector<8x96xf32>
    %419 = arith.divf %417, %418 : vector<8x96xf32>
    %420 = vector.extract_strided_slice %419 {offsets = [0, 0], sizes = [8, 32], strides = [1, 1]} : vector<8x96xf32> to vector<8x32xf32>
    %421 = vector.extract_strided_slice %419 {offsets = [0, 32], sizes = [8, 32], strides = [1, 1]} : vector<8x96xf32> to vector<8x32xf32>
    %422 = vector.extract_strided_slice %419 {offsets = [0, 64], sizes = [8, 32], strides = [1, 1]} : vector<8x96xf32> to vector<8x32xf32>
    %423 = vector.extract_strided_slice %413 {offsets = [0, 96], sizes = [8, 32], strides = [1, 1]} : vector<8x128xf32> to vector<8x32xf32>
    %424 = math.tanh %423 : vector<8x32xf32>
    %425 = arith.mulf %421, %389 : vector<8x32xf32>
    %426 = arith.mulf %420, %424 : vector<8x32xf32>
    %427 = arith.addf %425, %426 : vector<8x32xf32>
    %428 = math.tanh %427 : vector<8x32xf32>
    %429 = arith.mulf %422, %428 : vector<8x32xf32>
    %430 = vector.extract_strided_slice %332 {offsets = [40, 128], sizes = [8, 128], strides = [1, 1]} : vector<64x256xf32> to vector<8x128xf32>
    %cst_70 = arith.constant dense<0.000000e+00> : vector<8x128xf32>
    %431 = tpu.matmul %410, %334, %cst_70 {dimension_numbers = #tpu.dot_dimension_numbers<[1], [0], [0], [1], [0, 0, 1, 1], [], []>} : vector<8x32xf32>, vector<32x128xf32>, vector<8x128xf32> -> vector<8x128xf32>
    %432 = arith.addf %430, %431 : vector<8x128xf32>
    %433 = vector.extract_strided_slice %432 {offsets = [0, 0], sizes = [8, 96], strides = [1, 1]} : vector<8x128xf32> to vector<8x96xf32>
    %434 = arith.negf %433 : vector<8x96xf32>
    %435 = math.exp %434 : vector<8x96xf32>
    %cst_71 = arith.constant 1.000000e+00 : f32
    %436 = vector.broadcast %cst_71 : f32 to vector<8x96xf32>
    %437 = arith.addf %436, %435 : vector<8x96xf32>
    %438 = arith.divf %436, %437 : vector<8x96xf32>
    %439 = vector.extract_strided_slice %438 {offsets = [0, 0], sizes = [8, 32], strides = [1, 1]} : vector<8x96xf32> to vector<8x32xf32>
    %440 = vector.extract_strided_slice %438 {offsets = [0, 32], sizes = [8, 32], strides = [1, 1]} : vector<8x96xf32> to vector<8x32xf32>
    %441 = vector.extract_strided_slice %438 {offsets = [0, 64], sizes = [8, 32], strides = [1, 1]} : vector<8x96xf32> to vector<8x32xf32>
    %442 = vector.extract_strided_slice %432 {offsets = [0, 96], sizes = [8, 32], strides = [1, 1]} : vector<8x128xf32> to vector<8x32xf32>
    %443 = math.tanh %442 : vector<8x32xf32>
    %444 = arith.mulf %440, %408 : vector<8x32xf32>
    %445 = arith.mulf %439, %443 : vector<8x32xf32>
    %446 = arith.addf %444, %445 : vector<8x32xf32>
    %447 = math.tanh %446 : vector<8x32xf32>
    %448 = arith.mulf %441, %447 : vector<8x32xf32>
    %449 = vector.extract_strided_slice %332 {offsets = [24, 0], sizes = [8, 128], strides = [1, 1]} : vector<64x256xf32> to vector<8x128xf32>
    %cst_72 = arith.constant dense<0.000000e+00> : vector<8x128xf32>
    %450 = tpu.matmul %429, %333, %cst_72 {dimension_numbers = #tpu.dot_dimension_numbers<[1], [0], [0], [1], [0, 0, 1, 1], [], []>} : vector<8x32xf32>, vector<32x128xf32>, vector<8x128xf32> -> vector<8x128xf32>
    %451 = arith.addf %449, %450 : vector<8x128xf32>
    %452 = vector.extract_strided_slice %451 {offsets = [0, 0], sizes = [8, 96], strides = [1, 1]} : vector<8x128xf32> to vector<8x96xf32>
    %453 = arith.negf %452 : vector<8x96xf32>
    %454 = math.exp %453 : vector<8x96xf32>
    %cst_73 = arith.constant 1.000000e+00 : f32
    %455 = vector.broadcast %cst_73 : f32 to vector<8x96xf32>
    %456 = arith.addf %455, %454 : vector<8x96xf32>
    %457 = arith.divf %455, %456 : vector<8x96xf32>
    %458 = vector.extract_strided_slice %457 {offsets = [0, 0], sizes = [8, 32], strides = [1, 1]} : vector<8x96xf32> to vector<8x32xf32>
    %459 = vector.extract_strided_slice %457 {offsets = [0, 32], sizes = [8, 32], strides = [1, 1]} : vector<8x96xf32> to vector<8x32xf32>
    %460 = vector.extract_strided_slice %457 {offsets = [0, 64], sizes = [8, 32], strides = [1, 1]} : vector<8x96xf32> to vector<8x32xf32>
    %461 = vector.extract_strided_slice %451 {offsets = [0, 96], sizes = [8, 32], strides = [1, 1]} : vector<8x128xf32> to vector<8x32xf32>
    %462 = math.tanh %461 : vector<8x32xf32>
    %463 = arith.mulf %459, %427 : vector<8x32xf32>
    %464 = arith.mulf %458, %462 : vector<8x32xf32>
    %465 = arith.addf %463, %464 : vector<8x32xf32>
    %466 = math.tanh %465 : vector<8x32xf32>
    %467 = arith.mulf %460, %466 : vector<8x32xf32>
    %468 = vector.extract_strided_slice %332 {offsets = [32, 128], sizes = [8, 128], strides = [1, 1]} : vector<64x256xf32> to vector<8x128xf32>
    %cst_74 = arith.constant dense<0.000000e+00> : vector<8x128xf32>
    %469 = tpu.matmul %448, %334, %cst_74 {dimension_numbers = #tpu.dot_dimension_numbers<[1], [0], [0], [1], [0, 0, 1, 1], [], []>} : vector<8x32xf32>, vector<32x128xf32>, vector<8x128xf32> -> vector<8x128xf32>
    %470 = arith.addf %468, %469 : vector<8x128xf32>
    %471 = vector.extract_strided_slice %470 {offsets = [0, 0], sizes = [8, 96], strides = [1, 1]} : vector<8x128xf32> to vector<8x96xf32>
    %472 = arith.negf %471 : vector<8x96xf32>
    %473 = math.exp %472 : vector<8x96xf32>
    %cst_75 = arith.constant 1.000000e+00 : f32
    %474 = vector.broadcast %cst_75 : f32 to vector<8x96xf32>
    %475 = arith.addf %474, %473 : vector<8x96xf32>
    %476 = arith.divf %474, %475 : vector<8x96xf32>
    %477 = vector.extract_strided_slice %476 {offsets = [0, 0], sizes = [8, 32], strides = [1, 1]} : vector<8x96xf32> to vector<8x32xf32>
    %478 = vector.extract_strided_slice %476 {offsets = [0, 32], sizes = [8, 32], strides = [1, 1]} : vector<8x96xf32> to vector<8x32xf32>
    %479 = vector.extract_strided_slice %476 {offsets = [0, 64], sizes = [8, 32], strides = [1, 1]} : vector<8x96xf32> to vector<8x32xf32>
    %480 = vector.extract_strided_slice %470 {offsets = [0, 96], sizes = [8, 32], strides = [1, 1]} : vector<8x128xf32> to vector<8x32xf32>
    %481 = math.tanh %480 : vector<8x32xf32>
    %482 = arith.mulf %478, %446 : vector<8x32xf32>
    %483 = arith.mulf %477, %481 : vector<8x32xf32>
    %484 = arith.addf %482, %483 : vector<8x32xf32>
    %485 = math.tanh %484 : vector<8x32xf32>
    %486 = arith.mulf %479, %485 : vector<8x32xf32>
    %487 = vector.extract_strided_slice %332 {offsets = [32, 0], sizes = [8, 128], strides = [1, 1]} : vector<64x256xf32> to vector<8x128xf32>
    %cst_76 = arith.constant dense<0.000000e+00> : vector<8x128xf32>
    %488 = tpu.matmul %467, %333, %cst_76 {dimension_numbers = #tpu.dot_dimension_numbers<[1], [0], [0], [1], [0, 0, 1, 1], [], []>} : vector<8x32xf32>, vector<32x128xf32>, vector<8x128xf32> -> vector<8x128xf32>
    %489 = arith.addf %487, %488 : vector<8x128xf32>
    %490 = vector.extract_strided_slice %489 {offsets = [0, 0], sizes = [8, 96], strides = [1, 1]} : vector<8x128xf32> to vector<8x96xf32>
    %491 = arith.negf %490 : vector<8x96xf32>
    %492 = math.exp %491 : vector<8x96xf32>
    %cst_77 = arith.constant 1.000000e+00 : f32
    %493 = vector.broadcast %cst_77 : f32 to vector<8x96xf32>
    %494 = arith.addf %493, %492 : vector<8x96xf32>
    %495 = arith.divf %493, %494 : vector<8x96xf32>
    %496 = vector.extract_strided_slice %495 {offsets = [0, 0], sizes = [8, 32], strides = [1, 1]} : vector<8x96xf32> to vector<8x32xf32>
    %497 = vector.extract_strided_slice %495 {offsets = [0, 32], sizes = [8, 32], strides = [1, 1]} : vector<8x96xf32> to vector<8x32xf32>
    %498 = vector.extract_strided_slice %495 {offsets = [0, 64], sizes = [8, 32], strides = [1, 1]} : vector<8x96xf32> to vector<8x32xf32>
    %499 = vector.extract_strided_slice %489 {offsets = [0, 96], sizes = [8, 32], strides = [1, 1]} : vector<8x128xf32> to vector<8x32xf32>
    %500 = math.tanh %499 : vector<8x32xf32>
    %501 = arith.mulf %497, %465 : vector<8x32xf32>
    %502 = arith.mulf %496, %500 : vector<8x32xf32>
    %503 = arith.addf %501, %502 : vector<8x32xf32>
    %504 = math.tanh %503 : vector<8x32xf32>
    %505 = arith.mulf %498, %504 : vector<8x32xf32>
    %506 = vector.extract_strided_slice %332 {offsets = [24, 128], sizes = [8, 128], strides = [1, 1]} : vector<64x256xf32> to vector<8x128xf32>
    %cst_78 = arith.constant dense<0.000000e+00> : vector<8x128xf32>
    %507 = tpu.matmul %486, %334, %cst_78 {dimension_numbers = #tpu.dot_dimension_numbers<[1], [0], [0], [1], [0, 0, 1, 1], [], []>} : vector<8x32xf32>, vector<32x128xf32>, vector<8x128xf32> -> vector<8x128xf32>
    %508 = arith.addf %506, %507 : vector<8x128xf32>
    %509 = vector.extract_strided_slice %508 {offsets = [0, 0], sizes = [8, 96], strides = [1, 1]} : vector<8x128xf32> to vector<8x96xf32>
    %510 = arith.negf %509 : vector<8x96xf32>
    %511 = math.exp %510 : vector<8x96xf32>
    %cst_79 = arith.constant 1.000000e+00 : f32
    %512 = vector.broadcast %cst_79 : f32 to vector<8x96xf32>
    %513 = arith.addf %512, %511 : vector<8x96xf32>
    %514 = arith.divf %512, %513 : vector<8x96xf32>
    %515 = vector.extract_strided_slice %514 {offsets = [0, 0], sizes = [8, 32], strides = [1, 1]} : vector<8x96xf32> to vector<8x32xf32>
    %516 = vector.extract_strided_slice %514 {offsets = [0, 32], sizes = [8, 32], strides = [1, 1]} : vector<8x96xf32> to vector<8x32xf32>
    %517 = vector.extract_strided_slice %514 {offsets = [0, 64], sizes = [8, 32], strides = [1, 1]} : vector<8x96xf32> to vector<8x32xf32>
    %518 = vector.extract_strided_slice %508 {offsets = [0, 96], sizes = [8, 32], strides = [1, 1]} : vector<8x128xf32> to vector<8x32xf32>
    %519 = math.tanh %518 : vector<8x32xf32>
    %520 = arith.mulf %516, %484 : vector<8x32xf32>
    %521 = arith.mulf %515, %519 : vector<8x32xf32>
    %522 = arith.addf %520, %521 : vector<8x32xf32>
    %523 = math.tanh %522 : vector<8x32xf32>
    %524 = arith.mulf %517, %523 : vector<8x32xf32>
    %525 = vector.extract_strided_slice %332 {offsets = [40, 0], sizes = [8, 128], strides = [1, 1]} : vector<64x256xf32> to vector<8x128xf32>
    %cst_80 = arith.constant dense<0.000000e+00> : vector<8x128xf32>
    %526 = tpu.matmul %505, %333, %cst_80 {dimension_numbers = #tpu.dot_dimension_numbers<[1], [0], [0], [1], [0, 0, 1, 1], [], []>} : vector<8x32xf32>, vector<32x128xf32>, vector<8x128xf32> -> vector<8x128xf32>
    %527 = arith.addf %525, %526 : vector<8x128xf32>
    %528 = vector.extract_strided_slice %527 {offsets = [0, 0], sizes = [8, 96], strides = [1, 1]} : vector<8x128xf32> to vector<8x96xf32>
    %529 = arith.negf %528 : vector<8x96xf32>
    %530 = math.exp %529 : vector<8x96xf32>
    %cst_81 = arith.constant 1.000000e+00 : f32
    %531 = vector.broadcast %cst_81 : f32 to vector<8x96xf32>
    %532 = arith.addf %531, %530 : vector<8x96xf32>
    %533 = arith.divf %531, %532 : vector<8x96xf32>
    %534 = vector.extract_strided_slice %533 {offsets = [0, 0], sizes = [8, 32], strides = [1, 1]} : vector<8x96xf32> to vector<8x32xf32>
    %535 = vector.extract_strided_slice %533 {offsets = [0, 32], sizes = [8, 32], strides = [1, 1]} : vector<8x96xf32> to vector<8x32xf32>
    %536 = vector.extract_strided_slice %533 {offsets = [0, 64], sizes = [8, 32], strides = [1, 1]} : vector<8x96xf32> to vector<8x32xf32>
    %537 = vector.extract_strided_slice %527 {offsets = [0, 96], sizes = [8, 32], strides = [1, 1]} : vector<8x128xf32> to vector<8x32xf32>
    %538 = math.tanh %537 : vector<8x32xf32>
    %539 = arith.mulf %535, %503 : vector<8x32xf32>
    %540 = arith.mulf %534, %538 : vector<8x32xf32>
    %541 = arith.addf %539, %540 : vector<8x32xf32>
    %542 = math.tanh %541 : vector<8x32xf32>
    %543 = arith.mulf %536, %542 : vector<8x32xf32>
    %544 = vector.extract_strided_slice %332 {offsets = [16, 128], sizes = [8, 128], strides = [1, 1]} : vector<64x256xf32> to vector<8x128xf32>
    %cst_82 = arith.constant dense<0.000000e+00> : vector<8x128xf32>
    %545 = tpu.matmul %524, %334, %cst_82 {dimension_numbers = #tpu.dot_dimension_numbers<[1], [0], [0], [1], [0, 0, 1, 1], [], []>} : vector<8x32xf32>, vector<32x128xf32>, vector<8x128xf32> -> vector<8x128xf32>
    %546 = arith.addf %544, %545 : vector<8x128xf32>
    %547 = vector.extract_strided_slice %546 {offsets = [0, 0], sizes = [8, 96], strides = [1, 1]} : vector<8x128xf32> to vector<8x96xf32>
    %548 = arith.negf %547 : vector<8x96xf32>
    %549 = math.exp %548 : vector<8x96xf32>
    %cst_83 = arith.constant 1.000000e+00 : f32
    %550 = vector.broadcast %cst_83 : f32 to vector<8x96xf32>
    %551 = arith.addf %550, %549 : vector<8x96xf32>
    %552 = arith.divf %550, %551 : vector<8x96xf32>
    %553 = vector.extract_strided_slice %552 {offsets = [0, 0], sizes = [8, 32], strides = [1, 1]} : vector<8x96xf32> to vector<8x32xf32>
    %554 = vector.extract_strided_slice %552 {offsets = [0, 32], sizes = [8, 32], strides = [1, 1]} : vector<8x96xf32> to vector<8x32xf32>
    %555 = vector.extract_strided_slice %552 {offsets = [0, 64], sizes = [8, 32], strides = [1, 1]} : vector<8x96xf32> to vector<8x32xf32>
    %556 = vector.extract_strided_slice %546 {offsets = [0, 96], sizes = [8, 32], strides = [1, 1]} : vector<8x128xf32> to vector<8x32xf32>
    %557 = math.tanh %556 : vector<8x32xf32>
    %558 = arith.mulf %554, %522 : vector<8x32xf32>
    %559 = arith.mulf %553, %557 : vector<8x32xf32>
    %560 = arith.addf %558, %559 : vector<8x32xf32>
    %561 = math.tanh %560 : vector<8x32xf32>
    %562 = arith.mulf %555, %561 : vector<8x32xf32>
    %563 = vector.extract_strided_slice %332 {offsets = [48, 0], sizes = [8, 128], strides = [1, 1]} : vector<64x256xf32> to vector<8x128xf32>
    %cst_84 = arith.constant dense<0.000000e+00> : vector<8x128xf32>
    %564 = tpu.matmul %543, %333, %cst_84 {dimension_numbers = #tpu.dot_dimension_numbers<[1], [0], [0], [1], [0, 0, 1, 1], [], []>} : vector<8x32xf32>, vector<32x128xf32>, vector<8x128xf32> -> vector<8x128xf32>
    %565 = arith.addf %563, %564 : vector<8x128xf32>
    %566 = vector.extract_strided_slice %565 {offsets = [0, 0], sizes = [8, 96], strides = [1, 1]} : vector<8x128xf32> to vector<8x96xf32>
    %567 = arith.negf %566 : vector<8x96xf32>
    %568 = math.exp %567 : vector<8x96xf32>
    %cst_85 = arith.constant 1.000000e+00 : f32
    %569 = vector.broadcast %cst_85 : f32 to vector<8x96xf32>
    %570 = arith.addf %569, %568 : vector<8x96xf32>
    %571 = arith.divf %569, %570 : vector<8x96xf32>
    %572 = vector.extract_strided_slice %571 {offsets = [0, 0], sizes = [8, 32], strides = [1, 1]} : vector<8x96xf32> to vector<8x32xf32>
    %573 = vector.extract_strided_slice %571 {offsets = [0, 32], sizes = [8, 32], strides = [1, 1]} : vector<8x96xf32> to vector<8x32xf32>
    %574 = vector.extract_strided_slice %571 {offsets = [0, 64], sizes = [8, 32], strides = [1, 1]} : vector<8x96xf32> to vector<8x32xf32>
    %575 = vector.extract_strided_slice %565 {offsets = [0, 96], sizes = [8, 32], strides = [1, 1]} : vector<8x128xf32> to vector<8x32xf32>
    %576 = math.tanh %575 : vector<8x32xf32>
    %577 = arith.mulf %573, %541 : vector<8x32xf32>
    %578 = arith.mulf %572, %576 : vector<8x32xf32>
    %579 = arith.addf %577, %578 : vector<8x32xf32>
    %580 = math.tanh %579 : vector<8x32xf32>
    %581 = arith.mulf %574, %580 : vector<8x32xf32>
    %582 = vector.extract_strided_slice %332 {offsets = [8, 128], sizes = [8, 128], strides = [1, 1]} : vector<64x256xf32> to vector<8x128xf32>
    %cst_86 = arith.constant dense<0.000000e+00> : vector<8x128xf32>
    %583 = tpu.matmul %562, %334, %cst_86 {dimension_numbers = #tpu.dot_dimension_numbers<[1], [0], [0], [1], [0, 0, 1, 1], [], []>} : vector<8x32xf32>, vector<32x128xf32>, vector<8x128xf32> -> vector<8x128xf32>
    %584 = arith.addf %582, %583 : vector<8x128xf32>
    %585 = vector.extract_strided_slice %584 {offsets = [0, 0], sizes = [8, 96], strides = [1, 1]} : vector<8x128xf32> to vector<8x96xf32>
    %586 = arith.negf %585 : vector<8x96xf32>
    %587 = math.exp %586 : vector<8x96xf32>
    %cst_87 = arith.constant 1.000000e+00 : f32
    %588 = vector.broadcast %cst_87 : f32 to vector<8x96xf32>
    %589 = arith.addf %588, %587 : vector<8x96xf32>
    %590 = arith.divf %588, %589 : vector<8x96xf32>
    %591 = vector.extract_strided_slice %590 {offsets = [0, 0], sizes = [8, 32], strides = [1, 1]} : vector<8x96xf32> to vector<8x32xf32>
    %592 = vector.extract_strided_slice %590 {offsets = [0, 32], sizes = [8, 32], strides = [1, 1]} : vector<8x96xf32> to vector<8x32xf32>
    %593 = vector.extract_strided_slice %590 {offsets = [0, 64], sizes = [8, 32], strides = [1, 1]} : vector<8x96xf32> to vector<8x32xf32>
    %594 = vector.extract_strided_slice %584 {offsets = [0, 96], sizes = [8, 32], strides = [1, 1]} : vector<8x128xf32> to vector<8x32xf32>
    %595 = math.tanh %594 : vector<8x32xf32>
    %596 = arith.mulf %592, %560 : vector<8x32xf32>
    %597 = arith.mulf %591, %595 : vector<8x32xf32>
    %598 = arith.addf %596, %597 : vector<8x32xf32>
    %599 = math.tanh %598 : vector<8x32xf32>
    %600 = arith.mulf %593, %599 : vector<8x32xf32>
    %601 = vector.extract_strided_slice %332 {offsets = [56, 0], sizes = [8, 128], strides = [1, 1]} : vector<64x256xf32> to vector<8x128xf32>
    %cst_88 = arith.constant dense<0.000000e+00> : vector<8x128xf32>
    %602 = tpu.matmul %581, %333, %cst_88 {dimension_numbers = #tpu.dot_dimension_numbers<[1], [0], [0], [1], [0, 0, 1, 1], [], []>} : vector<8x32xf32>, vector<32x128xf32>, vector<8x128xf32> -> vector<8x128xf32>
    %603 = arith.addf %601, %602 : vector<8x128xf32>
    %604 = vector.extract_strided_slice %603 {offsets = [0, 0], sizes = [8, 96], strides = [1, 1]} : vector<8x128xf32> to vector<8x96xf32>
    %605 = arith.negf %604 : vector<8x96xf32>
    %606 = math.exp %605 : vector<8x96xf32>
    %cst_89 = arith.constant 1.000000e+00 : f32
    %607 = vector.broadcast %cst_89 : f32 to vector<8x96xf32>
    %608 = arith.addf %607, %606 : vector<8x96xf32>
    %609 = arith.divf %607, %608 : vector<8x96xf32>
    %610 = vector.extract_strided_slice %609 {offsets = [0, 0], sizes = [8, 32], strides = [1, 1]} : vector<8x96xf32> to vector<8x32xf32>
    %611 = vector.extract_strided_slice %609 {offsets = [0, 32], sizes = [8, 32], strides = [1, 1]} : vector<8x96xf32> to vector<8x32xf32>
    %612 = vector.extract_strided_slice %609 {offsets = [0, 64], sizes = [8, 32], strides = [1, 1]} : vector<8x96xf32> to vector<8x32xf32>
    %613 = vector.extract_strided_slice %603 {offsets = [0, 96], sizes = [8, 32], strides = [1, 1]} : vector<8x128xf32> to vector<8x32xf32>
    %614 = math.tanh %613 : vector<8x32xf32>
    %615 = arith.mulf %611, %579 : vector<8x32xf32>
    %616 = arith.mulf %610, %614 : vector<8x32xf32>
    %617 = arith.addf %615, %616 : vector<8x32xf32>
    %618 = math.tanh %617 : vector<8x32xf32>
    %619 = arith.mulf %612, %618 : vector<8x32xf32>
    %620 = vector.extract_strided_slice %332 {offsets = [0, 128], sizes = [8, 128], strides = [1, 1]} : vector<64x256xf32> to vector<8x128xf32>
    %cst_90 = arith.constant dense<0.000000e+00> : vector<8x128xf32>
    %621 = tpu.matmul %600, %334, %cst_90 {dimension_numbers = #tpu.dot_dimension_numbers<[1], [0], [0], [1], [0, 0, 1, 1], [], []>} : vector<8x32xf32>, vector<32x128xf32>, vector<8x128xf32> -> vector<8x128xf32>
    %622 = arith.addf %620, %621 : vector<8x128xf32>
    %623 = vector.extract_strided_slice %622 {offsets = [0, 0], sizes = [8, 96], strides = [1, 1]} : vector<8x128xf32> to vector<8x96xf32>
    %624 = arith.negf %623 : vector<8x96xf32>
    %625 = math.exp %624 : vector<8x96xf32>
    %cst_91 = arith.constant 1.000000e+00 : f32
    %626 = vector.broadcast %cst_91 : f32 to vector<8x96xf32>
    %627 = arith.addf %626, %625 : vector<8x96xf32>
    %628 = arith.divf %626, %627 : vector<8x96xf32>
    %629 = vector.extract_strided_slice %628 {offsets = [0, 0], sizes = [8, 32], strides = [1, 1]} : vector<8x96xf32> to vector<8x32xf32>
    %630 = vector.extract_strided_slice %628 {offsets = [0, 32], sizes = [8, 32], strides = [1, 1]} : vector<8x96xf32> to vector<8x32xf32>
    %631 = vector.extract_strided_slice %628 {offsets = [0, 64], sizes = [8, 32], strides = [1, 1]} : vector<8x96xf32> to vector<8x32xf32>
    %632 = vector.extract_strided_slice %622 {offsets = [0, 96], sizes = [8, 32], strides = [1, 1]} : vector<8x128xf32> to vector<8x32xf32>
    %633 = math.tanh %632 : vector<8x32xf32>
    %634 = arith.mulf %630, %598 : vector<8x32xf32>
    %635 = arith.mulf %629, %633 : vector<8x32xf32>
    %636 = arith.addf %634, %635 : vector<8x32xf32>
    %637 = math.tanh %636 : vector<8x32xf32>
    %638 = arith.mulf %631, %637 : vector<8x32xf32>
    %c0_92 = arith.constant 0 : index
    %c0_93 = arith.constant 0 : index
    %c0_94 = arith.constant 0 : index
    %639 = vector.load %arg10[%c0_92, %c0_93, %c0_94] : memref<2x32x1xf32, #tpu.memory_space<vmem>>, vector<1x32x1xf32>
    %640 = vector.shape_cast %639 : vector<1x32x1xf32> to vector<32x1xf32>
    %cst_95 = arith.constant dense<0.000000e+00> : vector<8x1xf32>
    %641 = tpu.matmul %619, %640, %cst_95 {dimension_numbers = #tpu.dot_dimension_numbers<[1], [0], [0], [1], [0, 0, 1, 1], [], []>} : vector<8x32xf32>, vector<32x1xf32>, vector<8x1xf32> -> vector<8x1xf32>
    %c1_96 = arith.constant 1 : index
    %c0_97 = arith.constant 0 : index
    %c0_98 = arith.constant 0 : index
    %642 = vector.load %arg10[%c1_96, %c0_97, %c0_98] : memref<2x32x1xf32, #tpu.memory_space<vmem>>, vector<1x32x1xf32>
    %643 = vector.shape_cast %642 : vector<1x32x1xf32> to vector<32x1xf32>
    %cst_99 = arith.constant dense<0.000000e+00> : vector<8x1xf32>
    %644 = tpu.matmul %638, %643, %cst_99 {dimension_numbers = #tpu.dot_dimension_numbers<[1], [0], [0], [1], [0, 0, 1, 1], [], []>} : vector<8x32xf32>, vector<32x1xf32>, vector<8x1xf32> -> vector<8x1xf32>
    %645 = arith.addf %641, %644 : vector<8x1xf32>
    %c0_100 = arith.constant 0 : index
    %c0_101 = arith.constant 0 : index
    %646 = vector.load %arg11[%c0_100, %c0_101] : memref<1x1xf32, #tpu.memory_space<vmem>>, vector<1x1xf32>
    %647 = vector.broadcast %646 : vector<1x1xf32> to vector<8x1xf32>
    %648 = arith.addf %645, %647 : vector<8x1xf32>
    %c0_102 = arith.constant 0 : index
    %c0_103 = arith.constant 0 : index
    %649 = vector.load %arg12[%c0_102, %c0_103] : memref<8x1xf32, #tpu.memory_space<vmem>>, vector<8x1xf32>
    tpu.vector_store %arg12[%c0_102, %c0_103], %648 {strides = array<i32>} : memref<8x1xf32, #tpu.memory_space<vmem>>, vector<8x1xf32>,
    return
  }
}

</mosaic_0001>

<llo_original>
// kernel: sentiment_forward.1
$region0: #{sentiment_forward.1}
  #allocation0 [shape = 'u32[]', space=smem, size = 0x4, offset = 0x4, fixed_abs, tag = 'smem constant byte address 0x4 - core index']
  #allocation1 [shape = 'u32[144,128]{1,0:T(1,128)}', space=vmem, size = 0x12000, scoped, tag = 'internal scratch']
  #allocation2 [shape = 'f32[1,1]{1,0:T(1,128)S(1)}', space=vmem, size = 0x200, scoped, tag = 'scoped memory for sentiment_forward.1']
  %s0 = inlined_call_operand.vmem [shape: s32[64,1], index: 0, kind: input, shape index: {}]
  %s1 = inlined_call_operand.vmem [shape: f32[128,16], index: 1, kind: input, shape index: {}]
  %s2 = inlined_call_operand.vmem [shape: f32[16,256], index: 2, kind: input, shape index: {}]
  %s3 = inlined_call_operand.vmem [shape: f32[32,128], index: 3, kind: input, shape index: {}]
  %s4 = inlined_call_operand.vmem [shape: f32[32,128], index: 4, kind: input, shape index: {}]
  %s5 = inlined_call_operand.vmem [shape: f32[1,256], index: 5, kind: input, shape index: {}]
  %s6 = inlined_call_operand.vmem [shape: f32[2,32,256], index: 6, kind: input, shape index: {}]
  %s7 = inlined_call_operand.vmem [shape: f32[32,128], index: 7, kind: input, shape index: {}]
  %s8 = inlined_call_operand.vmem [shape: f32[32,128], index: 8, kind: input, shape index: {}]
  %s9 = inlined_call_operand.vmem [shape: f32[1,256], index: 9, kind: input, shape index: {}]
  %s10 = inlined_call_operand.vmem [shape: f32[2,32,1], index: 10, kind: input, shape index: {}]
  %s11 = inlined_call_operand.<no memory space> [shape: f32[1,1], index: 11, kind: input, shape index: {}]
  %s12 = inlined_call_operand.vmem [shape: f32[8,1], index: 12, kind: output, shape index: {}]
  %s13 = sld [smem:[#allocation0]]
  $region58: #{sentiment_forward.1} parent=0
    _
  %s15 = ssub.s32 1, %s13
  %s16 = scalar_select 0, %s15, %s13
  %v17 = vstv %s11
  %18 = vst [vmem:[#allocation2] sm:$0x1] %v17
  // Predicated region
  $region2: #{sentiment_forward.1} parent=0 // pred_check
    _
  $region3: #{sentiment_forward.1} parent=0 // pred_check_branch
    %20 = sbr.rel (0) target = $region5
  $region4: #{sentiment_forward.1} parent=0 // pred_region
    _
  $region5: #{sentiment_forward.1} parent=0 // pred_fallthru
    _
  // Predicated region
  $region6: #{sentiment_forward.1} parent=0 // pred_check
    _
  $region7: #{sentiment_forward.1} parent=0 // pred_check_branch
    %22 = sbr.rel (0) target = $region9
  $region8: #{sentiment_forward.1} parent=0 // pred_region
    _
  $region9: #{sentiment_forward.1} parent=0 // pred_fallthru
    _
  // Predicated region
  $region10: #{sentiment_forward.1} parent=0 // pred_check
    _
  $region11: #{sentiment_forward.1} parent=0 // pred_check_branch
    %24 = sbr.rel (0) target = $region13
  $region12: #{sentiment_forward.1} parent=0 // pred_region
    _
  $region13: #{sentiment_forward.1} parent=0 // pred_fallthru
    _
  // Predicated region
  $region14: #{sentiment_forward.1} parent=0 // pred_check
    _
  $region15: #{sentiment_forward.1} parent=0 // pred_check_branch
    %26 = sbr.rel (0) target = $region17
  $region16: #{sentiment_forward.1} parent=0 // pred_region
    _
  $region17: #{sentiment_forward.1} parent=0 // pred_fallthru
    _
  // Predicated region
  $region18: #{sentiment_forward.1} parent=0 // pred_check
    _
  $region19: #{sentiment_forward.1} parent=0 // pred_check_branch
    %28 = sbr.rel (0) target = $region21
  $region20: #{sentiment_forward.1} parent=0 // pred_region
    _
  $region21: #{sentiment_forward.1} parent=0 // pred_fallthru
    _
  // Predicated region
  $region22: #{sentiment_forward.1} parent=0 // pred_check
    _
  $region23: #{sentiment_forward.1} parent=0 // pred_check_branch
    %30 = sbr.rel (0) target = $region25
  $region24: #{sentiment_forward.1} parent=0 // pred_region
    _
  $region25: #{sentiment_forward.1} parent=0 // pred_fallthru
    _
  // Predicated region
  $region26: #{sentiment_forward.1} parent=0 // pred_check
    _
  $region27: #{sentiment_forward.1} parent=0 // pred_check_branch
    %32 = sbr.rel (0) target = $region29
  $region28: #{sentiment_forward.1} parent=0 // pred_region
    _
  $region29: #{sentiment_forward.1} parent=0 // pred_fallthru
    _
  // Predicated region
  $region30: #{sentiment_forward.1} parent=0 // pred_check
    _
  $region31: #{sentiment_forward.1} parent=0 // pred_check_branch
    %34 = sbr.rel (0) target = $region33
  $region32: #{sentiment_forward.1} parent=0 // pred_region
    _
  $region33: #{sentiment_forward.1} parent=0 // pred_fallthru
    _
  // Predicated region
  $region34: #{sentiment_forward.1} parent=0 // pred_check
    _
  $region35: #{sentiment_forward.1} parent=0 // pred_check_branch
    %36 = sbr.rel (0) target = $region37
  $region36: #{sentiment_forward.1} parent=0 // pred_region
    _
  $region37: #{sentiment_forward.1} parent=0 // pred_fallthru
    _
  // Predicated region
  $region38: #{sentiment_forward.1} parent=0 // pred_check
    _
  $region39: #{sentiment_forward.1} parent=0 // pred_check_branch
    %38 = sbr.rel (0) target = $region41
  $region40: #{sentiment_forward.1} parent=0 // pred_region
    _
  $region41: #{sentiment_forward.1} parent=0 // pred_fallthru
    _
  // Predicated region
  $region42: #{sentiment_forward.1} parent=0 // pred_check
    _
  $region43: #{sentiment_forward.1} parent=0 // pred_check_branch
    %40 = sbr.rel (0) target = $region45
  $region44: #{sentiment_forward.1} parent=0 // pred_region
    _
  $region45: #{sentiment_forward.1} parent=0 // pred_fallthru
    _
  // Predicated region
  $region46: #{sentiment_forward.1} parent=0 // pred_check
    _
  $region47: #{sentiment_forward.1} parent=0 // pred_check_branch
    %42 = sbr.rel (0) target = $region49
  $region48: #{sentiment_forward.1} parent=0 // pred_region
    _
  $region49: #{sentiment_forward.1} parent=0 // pred_fallthru
    _
  %v43 = vld [vmem:[%s0] sm:$0xff]
  %v44 = vld [vmem:[%s0 + $0x8] sm:$0xff]
  %v45 = vld [vmem:[%s0 + $0x10] sm:$0xff]
  %v46 = vld [vmem:[%s0 + $0x18] sm:$0xff]
  %v47 = vld [vmem:[%s0 + $0x20] sm:$0xff]
  %v48 = vld [vmem:[%s0 + $0x28] sm:$0xff]
  %v49 = vld [vmem:[%s0 + $0x30] sm:$0xff]
  %v50 = vld [vmem:[%s0 + $0x38] sm:$0xff]
  %v51 = vlaneseq
  %v52 = vand.u32 %v51, 127
  %53 = vset.pattern.permute.xlu0 0
  %54 = vperm.xlu0 %53, %v43
  %v55 = vpop.permute.xlu0 %54
  %56 = vset.pattern.permute.xlu0 0
  %57 = vperm.xlu0 %56, %v44
  %v58 = vpop.permute.xlu0 %57
  %59 = vset.pattern.permute.xlu0 0
  %60 = vperm.xlu0 %59, %v45
  %v61 = vpop.permute.xlu0 %60
  %62 = vset.pattern.permute.xlu0 0
  %63 = vperm.xlu0 %62, %v46
  %v64 = vpop.permute.xlu0 %63
  %65 = vset.pattern.permute.xlu0 0
  %66 = vperm.xlu0 %65, %v47
  %v67 = vpop.permute.xlu0 %66
  %68 = vset.pattern.permute.xlu0 0
  %69 = vperm.xlu0 %68, %v48
  %v70 = vpop.permute.xlu0 %69
  %71 = vset.pattern.permute.xlu0 0
  %72 = vperm.xlu0 %71, %v49
  %v73 = vpop.permute.xlu0 %72
  %74 = vset.pattern.permute.xlu0 0
  %75 = vperm.xlu0 %74, %v50
  %v76 = vpop.permute.xlu0 %75
  %vm77 = vcmp.eq.s32.totalorder %v55, %v52
  %vm78 = vcmp.eq.s32.totalorder %v58, %v52
  %vm79 = vcmp.eq.s32.totalorder %v61, %v52
  %vm80 = vcmp.eq.s32.totalorder %v64, %v52
  %vm81 = vcmp.eq.s32.totalorder %v67, %v52
  %vm82 = vcmp.eq.s32.totalorder %v70, %v52
  %vm83 = vcmp.eq.s32.totalorder %v73, %v52
  %vm84 = vcmp.eq.s32.totalorder %v76, %v52
  %v85 = vsel %vm77, 1.0, 0.0
  %v86 = vsel %vm78, 1.0, 0.0
  %v87 = vsel %vm79, 1.0, 0.0
  %v88 = vsel %vm80, 1.0, 0.0
  %v89 = vsel %vm81, 1.0, 0.0
  %v90 = vsel %vm82, 1.0, 0.0
  %v91 = vsel %vm83, 1.0, 0.0
  %v92 = vsel %vm84, 1.0, 0.0
  %v93 = vld [vmem:[%s1] sm:$0xff]
  %v94 = vld [vmem:[%s1 + $0x8] sm:$0xff]
  %v95 = vld [vmem:[%s1 + $0x10] sm:$0xff]
  %v96 = vld [vmem:[%s1 + $0x18] sm:$0xff]
  %v97 = vld [vmem:[%s1 + $0x20] sm:$0xff]
  %v98 = vld [vmem:[%s1 + $0x28] sm:$0xff]
  %v99 = vld [vmem:[%s1 + $0x30] sm:$0xff]
  %v100 = vld [vmem:[%s1 + $0x38] sm:$0xff]
  %v101 = vld [vmem:[%s1 + $0x40] sm:$0xff]
  %v102 = vld [vmem:[%s1 + $0x48] sm:$0xff]
  %v103 = vld [vmem:[%s1 + $0x50] sm:$0xff]
  %v104 = vld [vmem:[%s1 + $0x58] sm:$0xff]
  %v105 = vld [vmem:[%s1 + $0x60] sm:$0xff]
  %v106 = vld [vmem:[%s1 + $0x68] sm:$0xff]
  %v107 = vld [vmem:[%s1 + $0x70] sm:$0xff]
  %v108 = vld [vmem:[%s1 + $0x78] sm:$0xff]
  %109 = vmatprep.subr.mxu0 0.0
  %110 = vmatpush1.msra.mxu0 %v93
  %111 = vmatprep.subr.mxu0 0.0
  %112 = vmatpush1.msra.mxu0 %v94
  %113 = vmatprep.subr.mxu0 0.0
  %114 = vmatpush1.msra.mxu0 %v95
  %115 = vmatprep.subr.mxu0 0.0
  %116 = vmatpush1.msra.mxu0 %v96
  %117 = vmatprep.subr.mxu0 0.0
  %118 = vmatpush1.msra.mxu0 %v97
  %119 = vmatprep.subr.mxu0 0.0
  %120 = vmatpush1.msra.mxu0 %v98
  %121 = vmatprep.subr.mxu0 0.0
  %122 = vmatpush1.msra.mxu0 %v99
  %123 = vmatprep.subr.mxu0 0.0
  %124 = vmatpush1.msra.mxu0 %v100
  %125 = vmatprep.subr.mxu0 0.0
  %126 = vmatpush1.msra.mxu0 %v101
  %127 = vmatprep.subr.mxu0 0.0
  %128 = vmatpush1.msra.mxu0 %v102
  %129 = vmatprep.subr.mxu0 0.0
  %130 = vmatpush1.msra.mxu0 %v103
  %131 = vmatprep.subr.mxu0 0.0
  %132 = vmatpush1.msra.mxu0 %v104
  %133 = vmatprep.subr.mxu0 0.0
  %134 = vmatpush1.msra.mxu0 %v105
  %135 = vmatprep.subr.mxu0 0.0
  %136 = vmatpush1.msra.mxu0 %v106
  %137 = vmatprep.subr.mxu0 0.0
  %138 = vmatpush1.msra.mxu0 %v107
  %139 = vmatprep.subr.mxu0 0.0
  %140 = vmatpush1.msra.mxu0 %v108
  %141 = vmatprep.subr.mxu0 0.0
  %142 = vmatpush1.msra.mxu0 0.0
  %143 = vmatprep.subr.mxu0 0.0
  %144 = vmatpush1.msra.mxu0 0.0
  %145 = vmatprep.subr.mxu0 0.0
  %146 = vmatpush1.msra.mxu0 0.0
  %147 = vmatprep.subr.mxu0 0.0
  %148 = vmatpush1.msra.mxu0 0.0
  %149 = vmatprep.subr.mxu0 0.0
  %150 = vmatpush1.msra.mxu0 0.0
  %151 = vmatprep.subr.mxu0 0.0
  %152 = vmatpush1.msra.mxu0 0.0
  %153 = vmatprep.subr.mxu0 0.0
  %154 = vmatpush1.msra.mxu0 0.0
  %155 = vmatprep.subr.mxu0 0.0
  %156 = vmatpush1.msra.mxu0 0.0
  %157 = vmatprep.subr.mxu0 0.0
  %158 = vmatpush1.msra.mxu0 0.0
  %159 = vmatprep.subr.mxu0 0.0
  %160 = vmatpush1.msra.mxu0 0.0
  %161 = vmatprep.subr.mxu0 0.0
  %162 = vmatpush1.msra.mxu0 0.0
  %163 = vmatprep.subr.mxu0 0.0
  %164 = vmatpush1.msra.mxu0 0.0
  %165 = vmatprep.subr.mxu0 0.0
  %166 = vmatpush1.msra.mxu0 0.0
  %167 = vmatprep.subr.mxu0 0.0
  %168 = vmatpush1.msra.mxu0 0.0
  %169 = vmatprep.subr.mxu0 0.0
  %170 = vmatpush1.msra.mxu0 0.0
  %171 = vmatprep.subr.mxu0 0.0
  %172 = vmatpush1.msra.mxu0 0.0
  %173 = vmatprep.mubr.f32.mxu0 0.0
  %174 = vmatmul.mubr.f32.gmra.mrb[0].mxu0 %v85
  %v175 = vpop.f32.mrb[0].mxu0
  %v176 = vadd.f32 0.0, %v175
  %v177 = vpop.f32.mrb[0].mxu0
  %178 = vmatprep.mubr.f32.mxu0 0.0
  %179 = vmatmul.mubr.f32.gmra.mrb[0].mxu0 %v86
  %v180 = vpop.f32.mrb[0].mxu0
  %v181 = vadd.f32 0.0, %v180
  %v182 = vpop.f32.mrb[0].mxu0
  %183 = vmatprep.mubr.f32.mxu0 0.0
  %184 = vmatmul.mubr.f32.gmra.mrb[0].mxu0 %v87
  %v185 = vpop.f32.mrb[0].mxu0
  %v186 = vadd.f32 0.0, %v185
  %v187 = vpop.f32.mrb[0].mxu0
  %188 = vmatprep.mubr.f32.mxu0 0.0
  %189 = vmatmul.mubr.f32.gmra.mrb[0].mxu0 %v88
  %v190 = vpop.f32.mrb[0].mxu0
  %v191 = vadd.f32 0.0, %v190
  %v192 = vpop.f32.mrb[0].mxu0
  %193 = vmatprep.mubr.f32.mxu0 0.0
  %194 = vmatmul.mubr.f32.gmra.mrb[0].mxu0 %v89
  %v195 = vpop.f32.mrb[0].mxu0
  %v196 = vadd.f32 0.0, %v195
  %v197 = vpop.f32.mrb[0].mxu0
  %198 = vmatprep.mubr.f32.mxu0 0.0
  %199 = vmatmul.mubr.f32.gmra.mrb[0].mxu0 %v90
  %v200 = vpop.f32.mrb[0].mxu0
  %v201 = vadd.f32 0.0, %v200
  %v202 = vpop.f32.mrb[0].mxu0
  %203 = vmatprep.mubr.f32.mxu0 0.0
  %204 = vmatmul.mubr.f32.gmra.mrb[0].mxu0 %v91
  %v205 = vpop.f32.mrb[0].mxu0
  %v206 = vadd.f32 0.0, %v205
  %v207 = vpop.f32.mrb[0].mxu0
  %208 = vmatprep.mubr.f32.mxu0 0.0
  %209 = vmatmul.mubr.f32.gmra.mrb[0].mxu0 %v92
  %v210 = vpop.f32.mrb[0].mxu0
  %v211 = vadd.f32 0.0, %v210
  %v212 = vpop.f32.mrb[0].mxu0
  %213 = vdwg.mxu0
  %v214 = vld [vmem:[%s2] sm:$0xff]
  %v215 = vld [vmem:[%s2 + $0x8] sm:$0xff]
  %v216 = vld [vmem:[%s2 + $0x10] sm:$0xff]
  %v217 = vld [vmem:[%s2 + $0x18] sm:$0xff]
  %v218 = vld [vmem:[%s5] sm:$0x3]
  %v220 = vlaneseq
  %v221 = vshrl.u32 %v220, 7
  %v222 = vsub.s32 0, %v221
  %v223 = vrot.slane %v218, %v222
  %v224 = vlaneseq
  %v225 = vshrl.u32 %v224, 7
  %v226 = vsub.s32 1, %v225
  %v227 = vrot.slane %v218, %v226
  %vm230 = vcmask 130048
  %v232 = vsel %vm230, %v176, 0
  %v235 = vsel %vm230, %v181, 0
  %v238 = vsel %vm230, %v186, 0
  %v241 = vsel %vm230, %v191, 0
  %v244 = vsel %vm230, %v196, 0
  %v247 = vsel %vm230, %v201, 0
  %v250 = vsel %vm230, %v206, 0
  %v253 = vsel %vm230, %v211, 0
  %255 = vmatprep.subr.mxu0 %v215
  %256 = vmatpush1.msra.mxu0 %v214
  %257 = vmatprep.subr.mxu0 %v217
  %258 = vmatpush1.msra.mxu0 %v216
  %259 = vmatprep.subr.mxu0 0.0
  %260 = vmatpush1.msra.mxu0 0.0
  %261 = vmatprep.subr.mxu0 0.0
  %262 = vmatpush1.msra.mxu0 0.0
  %263 = vmatprep.subr.mxu0 0.0
  %264 = vmatpush1.msra.mxu0 0.0
  %265 = vmatprep.subr.mxu0 0.0
  %266 = vmatpush1.msra.mxu0 0.0
  %267 = vmatprep.subr.mxu0 0.0
  %268 = vmatpush1.msra.mxu0 0.0
  %269 = vmatprep.subr.mxu0 0.0
  %270 = vmatpush1.msra.mxu0 0.0
  %271 = vmatprep.subr.mxu0 0.0
  %272 = vmatpush1.msra.mxu0 0.0
  %273 = vmatprep.subr.mxu0 0.0
  %274 = vmatpush1.msra.mxu0 0.0
  %275 = vmatprep.subr.mxu0 0.0
  %276 = vmatpush1.msra.mxu0 0.0
  %277 = vmatprep.subr.mxu0 0.0
  %278 = vmatpush1.msra.mxu0 0.0
  %279 = vmatprep.subr.mxu0 0.0
  %280 = vmatpush1.msra.mxu0 0.0
  %281 = vmatprep.subr.mxu0 0.0
  %282 = vmatpush1.msra.mxu0 0.0
  %283 = vmatprep.subr.mxu0 0.0
  %284 = vmatpush1.msra.mxu0 0.0
  %285 = vmatprep.subr.mxu0 0.0
  %286 = vmatpush1.msra.mxu0 0.0
  %287 = vmatprep.subr.mxu0 0.0
  %288 = vmatpush1.msra.mxu0 0.0
  %289 = vmatprep.subr.mxu0 0.0
  %290 = vmatpush1.msra.mxu0 0.0
  %291 = vmatprep.subr.mxu0 0.0
  %292 = vmatpush1.msra.mxu0 0.0
  %293 = vmatprep.subr.mxu0 0.0
  %294 = vmatpush1.msra.mxu0 0.0
  %295 = vmatprep.subr.mxu0 0.0
  %296 = vmatpush1.msra.mxu0 0.0
  %297 = vmatprep.subr.mxu0 0.0
  %298 = vmatpush1.msra.mxu0 0.0
  %299 = vmatprep.subr.mxu0 0.0
  %300 = vmatpush1.msra.mxu0 0.0
  %301 = vmatprep.subr.mxu0 0.0
  %302 = vmatpush1.msra.mxu0 0.0
  %303 = vmatprep.subr.mxu0 0.0
  %304 = vmatpush1.msra.mxu0 0.0
  %305 = vmatprep.subr.mxu0 0.0
  %306 = vmatpush1.msra.mxu0 0.0
  %307 = vmatprep.subr.mxu0 0.0
  %308 = vmatpush1.msra.mxu0 0.0
  %309 = vmatprep.subr.mxu0 0.0
  %310 = vmatpush1.msra.mxu0 0.0
  %311 = vmatprep.subr.mxu0 0.0
  %312 = vmatpush1.msra.mxu0 0.0
  %313 = vmatprep.subr.mxu0 0.0
  %314 = vmatpush1.msra.mxu0 0.0
  %315 = vmatprep.subr.mxu0 0.0
  %316 = vmatpush1.msra.mxu0 0.0
  %317 = vmatprep.subr.mxu0 0.0
  %318 = vmatpush1.msra.mxu0 0.0
  %319 = vmatprep.mubr.f32.mxu0 0.0
  %320 = vmatmul.mubr.f32.gmra.mrb[0].mxu0 %v232
  %v321 = vpop.f32.mrb[0].mxu0
  %v322 = vadd.f32 %v223, %v321
  %v323 = vpop.f32.mrb[0].mxu0
  %v324 = vadd.f32 %v227, %v323
  %325 = vmatprep.mubr.f32.mxu0 0.0
  %326 = vmatmul.mubr.f32.gmra.mrb[0].mxu0 %v235
  %v327 = vpop.f32.mrb[0].mxu0
  %v328 = vadd.f32 %v223, %v327
  %v329 = vpop.f32.mrb[0].mxu0
  %v330 = vadd.f32 %v227, %v329
  %331 = vmatprep.mubr.f32.mxu0 0.0
  %332 = vmatmul.mubr.f32.gmra.mrb[0].mxu0 %v238
  %v333 = vpop.f32.mrb[0].mxu0
  %v334 = vadd.f32 %v223, %v333
  %v335 = vpop.f32.mrb[0].mxu0
  %v336 = vadd.f32 %v227, %v335
  %337 = vmatprep.mubr.f32.mxu0 0.0
  %338 = vmatmul.mubr.f32.gmra.mrb[0].mxu0 %v241
  %v339 = vpop.f32.mrb[0].mxu0
  %v340 = vadd.f32 %v223, %v339
  %v341 = vpop.f32.mrb[0].mxu0
  %v342 = vadd.f32 %v227, %v341
  %343 = vmatprep.mubr.f32.mxu0 0.0
  %344 = vmatmul.mubr.f32.gmra.mrb[0].mxu0 %v244
  %v345 = vpop.f32.mrb[0].mxu0
  %v346 = vadd.f32 %v223, %v345
  %v347 = vpop.f32.mrb[0].mxu0
  %v348 = vadd.f32 %v227, %v347
  %349 = vmatprep.mubr.f32.mxu0 0.0
  %350 = vmatmul.mubr.f32.gmra.mrb[0].mxu0 %v247
  %v351 = vpop.f32.mrb[0].mxu0
  %v352 = vadd.f32 %v223, %v351
  %v353 = vpop.f32.mrb[0].mxu0
  %v354 = vadd.f32 %v227, %v353
  %355 = vmatprep.mubr.f32.mxu0 0.0
  %356 = vmatmul.mubr.f32.gmra.mrb[0].mxu0 %v250
  %v357 = vpop.f32.mrb[0].mxu0
  %v358 = vadd.f32 %v223, %v357
  %v359 = vpop.f32.mrb[0].mxu0
  %v360 = vadd.f32 %v227, %v359
  %361 = vmatprep.mubr.f32.mxu0 0.0
  %362 = vmatmul.mubr.f32.gmra.mrb[0].mxu0 %v253
  %v363 = vpop.f32.mrb[0].mxu0
  %v364 = vadd.f32 %v223, %v363
  %v365 = vpop.f32.mrb[0].mxu0
  %v366 = vadd.f32 %v227, %v365
  %367 = vdwg.mxu0
  %v368 = vld [vmem:[%s3] sm:$0xff]
  %v369 = vld [vmem:[%s3 + $0x8] sm:$0xff]
  %v370 = vld [vmem:[%s3 + $0x10] sm:$0xff]
  %v371 = vld [vmem:[%s3 + $0x18] sm:$0xff]
  %v372 = vld [vmem:[%s4] sm:$0xff]
  %v373 = vld [vmem:[%s4 + $0x8] sm:$0xff]
  %v374 = vld [vmem:[%s4 + $0x10] sm:$0xff]
  %v375 = vld [vmem:[%s4 + $0x18] sm:$0xff]
  %vm376 = vcmask 261120
  %v378 = vsel %vm376, 0.0, 0
  %380 = vmatprep.subr.mxu0 0.0
  %381 = vmatpush1.msra.mxu0 %v368
  %382 = vmatprep.subr.mxu0 0.0
  %383 = vmatpush1.msra.mxu0 %v369
  %384 = vmatprep.subr.mxu0 0.0
  %385 = vmatpush1.msra.mxu0 %v370
  %386 = vmatprep.subr.mxu0 0.0
  %387 = vmatpush1.msra.mxu0 %v371
  %388 = vmatprep.subr.mxu0 0.0
  %389 = vmatpush1.msra.mxu0 0.0
  %390 = vmatprep.subr.mxu0 0.0
  %391 = vmatpush1.msra.mxu0 0.0
  %392 = vmatprep.subr.mxu0 0.0
  %393 = vmatpush1.msra.mxu0 0.0
  %394 = vmatprep.subr.mxu0 0.0
  %395 = vmatpush1.msra.mxu0 0.0
  %396 = vmatprep.subr.mxu0 0.0
  %397 = vmatpush1.msra.mxu0 0.0
  %398 = vmatprep.subr.mxu0 0.0
  %399 = vmatpush1.msra.mxu0 0.0
  %400 = vmatprep.subr.mxu0 0.0
  %401 = vmatpush1.msra.mxu0 0.0
  %402 = vmatprep.subr.mxu0 0.0
  %403 = vmatpush1.msra.mxu0 0.0
  %404 = vmatprep.subr.mxu0 0.0
  %405 = vmatpush1.msra.mxu0 0.0
  %406 = vmatprep.subr.mxu0 0.0
  %407 = vmatpush1.msra.mxu0 0.0
  %408 = vmatprep.subr.mxu0 0.0
  %409 = vmatpush1.msra.mxu0 0.0
  %410 = vmatprep.subr.mxu0 0.0
  %411 = vmatpush1.msra.mxu0 0.0
  %412 = vmatprep.subr.mxu0 0.0
  %413 = vmatpush1.msra.mxu0 0.0
  %414 = vmatprep.subr.mxu0 0.0
  %415 = vmatpush1.msra.mxu0 0.0
  %416 = vmatprep.subr.mxu0 0.0
  %417 = vmatpush1.msra.mxu0 0.0
  %418 = vmatprep.subr.mxu0 0.0
  %419 = vmatpush1.msra.mxu0 0.0
  %420 = vmatprep.subr.mxu0 0.0
  %421 = vmatpush1.msra.mxu0 0.0
  %422 = vmatprep.subr.mxu0 0.0
  %423 = vmatpush1.msra.mxu0 0.0
  %424 = vmatprep.subr.mxu0 0.0
  %425 = vmatpush1.msra.mxu0 0.0
  %426 = vmatprep.subr.mxu0 0.0
  %427 = vmatpush1.msra.mxu0 0.0
  %428 = vmatprep.subr.mxu0 0.0
  %429 = vmatpush1.msra.mxu0 0.0
  %430 = vmatprep.subr.mxu0 0.0
  %431 = vmatpush1.msra.mxu0 0.0
  %432 = vmatprep.subr.mxu0 0.0
  %433 = vmatpush1.msra.mxu0 0.0
  %434 = vmatprep.subr.mxu0 0.0
  %435 = vmatpush1.msra.mxu0 0.0
  %436 = vmatprep.subr.mxu0 0.0
  %437 = vmatpush1.msra.mxu0 0.0
  %438 = vmatprep.subr.mxu0 0.0
  %439 = vmatpush1.msra.mxu0 0.0
  %440 = vmatprep.subr.mxu0 0.0
  %441 = vmatpush1.msra.mxu0 0.0
  %442 = vmatprep.subr.mxu0 0.0
  %443 = vmatpush1.msra.mxu0 0.0
  %444 = vmatprep.mubr.f32.mxu0 0.0
  %445 = vmatmul.mubr.f32.gmra.mrb[0].mxu0 %v378
  %v446 = vpop.f32.mrb[0].mxu0
  %v447 = vadd.f32 0.0, %v446
  %v448 = vpop.f32.mrb[0].mxu0
  %449 = vdwg.mxu0
  %v450 = vadd.f32 %v322, %v447
  %v451 = vxor.u32 %v450, 2147483648
  %v452 = vmul.f32 %v451, 1.442695
  %v453 = vpow.pop %v452
  %v454 = vadd.f32 %v453, 1.0
  %v455 = vrcp.pop %v454
  %v456 = vmul.f32 1.0, %v455
  %v457 = vtanh.pop %v450
  %v458 = vmul.f32 %v456, 0.0
  %460 = vrot.lane.b32.xlu0 %v457, 32
  %v461 = vpop.permute.xlu0 %460
  %v463 = vmul.f32 %v456, %v461
  %465 = vrot.lane.b32.xlu0 %v463, 32
  %v466 = vpop.permute.xlu0 %465
  %v468 = vadd.f32 %v458, %v466
  %v469 = vtanh.pop %v468
  %471 = vrot.lane.b32.xlu0 %v469, 32
  %v472 = vpop.permute.xlu0 %471
  %v474 = vmul.f32 %v456, %v472
  %475 = vmatprep.subr.mxu0 0.0
  %476 = vmatpush1.msra.mxu0 %v372
  %477 = vmatprep.subr.mxu0 0.0
  %478 = vmatpush1.msra.mxu0 %v373
  %479 = vmatprep.subr.mxu0 0.0
  %480 = vmatpush1.msra.mxu0 %v374
  %481 = vmatprep.subr.mxu0 0.0
  %482 = vmatpush1.msra.mxu0 %v375
  %483 = vmatprep.subr.mxu0 0.0
  %484 = vmatpush1.msra.mxu0 0.0
  %485 = vmatprep.subr.mxu0 0.0
  %486 = vmatpush1.msra.mxu0 0.0
  %487 = vmatprep.subr.mxu0 0.0
  %488 = vmatpush1.msra.mxu0 0.0
  %489 = vmatprep.subr.mxu0 0.0
  %490 = vmatpush1.msra.mxu0 0.0
  %491 = vmatprep.subr.mxu0 0.0
  %492 = vmatpush1.msra.mxu0 0.0
  %493 = vmatprep.subr.mxu0 0.0
  %494 = vmatpush1.msra.mxu0 0.0
  %495 = vmatprep.subr.mxu0 0.0
  %496 = vmatpush1.msra.mxu0 0.0
  %497 = vmatprep.subr.mxu0 0.0
  %498 = vmatpush1.msra.mxu0 0.0
  %499 = vmatprep.subr.mxu0 0.0
  %500 = vmatpush1.msra.mxu0 0.0
  %501 = vmatprep.subr.mxu0 0.0
  %502 = vmatpush1.msra.mxu0 0.0
  %503 = vmatprep.subr.mxu0 0.0
  %504 = vmatpush1.msra.mxu0 0.0
  %505 = vmatprep.subr.mxu0 0.0
  %506 = vmatpush1.msra.mxu0 0.0
  %507 = vmatprep.subr.mxu0 0.0
  %508 = vmatpush1.msra.mxu0 0.0
  %509 = vmatprep.subr.mxu0 0.0
  %510 = vmatpush1.msra.mxu0 0.0
  %511 = vmatprep.subr.mxu0 0.0
  %512 = vmatpush1.msra.mxu0 0.0
  %513 = vmatprep.subr.mxu0 0.0
  %514 = vmatpush1.msra.mxu0 0.0
  %515 = vmatprep.subr.mxu0 0.0
  %516 = vmatpush1.msra.mxu0 0.0
  %517 = vmatprep.subr.mxu0 0.0
  %518 = vmatpush1.msra.mxu0 0.0
  %519 = vmatprep.subr.mxu0 0.0
  %520 = vmatpush1.msra.mxu0 0.0
  %521 = vmatprep.subr.mxu0 0.0
  %522 = vmatpush1.msra.mxu0 0.0
  %523 = vmatprep.subr.mxu0 0.0
  %524 = vmatpush1.msra.mxu0 0.0
  %525 = vmatprep.subr.mxu0 0.0
  %526 = vmatpush1.msra.mxu0 0.0
  %527 = vmatprep.subr.mxu0 0.0
  %528 = vmatpush1.msra.mxu0 0.0
  %529 = vmatprep.subr.mxu0 0.0
  %530 = vmatpush1.msra.mxu0 0.0
  %531 = vmatprep.subr.mxu0 0.0
  %532 = vmatpush1.msra.mxu0 0.0
  %533 = vmatprep.subr.mxu0 0.0
  %534 = vmatpush1.msra.mxu0 0.0
  %535 = vmatprep.subr.mxu0 0.0
  %536 = vmatpush1.msra.mxu0 0.0
  %537 = vmatprep.subr.mxu0 0.0
  %538 = vmatpush1.msra.mxu0 0.0
  %539 = vmatprep.mubr.f32.mxu0 0.0
  %540 = vmatmul.mubr.f32.gmra.mrb[0].mxu0 %v378
  %v541 = vpop.f32.mrb[0].mxu0
  %v542 = vadd.f32 0.0, %v541
  %v543 = vpop.f32.mrb[0].mxu0
  %544 = vdwg.mxu0
  %v545 = vadd.f32 %v366, %v542
  %v546 = vxor.u32 %v545, 2147483648
  %v547 = vmul.f32 %v546, 1.442695
  %v548 = vpow.pop %v547
  %v549 = vadd.f32 %v548, 1.0
  %v550 = vrcp.pop %v549
  %v551 = vmul.f32 1.0, %v550
  %v552 = vtanh.pop %v545
  %v553 = vmul.f32 %v551, 0.0
  %555 = vrot.lane.b32.xlu0 %v552, 32
  %v556 = vpop.permute.xlu0 %555
  %v558 = vmul.f32 %v551, %v556
  %560 = vrot.lane.b32.xlu0 %v558, 32
  %v561 = vpop.permute.xlu0 %560
  %v563 = vadd.f32 %v553, %v561
  %v564 = vtanh.pop %v563
  %566 = vrot.lane.b32.xlu0 %v564, 32
  %v567 = vpop.permute.xlu0 %566
  %v569 = vmul.f32 %v551, %v567
  %571 = vrot.lane.b32.xlu0 %v474, 64
  %v572 = vpop.permute.xlu0 %571
  %v573 = vsel %vm376, %v572, 0
  %575 = vmatprep.subr.mxu0 0.0
  %576 = vmatpush1.msra.mxu0 %v368
  %577 = vmatprep.subr.mxu0 0.0
  %578 = vmatpush1.msra.mxu0 %v369
  %579 = vmatprep.subr.mxu0 0.0
  %580 = vmatpush1.msra.mxu0 %v370
  %581 = vmatprep.subr.mxu0 0.0
  %582 = vmatpush1.msra.mxu0 %v371
  %583 = vmatprep.subr.mxu0 0.0
  %584 = vmatpush1.msra.mxu0 0.0
  %585 = vmatprep.subr.mxu0 0.0
  %586 = vmatpush1.msra.mxu0 0.0
  %587 = vmatprep.subr.mxu0 0.0
  %588 = vmatpush1.msra.mxu0 0.0
  %589 = vmatprep.subr.mxu0 0.0
  %590 = vmatpush1.msra.mxu0 0.0
  %591 = vmatprep.subr.mxu0 0.0
  %592 = vmatpush1.msra.mxu0 0.0
  %593 = vmatprep.subr.mxu0 0.0
  %594 = vmatpush1.msra.mxu0 0.0
  %595 = vmatprep.subr.mxu0 0.0
  %596 = vmatpush1.msra.mxu0 0.0
  %597 = vmatprep.subr.mxu0 0.0
  %598 = vmatpush1.msra.mxu0 0.0
  %599 = vmatprep.subr.mxu0 0.0
  %600 = vmatpush1.msra.mxu0 0.0
  %601 = vmatprep.subr.mxu0 0.0
  %602 = vmatpush1.msra.mxu0 0.0
  %603 = vmatprep.subr.mxu0 0.0
  %604 = vmatpush1.msra.mxu0 0.0
  %605 = vmatprep.subr.mxu0 0.0
  %606 = vmatpush1.msra.mxu0 0.0
  %607 = vmatprep.subr.mxu0 0.0
  %608 = vmatpush1.msra.mxu0 0.0
  %609 = vmatprep.subr.mxu0 0.0
  %610 = vmatpush1.msra.mxu0 0.0
  %611 = vmatprep.subr.mxu0 0.0
  %612 = vmatpush1.msra.mxu0 0.0
  %613 = vmatprep.subr.mxu0 0.0
  %614 = vmatpush1.msra.mxu0 0.0
  %615 = vmatprep.subr.mxu0 0.0
  %616 = vmatpush1.msra.mxu0 0.0
  %617 = vmatprep.subr.mxu0 0.0
  %618 = vmatpush1.msra.mxu0 0.0
  %619 = vmatprep.subr.mxu0 0.0
  %620 = vmatpush1.msra.mxu0 0.0
  %621 = vmatprep.subr.mxu0 0.0
  %622 = vmatpush1.msra.mxu0 0.0
  %623 = vmatprep.subr.mxu0 0.0
  %624 = vmatpush1.msra.mxu0 0.0
  %625 = vmatprep.subr.mxu0 0.0
  %626 = vmatpush1.msra.mxu0 0.0
  %627 = vmatprep.subr.mxu0 0.0
  %628 = vmatpush1.msra.mxu0 0.0
  %629 = vmatprep.subr.mxu0 0.0
  %630 = vmatpush1.msra.mxu0 0.0
  %631 = vmatprep.subr.mxu0 0.0
  %632 = vmatpush1.msra.mxu0 0.0
  %633 = vmatprep.subr.mxu0 0.0
  %634 = vmatpush1.msra.mxu0 0.0
  %635 = vmatprep.subr.mxu0 0.0
  %636 = vmatpush1.msra.mxu0 0.0
  %637 = vmatprep.subr.mxu0 0.0
  %638 = vmatpush1.msra.mxu0 0.0
  %639 = vmatprep.mubr.f32.mxu0 0.0
  %640 = vmatmul.mubr.f32.gmra.mrb[0].mxu0 %v573
  %v641 = vpop.f32.mrb[0].mxu0
  %v642 = vadd.f32 0.0, %v641
  %v643 = vpop.f32.mrb[0].mxu0
  %644 = vdwg.mxu0
  %v645 = vadd.f32 %v328, %v642
  %v646 = vxor.u32 %v645, 2147483648
  %v647 = vmul.f32 %v646, 1.442695
  %v648 = vpow.pop %v647
  %v649 = vadd.f32 %v648, 1.0
  %v650 = vrcp.pop %v649
  %v651 = vmul.f32 1.0, %v650
  %v652 = vtanh.pop %v645
  %v653 = vmul.f32 %v651, %v468
  %655 = vrot.lane.b32.xlu0 %v652, 32
  %v656 = vpop.permute.xlu0 %655
  %v658 = vmul.f32 %v651, %v656
  %660 = vrot.lane.b32.xlu0 %v658, 32
  %v661 = vpop.permute.xlu0 %660
  %v663 = vadd.f32 %v653, %v661
  %v664 = vtanh.pop %v663
  %666 = vrot.lane.b32.xlu0 %v664, 32
  %v667 = vpop.permute.xlu0 %666
  %v669 = vmul.f32 %v651, %v667
  %671 = vrot.lane.b32.xlu0 %v569, 64
  %v672 = vpop.permute.xlu0 %671
  %v673 = vsel %vm376, %v672, 0
  %675 = vmatprep.subr.mxu0 0.0
  %676 = vmatpush1.msra.mxu0 %v372
  %677 = vmatprep.subr.mxu0 0.0
  %678 = vmatpush1.msra.mxu0 %v373
  %679 = vmatprep.subr.mxu0 0.0
  %680 = vmatpush1.msra.mxu0 %v374
  %681 = vmatprep.subr.mxu0 0.0
  %682 = vmatpush1.msra.mxu0 %v375
  %683 = vmatprep.subr.mxu0 0.0
  %684 = vmatpush1.msra.mxu0 0.0
  %685 = vmatprep.subr.mxu0 0.0
  %686 = vmatpush1.msra.mxu0 0.0
  %687 = vmatprep.subr.mxu0 0.0
  %688 = vmatpush1.msra.mxu0 0.0
  %689 = vmatprep.subr.mxu0 0.0
  %690 = vmatpush1.msra.mxu0 0.0
  %691 = vmatprep.subr.mxu0 0.0
  %692 = vmatpush1.msra.mxu0 0.0
  %693 = vmatprep.subr.mxu0 0.0
  %694 = vmatpush1.msra.mxu0 0.0
  %695 = vmatprep.subr.mxu0 0.0
  %696 = vmatpush1.msra.mxu0 0.0
  %697 = vmatprep.subr.mxu0 0.0
  %698 = vmatpush1.msra.mxu0 0.0
  %699 = vmatprep.subr.mxu0 0.0
  %700 = vmatpush1.msra.mxu0 0.0
  %701 = vmatprep.subr.mxu0 0.0
  %702 = vmatpush1.msra.mxu0 0.0
  %703 = vmatprep.subr.mxu0 0.0
  %704 = vmatpush1.msra.mxu0 0.0
  %705 = vmatprep.subr.mxu0 0.0
  %706 = vmatpush1.msra.mxu0 0.0
  %707 = vmatprep.subr.mxu0 0.0
  %708 = vmatpush1.msra.mxu0 0.0
  %709 = vmatprep.subr.mxu0 0.0
  %710 = vmatpush1.msra.mxu0 0.0
  %711 = vmatprep.subr.mxu0 0.0
  %712 = vmatpush1.msra.mxu0 0.0
  %713 = vmatprep.subr.mxu0 0.0
  %714 = vmatpush1.msra.mxu0 0.0
  %715 = vmatprep.subr.mxu0 0.0
  %716 = vmatpush1.msra.mxu0 0.0
  %717 = vmatprep.subr.mxu0 0.0
  %718 = vmatpush1.msra.mxu0 0.0
  %719 = vmatprep.subr.mxu0 0.0
  %720 = vmatpush1.msra.mxu0 0.0
  %721 = vmatprep.subr.mxu0 0.0
  %722 = vmatpush1.msra.mxu0 0.0
  %723 = vmatprep.subr.mxu0 0.0
  %724 = vmatpush1.msra.mxu0 0.0
  %725 = vmatprep.subr.mxu0 0.0
  %726 = vmatpush1.msra.mxu0 0.0
  %727 = vmatprep.subr.mxu0 0.0
  %728 = vmatpush1.msra.mxu0 0.0
  %729 = vmatprep.subr.mxu0 0.0
  %730 = vmatpush1.msra.mxu0 0.0
  %731 = vmatprep.subr.mxu0 0.0
  %732 = vmatpush1.msra.mxu0 0.0
  %733 = vmatprep.subr.mxu0 0.0
  %734 = vmatpush1.msra.mxu0 0.0
  %735 = vmatprep.subr.mxu0 0.0
  %736 = vmatpush1.msra.mxu0 0.0
  %737 = vmatprep.subr.mxu0 0.0
  %738 = vmatpush1.msra.mxu0 0.0
  %739 = vmatprep.mubr.f32.mxu0 0.0
  %740 = vmatmul.mubr.f32.gmra.mrb[0].mxu0 %v673
  %v741 = vpop.f32.mrb[0].mxu0
  %v742 = vadd.f32 0.0, %v741
  %v743 = vpop.f32.mrb[0].mxu0
  %744 = vdwg.mxu0
  %v745 = vadd.f32 %v360, %v742
  %v746 = vxor.u32 %v745, 2147483648
  %v747 = vmul.f32 %v746, 1.442695
  %v748 = vpow.pop %v747
  %v749 = vadd.f32 %v748, 1.0
  %v750 = vrcp.pop %v749
  %v751 = vmul.f32 1.0, %v750
  %v752 = vtanh.pop %v745
  %v753 = vmul.f32 %v751, %v563
  %755 = vrot.lane.b32.xlu0 %v752, 32
  %v756 = vpop.permute.xlu0 %755
  %v758 = vmul.f32 %v751, %v756
  %760 = vrot.lane.b32.xlu0 %v758, 32
  %v761 = vpop.permute.xlu0 %760
  %v763 = vadd.f32 %v753, %v761
  %v764 = vtanh.pop %v763
  %766 = vrot.lane.b32.xlu0 %v764, 32
  %v767 = vpop.permute.xlu0 %766
  %v769 = vmul.f32 %v751, %v767
  %771 = vrot.lane.b32.xlu0 %v669, 64
  %v772 = vpop.permute.xlu0 %771
  %v773 = vsel %vm376, %v772, 0
  %775 = vmatprep.subr.mxu0 0.0
  %776 = vmatpush1.msra.mxu0 %v368
  %777 = vmatprep.subr.mxu0 0.0
  %778 = vmatpush1.msra.mxu0 %v369
  %779 = vmatprep.subr.mxu0 0.0
  %780 = vmatpush1.msra.mxu0 %v370
  %781 = vmatprep.subr.mxu0 0.0
  %782 = vmatpush1.msra.mxu0 %v371
  %783 = vmatprep.subr.mxu0 0.0
  %784 = vmatpush1.msra.mxu0 0.0
  %785 = vmatprep.subr.mxu0 0.0
  %786 = vmatpush1.msra.mxu0 0.0
  %787 = vmatprep.subr.mxu0 0.0
  %788 = vmatpush1.msra.mxu0 0.0
  %789 = vmatprep.subr.mxu0 0.0
  %790 = vmatpush1.msra.mxu0 0.0
  %791 = vmatprep.subr.mxu0 0.0
  %792 = vmatpush1.msra.mxu0 0.0
  %793 = vmatprep.subr.mxu0 0.0
  %794 = vmatpush1.msra.mxu0 0.0
  %795 = vmatprep.subr.mxu0 0.0
  %796 = vmatpush1.msra.mxu0 0.0
  %797 = vmatprep.subr.mxu0 0.0
  %798 = vmatpush1.msra.mxu0 0.0
  %799 = vmatprep.subr.mxu0 0.0
  %800 = vmatpush1.msra.mxu0 0.0
  %801 = vmatprep.subr.mxu0 0.0
  %802 = vmatpush1.msra.mxu0 0.0
  %803 = vmatprep.subr.mxu0 0.0
  %804 = vmatpush1.msra.mxu0 0.0
  %805 = vmatprep.subr.mxu0 0.0
  %806 = vmatpush1.msra.mxu0 0.0
  %807 = vmatprep.subr.mxu0 0.0
  %808 = vmatpush1.msra.mxu0 0.0
  %809 = vmatprep.subr.mxu0 0.0
  %810 = vmatpush1.msra.mxu0 0.0
  %811 = vmatprep.subr.mxu0 0.0
  %812 = vmatpush1.msra.mxu0 0.0
  %813 = vmatprep.subr.mxu0 0.0
  %814 = vmatpush1.msra.mxu0 0.0
  %815 = vmatprep.subr.mxu0 0.0
  %816 = vmatpush1.msra.mxu0 0.0
  %817 = vmatprep.subr.mxu0 0.0
  %818 = vmatpush1.msra.mxu0 0.0
  %819 = vmatprep.subr.mxu0 0.0
  %820 = vmatpush1.msra.mxu0 0.0
  %821 = vmatprep.subr.mxu0 0.0
  %822 = vmatpush1.msra.mxu0 0.0
  %823 = vmatprep.subr.mxu0 0.0
  %824 = vmatpush1.msra.mxu0 0.0
  %825 = vmatprep.subr.mxu0 0.0
  %826 = vmatpush1.msra.mxu0 0.0
  %827 = vmatprep.subr.mxu0 0.0
  %828 = vmatpush1.msra.mxu0 0.0
  %829 = vmatprep.subr.mxu0 0.0
  %830 = vmatpush1.msra.mxu0 0.0
  %831 = vmatprep.subr.mxu0 0.0
  %832 = vmatpush1.msra.mxu0 0.0
  %833 = vmatprep.subr.mxu0 0.0
  %834 = vmatpush1.msra.mxu0 0.0
  %835 = vmatprep.subr.mxu0 0.0
  %836 = vmatpush1.msra.mxu0 0.0
  %837 = vmatprep.subr.mxu0 0.0
  %838 = vmatpush1.msra.mxu0 0.0
  %839 = vmatprep.mubr.f32.mxu0 0.0
  %840 = vmatmul.mubr.f32.gmra.mrb[0].mxu0 %v773
  %v841 = vpop.f32.mrb[0].mxu0
  %v842 = vadd.f32 0.0, %v841
  %v843 = vpop.f32.mrb[0].mxu0
  %844 = vdwg.mxu0
  %v845 = vadd.f32 %v334, %v842
  %v846 = vxor.u32 %v845, 2147483648
  %v847 = vmul.f32 %v846, 1.442695
  %v848 = vpow.pop %v847
  %v849 = vadd.f32 %v848, 1.0
  %v850 = vrcp.pop %v849
  %v851 = vmul.f32 1.0, %v850
  %v852 = vtanh.pop %v845
  %v853 = vmul.f32 %v851, %v663
  %855 = vrot.lane.b32.xlu0 %v852, 32
  %v856 = vpop.permute.xlu0 %855
  %v858 = vmul.f32 %v851, %v856
  %860 = vrot.lane.b32.xlu0 %v858, 32
  %v861 = vpop.permute.xlu0 %860
  %v863 = vadd.f32 %v853, %v861
  %v864 = vtanh.pop %v863
  %866 = vrot.lane.b32.xlu0 %v864, 32
  %v867 = vpop.permute.xlu0 %866
  %v869 = vmul.f32 %v851, %v867
  %871 = vrot.lane.b32.xlu0 %v769, 64
  %v872 = vpop.permute.xlu0 %871
  %v873 = vsel %vm376, %v872, 0
  %875 = vmatprep.subr.mxu0 0.0
  %876 = vmatpush1.msra.mxu0 %v372
  %877 = vmatprep.subr.mxu0 0.0
  %878 = vmatpush1.msra.mxu0 %v373
  %879 = vmatprep.subr.mxu0 0.0
  %880 = vmatpush1.msra.mxu0 %v374
  %881 = vmatprep.subr.mxu0 0.0
  %882 = vmatpush1.msra.mxu0 %v375
  %883 = vmatprep.subr.mxu0 0.0
  %884 = vmatpush1.msra.mxu0 0.0
  %885 = vmatprep.subr.mxu0 0.0
  %886 = vmatpush1.msra.mxu0 0.0
  %887 = vmatprep.subr.mxu0 0.0
  %888 = vmatpush1.msra.mxu0 0.0
  %889 = vmatprep.subr.mxu0 0.0
  %890 = vmatpush1.msra.mxu0 0.0
  %891 = vmatprep.subr.mxu0 0.0
  %892 = vmatpush1.msra.mxu0 0.0
  %893 = vmatprep.subr.mxu0 0.0
  %894 = vmatpush1.msra.mxu0 0.0
  %895 = vmatprep.subr.mxu0 0.0
  %896 = vmatpush1.msra.mxu0 0.0
  %897 = vmatprep.subr.mxu0 0.0
  %898 = vmatpush1.msra.mxu0 0.0
  %899 = vmatprep.subr.mxu0 0.0
  %900 = vmatpush1.msra.mxu0 0.0
  %901 = vmatprep.subr.mxu0 0.0
  %902 = vmatpush1.msra.mxu0 0.0
  %903 = vmatprep.subr.mxu0 0.0
  %904 = vmatpush1.msra.mxu0 0.0
  %905 = vmatprep.subr.mxu0 0.0
  %906 = vmatpush1.msra.mxu0 0.0
  %907 = vmatprep.subr.mxu0 0.0
  %908 = vmatpush1.msra.mxu0 0.0
  %909 = vmatprep.subr.mxu0 0.0
  %910 = vmatpush1.msra.mxu0 0.0
  %911 = vmatprep.subr.mxu0 0.0
  %912 = vmatpush1.msra.mxu0 0.0
  %913 = vmatprep.subr.mxu0 0.0
  %914 = vmatpush1.msra.mxu0 0.0
  %915 = vmatprep.subr.mxu0 0.0
  %916 = vmatpush1.msra.mxu0 0.0
  %917 = vmatprep.subr.mxu0 0.0
  %918 = vmatpush1.msra.mxu0 0.0
  %919 = vmatprep.subr.mxu0 0.0
  %920 = vmatpush1.msra.mxu0 0.0
  %921 = vmatprep.subr.mxu0 0.0
  %922 = vmatpush1.msra.mxu0 0.0
  %923 = vmatprep.subr.mxu0 0.0
  %924 = vmatpush1.msra.mxu0 0.0
  %925 = vmatprep.subr.mxu0 0.0
  %926 = vmatpush1.msra.mxu0 0.0
  %927 = vmatprep.subr.mxu0 0.0
  %928 = vmatpush1.msra.mxu0 0.0
  %929 = vmatprep.subr.mxu0 0.0
  %930 = vmatpush1.msra.mxu0 0.0
  %931 = vmatprep.subr.mxu0 0.0
  %932 = vmatpush1.msra.mxu0 0.0
  %933 = vmatprep.subr.mxu0 0.0
  %934 = vmatpush1.msra.mxu0 0.0
  %935 = vmatprep.subr.mxu0 0.0
  %936 = vmatpush1.msra.mxu0 0.0
  %937 = vmatprep.subr.mxu0 0.0
  %938 = vmatpush1.msra.mxu0 0.0
  %939 = vmatprep.mubr.f32.mxu0 0.0
  %940 = vmatmul.mubr.f32.gmra.mrb[0].mxu0 %v873
  %v941 = vpop.f32.mrb[0].mxu0
  %v942 = vadd.f32 0.0, %v941
  %v943 = vpop.f32.mrb[0].mxu0
  %944 = vdwg.mxu0
  %v945 = vadd.f32 %v354, %v942
  %v946 = vxor.u32 %v945, 2147483648
  %v947 = vmul.f32 %v946, 1.442695
  %v948 = vpow.pop %v947
  %v949 = vadd.f32 %v948, 1.0
  %v950 = vrcp.pop %v949
  %v951 = vmul.f32 1.0, %v950
  %v952 = vtanh.pop %v945
  %v953 = vmul.f32 %v951, %v763
  %955 = vrot.lane.b32.xlu0 %v952, 32
  %v956 = vpop.permute.xlu0 %955
  %v958 = vmul.f32 %v951, %v956
  %960 = vrot.lane.b32.xlu0 %v958, 32
  %v961 = vpop.permute.xlu0 %960
  %v963 = vadd.f32 %v953, %v961
  %v964 = vtanh.pop %v963
  %966 = vrot.lane.b32.xlu0 %v964, 32
  %v967 = vpop.permute.xlu0 %966
  %v969 = vmul.f32 %v951, %v967
  %971 = vrot.lane.b32.xlu0 %v869, 64
  %v972 = vpop.permute.xlu0 %971
  %v973 = vsel %vm376, %v972, 0
  %975 = vmatprep.subr.mxu0 0.0
  %976 = vmatpush1.msra.mxu0 %v368
  %977 = vmatprep.subr.mxu0 0.0
  %978 = vmatpush1.msra.mxu0 %v369
  %979 = vmatprep.subr.mxu0 0.0
  %980 = vmatpush1.msra.mxu0 %v370
  %981 = vmatprep.subr.mxu0 0.0
  %982 = vmatpush1.msra.mxu0 %v371
  %983 = vmatprep.subr.mxu0 0.0
  %984 = vmatpush1.msra.mxu0 0.0
  %985 = vmatprep.subr.mxu0 0.0
  %986 = vmatpush1.msra.mxu0 0.0
  %987 = vmatprep.subr.mxu0 0.0
  %988 = vmatpush1.msra.mxu0 0.0
  %989 = vmatprep.subr.mxu0 0.0
  %990 = vmatpush1.msra.mxu0 0.0
  %991 = vmatprep.subr.mxu0 0.0
  %992 = vmatpush1.msra.mxu0 0.0
  %993 = vmatprep.subr.mxu0 0.0
  %994 = vmatpush1.msra.mxu0 0.0
  %995 = vmatprep.subr.mxu0 0.0
  %996 = vmatpush1.msra.mxu0 0.0
  %997 = vmatprep.subr.mxu0 0.0
  %998 = vmatpush1.msra.mxu0 0.0
  %999 = vmatprep.subr.mxu0 0.0
  %1000 = vmatpush1.msra.mxu0 0.0
  %1001 = vmatprep.subr.mxu0 0.0
  %1002 = vmatpush1.msra.mxu0 0.0
  %1003 = vmatprep.subr.mxu0 0.0
  %1004 = vmatpush1.msra.mxu0 0.0
  %1005 = vmatprep.subr.mxu0 0.0
  %1006 = vmatpush1.msra.mxu0 0.0
  %1007 = vmatprep.subr.mxu0 0.0
  %1008 = vmatpush1.msra.mxu0 0.0
  %1009 = vmatprep.subr.mxu0 0.0
  %1010 = vmatpush1.msra.mxu0 0.0
  %1011 = vmatprep.subr.mxu0 0.0
  %1012 = vmatpush1.msra.mxu0 0.0
  %1013 = vmatprep.subr.mxu0 0.0
  %1014 = vmatpush1.msra.mxu0 0.0
  %1015 = vmatprep.subr.mxu0 0.0
  %1016 = vmatpush1.msra.mxu0 0.0
  %1017 = vmatprep.subr.mxu0 0.0
  %1018 = vmatpush1.msra.mxu0 0.0
  %1019 = vmatprep.subr.mxu0 0.0
  %1020 = vmatpush1.msra.mxu0 0.0
  %1021 = vmatprep.subr.mxu0 0.0
  %1022 = vmatpush1.msra.mxu0 0.0
  %1023 = vmatprep.subr.mxu0 0.0
  %1024 = vmatpush1.msra.mxu0 0.0
  %1025 = vmatprep.subr.mxu0 0.0
  %1026 = vmatpush1.msra.mxu0 0.0
  %1027 = vmatprep.subr.mxu0 0.0
  %1028 = vmatpush1.msra.mxu0 0.0
  %1029 = vmatprep.subr.mxu0 0.0
  %1030 = vmatpush1.msra.mxu0 0.0
  %1031 = vmatprep.subr.mxu0 0.0
  %1032 = vmatpush1.msra.mxu0 0.0
  %1033 = vmatprep.subr.mxu0 0.0
  %1034 = vmatpush1.msra.mxu0 0.0
  %1035 = vmatprep.subr.mxu0 0.0
  %1036 = vmatpush1.msra.mxu0 0.0
  %1037 = vmatprep.subr.mxu0 0.0
  %1038 = vmatpush1.msra.mxu0 0.0
  %1039 = vmatprep.mubr.f32.mxu0 0.0
  %1040 = vmatmul.mubr.f32.gmra.mrb[0].mxu0 %v973
  %v1041 = vpop.f32.mrb[0].mxu0
  %v1042 = vadd.f32 0.0, %v1041
  %v1043 = vpop.f32.mrb[0].mxu0
  %1044 = vdwg.mxu0
  %v1045 = vadd.f32 %v340, %v1042
  %v1046 = vxor.u32 %v1045, 2147483648
  %v1047 = vmul.f32 %v1046, 1.442695
  %v1048 = vpow.pop %v1047
  %v1049 = vadd.f32 %v1048, 1.0
  %v1050 = vrcp.pop %v1049
  %v1051 = vmul.f32 1.0, %v1050
  %v1052 = vtanh.pop %v1045
  %v1053 = vmul.f32 %v1051, %v863
  %1055 = vrot.lane.b32.xlu0 %v1052, 32
  %v1056 = vpop.permute.xlu0 %1055
  %v1058 = vmul.f32 %v1051, %v1056
  %1060 = vrot.lane.b32.xlu0 %v1058, 32
  %v1061 = vpop.permute.xlu0 %1060
  %v1063 = vadd.f32 %v1053, %v1061
  %v1064 = vtanh.pop %v1063
  %1066 = vrot.lane.b32.xlu0 %v1064, 32
  %v1067 = vpop.permute.xlu0 %1066
  %v1069 = vmul.f32 %v1051, %v1067
  %1071 = vrot.lane.b32.xlu0 %v969, 64
  %v1072 = vpop.permute.xlu0 %1071
  %v1073 = vsel %vm376, %v1072, 0
  %1075 = vmatprep.subr.mxu0 0.0
  %1076 = vmatpush1.msra.mxu0 %v372
  %1077 = vmatprep.subr.mxu0 0.0
  %1078 = vmatpush1.msra.mxu0 %v373
  %1079 = vmatprep.subr.mxu0 0.0
  %1080 = vmatpush1.msra.mxu0 %v374
  %1081 = vmatprep.subr.mxu0 0.0
  %1082 = vmatpush1.msra.mxu0 %v375
  %1083 = vmatprep.subr.mxu0 0.0
  %1084 = vmatpush1.msra.mxu0 0.0
  %1085 = vmatprep.subr.mxu0 0.0
  %1086 = vmatpush1.msra.mxu0 0.0
  %1087 = vmatprep.subr.mxu0 0.0
  %1088 = vmatpush1.msra.mxu0 0.0
  %1089 = vmatprep.subr.mxu0 0.0
  %1090 = vmatpush1.msra.mxu0 0.0
  %1091 = vmatprep.subr.mxu0 0.0
  %1092 = vmatpush1.msra.mxu0 0.0
  %1093 = vmatprep.subr.mxu0 0.0
  %1094 = vmatpush1.msra.mxu0 0.0
  %1095 = vmatprep.subr.mxu0 0.0
  %1096 = vmatpush1.msra.mxu0 0.0
  %1097 = vmatprep.subr.mxu0 0.0
  %1098 = vmatpush1.msra.mxu0 0.0
  %1099 = vmatprep.subr.mxu0 0.0
  %1100 = vmatpush1.msra.mxu0 0.0
  %1101 = vmatprep.subr.mxu0 0.0
  %1102 = vmatpush1.msra.mxu0 0.0
  %1103 = vmatprep.subr.mxu0 0.0
  %1104 = vmatpush1.msra.mxu0 0.0
  %1105 = vmatprep.subr.mxu0 0.0
  %1106 = vmatpush1.msra.mxu0 0.0
  %1107 = vmatprep.subr.mxu0 0.0
  %1108 = vmatpush1.msra.mxu0 0.0
  %1109 = vmatprep.subr.mxu0 0.0
  %1110 = vmatpush1.msra.mxu0 0.0
  %1111 = vmatprep.subr.mxu0 0.0
  %1112 = vmatpush1.msra.mxu0 0.0
  %1113 = vmatprep.subr.mxu0 0.0
  %1114 = vmatpush1.msra.mxu0 0.0
  %1115 = vmatprep.subr.mxu0 0.0
  %1116 = vmatpush1.msra.mxu0 0.0
  %1117 = vmatprep.subr.mxu0 0.0
  %1118 = vmatpush1.msra.mxu0 0.0
  %1119 = vmatprep.subr.mxu0 0.0
  %1120 = vmatpush1.msra.mxu0 0.0
  %1121 = vmatprep.subr.mxu0 0.0
  %1122 = vmatpush1.msra.mxu0 0.0
  %1123 = vmatprep.subr.mxu0 0.0
  %1124 = vmatpush1.msra.mxu0 0.0
  %1125 = vmatprep.subr.mxu0 0.0
  %1126 = vmatpush1.msra.mxu0 0.0
  %1127 = vmatprep.subr.mxu0 0.0
  %1128 = vmatpush1.msra.mxu0 0.0
  %1129 = vmatprep.subr.mxu0 0.0
  %1130 = vmatpush1.msra.mxu0 0.0
  %1131 = vmatprep.subr.mxu0 0.0
  %1132 = vmatpush1.msra.mxu0 0.0
  %1133 = vmatprep.subr.mxu0 0.0
  %1134 = vmatpush1.msra.mxu0 0.0
  %1135 = vmatprep.subr.mxu0 0.0
  %1136 = vmatpush1.msra.mxu0 0.0
  %1137 = vmatprep.subr.mxu0 0.0
  %1138 = vmatpush1.msra.mxu0 0.0
  %1139 = vmatprep.mubr.f32.mxu0 0.0
  %1140 = vmatmul.mubr.f32.gmra.mrb[0].mxu0 %v1073
  %v1141 = vpop.f32.mrb[0].mxu0
  %v1142 = vadd.f32 0.0, %v1141
  %v1143 = vpop.f32.mrb[0].mxu0
  %1144 = vdwg.mxu0
  %v1145 = vadd.f32 %v348, %v1142
  %v1146 = vxor.u32 %v1145, 2147483648
  %v1147 = vmul.f32 %v1146, 1.442695
  %v1148 = vpow.pop %v1147
  %v1149 = vadd.f32 %v1148, 1.0
  %v1150 = vrcp.pop %v1149
  %v1151 = vmul.f32 1.0, %v1150
  %v1152 = vtanh.pop %v1145
  %v1153 = vmul.f32 %v1151, %v963
  %1155 = vrot.lane.b32.xlu0 %v1152, 32
  %v1156 = vpop.permute.xlu0 %1155
  %v1158 = vmul.f32 %v1151, %v1156
  %1160 = vrot.lane.b32.xlu0 %v1158, 32
  %v1161 = vpop.permute.xlu0 %1160
  %v1163 = vadd.f32 %v1153, %v1161
  %v1164 = vtanh.pop %v1163
  %1166 = vrot.lane.b32.xlu0 %v1164, 32
  %v1167 = vpop.permute.xlu0 %1166
  %v1169 = vmul.f32 %v1151, %v1167
  %1171 = vrot.lane.b32.xlu0 %v1069, 64
  %v1172 = vpop.permute.xlu0 %1171
  %v1173 = vsel %vm376, %v1172, 0
  %1175 = vmatprep.subr.mxu0 0.0
  %1176 = vmatpush1.msra.mxu0 %v368
  %1177 = vmatprep.subr.mxu0 0.0
  %1178 = vmatpush1.msra.mxu0 %v369
  %1179 = vmatprep.subr.mxu0 0.0
  %1180 = vmatpush1.msra.mxu0 %v370
  %1181 = vmatprep.subr.mxu0 0.0
  %1182 = vmatpush1.msra.mxu0 %v371
  %1183 = vmatprep.subr.mxu0 0.0
  %1184 = vmatpush1.msra.mxu0 0.0
  %1185 = vmatprep.subr.mxu0 0.0
  %1186 = vmatpush1.msra.mxu0 0.0
  %1187 = vmatprep.subr.mxu0 0.0
  %1188 = vmatpush1.msra.mxu0 0.0
  %1189 = vmatprep.subr.mxu0 0.0
  %1190 = vmatpush1.msra.mxu0 0.0
  %1191 = vmatprep.subr.mxu0 0.0
  %1192 = vmatpush1.msra.mxu0 0.0
  %1193 = vmatprep.subr.mxu0 0.0
  %1194 = vmatpush1.msra.mxu0 0.0
  %1195 = vmatprep.subr.mxu0 0.0
  %1196 = vmatpush1.msra.mxu0 0.0
  %1197 = vmatprep.subr.mxu0 0.0
  %1198 = vmatpush1.msra.mxu0 0.0
  %1199 = vmatprep.subr.mxu0 0.0
  %1200 = vmatpush1.msra.mxu0 0.0
  %1201 = vmatprep.subr.mxu0 0.0
  %1202 = vmatpush1.msra.mxu0 0.0
  %1203 = vmatprep.subr.mxu0 0.0
  %1204 = vmatpush1.msra.mxu0 0.0
  %1205 = vmatprep.subr.mxu0 0.0
  %1206 = vmatpush1.msra.mxu0 0.0
  %1207 = vmatprep.subr.mxu0 0.0
  %1208 = vmatpush1.msra.mxu0 0.0
  %1209 = vmatprep.subr.mxu0 0.0
  %1210 = vmatpush1.msra.mxu0 0.0
  %1211 = vmatprep.subr.mxu0 0.0
  %1212 = vmatpush1.msra.mxu0 0.0
  %1213 = vmatprep.subr.mxu0 0.0
  %1214 = vmatpush1.msra.mxu0 0.0
  %1215 = vmatprep.subr.mxu0 0.0
  %1216 = vmatpush1.msra.mxu0 0.0
  %1217 = vmatprep.subr.mxu0 0.0
  %1218 = vmatpush1.msra.mxu0 0.0
  %1219 = vmatprep.subr.mxu0 0.0
  %1220 = vmatpush1.msra.mxu0 0.0
  %1221 = vmatprep.subr.mxu0 0.0
  %1222 = vmatpush1.msra.mxu0 0.0
  %1223 = vmatprep.subr.mxu0 0.0
  %1224 = vmatpush1.msra.mxu0 0.0
  %1225 = vmatprep.subr.mxu0 0.0
  %1226 = vmatpush1.msra.mxu0 0.0
  %1227 = vmatprep.subr.mxu0 0.0
  %1228 = vmatpush1.msra.mxu0 0.0
  %1229 = vmatprep.subr.mxu0 0.0
  %1230 = vmatpush1.msra.mxu0 0.0
  %1231 = vmatprep.subr.mxu0 0.0
  %1232 = vmatpush1.msra.mxu0 0.0
  %1233 = vmatprep.subr.mxu0 0.0
  %1234 = vmatpush1.msra.mxu0 0.0
  %1235 = vmatprep.subr.mxu0 0.0
  %1236 = vmatpush1.msra.mxu0 0.0
  %1237 = vmatprep.subr.mxu0 0.0
  %1238 = vmatpush1.msra.mxu0 0.0
  %1239 = vmatprep.mubr.f32.mxu0 0.0
  %1240 = vmatmul.mubr.f32.gmra.mrb[0].mxu0 %v1173
  %v1241 = vpop.f32.mrb[0].mxu0
  %v1242 = vadd.f32 0.0, %v1241
  %v1243 = vpop.f32.mrb[0].mxu0
  %1244 = vdwg.mxu0
  %v1245 = vadd.f32 %v346, %v1242
  %v1246 = vxor.u32 %v1245, 2147483648
  %v1247 = vmul.f32 %v1246, 1.442695
  %v1248 = vpow.pop %v1247
  %v1249 = vadd.f32 %v1248, 1.0
  %v1250 = vrcp.pop %v1249
  %v1251 = vmul.f32 1.0, %v1250
  %v1252 = vtanh.pop %v1245
  %v1253 = vmul.f32 %v1251, %v1063
  %1255 = vrot.lane.b32.xlu0 %v1252, 32
  %v1256 = vpop.permute.xlu0 %1255
  %v1258 = vmul.f32 %v1251, %v1256
  %1260 = vrot.lane.b32.xlu0 %v1258, 32
  %v1261 = vpop.permute.xlu0 %1260
  %v1263 = vadd.f32 %v1253, %v1261
  %v1264 = vtanh.pop %v1263
  %1266 = vrot.lane.b32.xlu0 %v1264, 32
  %v1267 = vpop.permute.xlu0 %1266
  %v1269 = vmul.f32 %v1251, %v1267
  %1271 = vrot.lane.b32.xlu0 %v1169, 64
  %v1272 = vpop.permute.xlu0 %1271
  %v1273 = vsel %vm376, %v1272, 0
  %1275 = vmatprep.subr.mxu0 0.0
  %1276 = vmatpush1.msra.mxu0 %v372
  %1277 = vmatprep.subr.mxu0 0.0
  %1278 = vmatpush1.msra.mxu0 %v373
  %1279 = vmatprep.subr.mxu0 0.0
  %1280 = vmatpush1.msra.mxu0 %v374
  %1281 = vmatprep.subr.mxu0 0.0
  %1282 = vmatpush1.msra.mxu0 %v375
  %1283 = vmatprep.subr.mxu0 0.0
  %1284 = vmatpush1.msra.mxu0 0.0
  %1285 = vmatprep.subr.mxu0 0.0
  %1286 = vmatpush1.msra.mxu0 0.0
  %1287 = vmatprep.subr.mxu0 0.0
  %1288 = vmatpush1.msra.mxu0 0.0
  %1289 = vmatprep.subr.mxu0 0.0
  %1290 = vmatpush1.msra.mxu0 0.0
  %1291 = vmatprep.subr.mxu0 0.0
  %1292 = vmatpush1.msra.mxu0 0.0
  %1293 = vmatprep.subr.mxu0 0.0
  %1294 = vmatpush1.msra.mxu0 0.0
  %1295 = vmatprep.subr.mxu0 0.0
  %1296 = vmatpush1.msra.mxu0 0.0
  %1297 = vmatprep.subr.mxu0 0.0
  %1298 = vmatpush1.msra.mxu0 0.0
  %1299 = vmatprep.subr.mxu0 0.0
  %1300 = vmatpush1.msra.mxu0 0.0
  %1301 = vmatprep.subr.mxu0 0.0
  %1302 = vmatpush1.msra.mxu0 0.0
  %1303 = vmatprep.subr.mxu0 0.0
  %1304 = vmatpush1.msra.mxu0 0.0
  %1305 = vmatprep.subr.mxu0 0.0
  %1306 = vmatpush1.msra.mxu0 0.0
  %1307 = vmatprep.subr.mxu0 0.0
  %1308 = vmatpush1.msra.mxu0 0.0
  %1309 = vmatprep.subr.mxu0 0.0
  %1310 = vmatpush1.msra.mxu0 0.0
  %1311 = vmatprep.subr.mxu0 0.0
  %1312 = vmatpush1.msra.mxu0 0.0
  %1313 = vmatprep.subr.mxu0 0.0
  %1314 = vmatpush1.msra.mxu0 0.0
  %1315 = vmatprep.subr.mxu0 0.0
  %1316 = vmatpush1.msra.mxu0 0.0
  %1317 = vmatprep.subr.mxu0 0.0
  %1318 = vmatpush1.msra.mxu0 0.0
  %1319 = vmatprep.subr.mxu0 0.0
  %1320 = vmatpush1.msra.mxu0 0.0
  %1321 = vmatprep.subr.mxu0 0.0
  %1322 = vmatpush1.msra.mxu0 0.0
  %1323 = vmatprep.subr.mxu0 0.0
  %1324 = vmatpush1.msra.mxu0 0.0
  %1325 = vmatprep.subr.mxu0 0.0
  %1326 = vmatpush1.msra.mxu0 0.0
  %1327 = vmatprep.subr.mxu0 0.0
  %1328 = vmatpush1.msra.mxu0 0.0
  %1329 = vmatprep.subr.mxu0 0.0
  %1330 = vmatpush1.msra.mxu0 0.0
  %1331 = vmatprep.subr.mxu0 0.0
  %1332 = vmatpush1.msra.mxu0 0.0
  %1333 = vmatprep.subr.mxu0 0.0
  %1334 = vmatpush1.msra.mxu0 0.0
  %1335 = vmatprep.subr.mxu0 0.0
  %1336 = vmatpush1.msra.mxu0 0.0
  %1337 = vmatprep.subr.mxu0 0.0
  %1338 = vmatpush1.msra.mxu0 0.0
  %1339 = vmatprep.mubr.f32.mxu0 0.0
  %1340 = vmatmul.mubr.f32.gmra.mrb[0].mxu0 %v1273
  %v1341 = vpop.f32.mrb[0].mxu0
  %v1342 = vadd.f32 0.0, %v1341
  %v1343 = vpop.f32.mrb[0].mxu0
  %1344 = vdwg.mxu0
  %v1345 = vadd.f32 %v342, %v1342
  %v1346 = vxor.u32 %v1345, 2147483648
  %v1347 = vmul.f32 %v1346, 1.442695
  %v1348 = vpow.pop %v1347
  %v1349 = vadd.f32 %v1348, 1.0
  %v1350 = vrcp.pop %v1349
  %v1351 = vmul.f32 1.0, %v1350
  %v1352 = vtanh.pop %v1345
  %v1353 = vmul.f32 %v1351, %v1163
  %1355 = vrot.lane.b32.xlu0 %v1352, 32
  %v1356 = vpop.permute.xlu0 %1355
  %v1358 = vmul.f32 %v1351, %v1356
  %1360 = vrot.lane.b32.xlu0 %v1358, 32
  %v1361 = vpop.permute.xlu0 %1360
  %v1363 = vadd.f32 %v1353, %v1361
  %v1364 = vtanh.pop %v1363
  %1366 = vrot.lane.b32.xlu0 %v1364, 32
  %v1367 = vpop.permute.xlu0 %1366
  %v1369 = vmul.f32 %v1351, %v1367
  %1371 = vrot.lane.b32.xlu0 %v1269, 64
  %v1372 = vpop.permute.xlu0 %1371
  %v1373 = vsel %vm376, %v1372, 0
  %1375 = vmatprep.subr.mxu0 0.0
  %1376 = vmatpush1.msra.mxu0 %v368
  %1377 = vmatprep.subr.mxu0 0.0
  %1378 = vmatpush1.msra.mxu0 %v369
  %1379 = vmatprep.subr.mxu0 0.0
  %1380 = vmatpush1.msra.mxu0 %v370
  %1381 = vmatprep.subr.mxu0 0.0
  %1382 = vmatpush1.msra.mxu0 %v371
  %1383 = vmatprep.subr.mxu0 0.0
  %1384 = vmatpush1.msra.mxu0 0.0
  %1385 = vmatprep.subr.mxu0 0.0
  %1386 = vmatpush1.msra.mxu0 0.0
  %1387 = vmatprep.subr.mxu0 0.0
  %1388 = vmatpush1.msra.mxu0 0.0
  %1389 = vmatprep.subr.mxu0 0.0
  %1390 = vmatpush1.msra.mxu0 0.0
  %1391 = vmatprep.subr.mxu0 0.0
  %1392 = vmatpush1.msra.mxu0 0.0
  %1393 = vmatprep.subr.mxu0 0.0
  %1394 = vmatpush1.msra.mxu0 0.0
  %1395 = vmatprep.subr.mxu0 0.0
  %1396 = vmatpush1.msra.mxu0 0.0
  %1397 = vmatprep.subr.mxu0 0.0
  %1398 = vmatpush1.msra.mxu0 0.0
  %1399 = vmatprep.subr.mxu0 0.0
  %1400 = vmatpush1.msra.mxu0 0.0
  %1401 = vmatprep.subr.mxu0 0.0
  %1402 = vmatpush1.msra.mxu0 0.0
  %1403 = vmatprep.subr.mxu0 0.0
  %1404 = vmatpush1.msra.mxu0 0.0
  %1405 = vmatprep.subr.mxu0 0.0
  %1406 = vmatpush1.msra.mxu0 0.0
  %1407 = vmatprep.subr.mxu0 0.0
  %1408 = vmatpush1.msra.mxu0 0.0
  %1409 = vmatprep.subr.mxu0 0.0
  %1410 = vmatpush1.msra.mxu0 0.0
  %1411 = vmatprep.subr.mxu0 0.0
  %1412 = vmatpush1.msra.mxu0 0.0
  %1413 = vmatprep.subr.mxu0 0.0
  %1414 = vmatpush1.msra.mxu0 0.0
  %1415 = vmatprep.subr.mxu0 0.0
  %1416 = vmatpush1.msra.mxu0 0.0
  %1417 = vmatprep.subr.mxu0 0.0
  %1418 = vmatpush1.msra.mxu0 0.0
  %1419 = vmatprep.subr.mxu0 0.0
  %1420 = vmatpush1.msra.mxu0 0.0
  %1421 = vmatprep.subr.mxu0 0.0
  %1422 = vmatpush1.msra.mxu0 0.0
  %1423 = vmatprep.subr.mxu0 0.0
  %1424 = vmatpush1.msra.mxu0 0.0
  %1425 = vmatprep.subr.mxu0 0.0
  %1426 = vmatpush1.msra.mxu0 0.0
  %1427 = vmatprep.subr.mxu0 0.0
  %1428 = vmatpush1.msra.mxu0 0.0
  %1429 = vmatprep.subr.mxu0 0.0
  %1430 = vmatpush1.msra.mxu0 0.0
  %1431 = vmatprep.subr.mxu0 0.0
  %1432 = vmatpush1.msra.mxu0 0.0
  %1433 = vmatprep.subr.mxu0 0.0
  %1434 = vmatpush1.msra.mxu0 0.0
  %1435 = vmatprep.subr.mxu0 0.0
  %1436 = vmatpush1.msra.mxu0 0.0
  %1437 = vmatprep.subr.mxu0 0.0
  %1438 = vmatpush1.msra.mxu0 0.0
  %1439 = vmatprep.mubr.f32.mxu0 0.0
  %1440 = vmatmul.mubr.f32.gmra.mrb[0].mxu0 %v1373
  %v1441 = vpop.f32.mrb[0].mxu0
  %v1442 = vadd.f32 0.0, %v1441
  %v1443 = vpop.f32.mrb[0].mxu0
  %1444 = vdwg.mxu0
  %v1445 = vadd.f32 %v352, %v1442
  %v1446 = vxor.u32 %v1445, 2147483648
  %v1447 = vmul.f32 %v1446, 1.442695
  %v1448 = vpow.pop %v1447
  %v1449 = vadd.f32 %v1448, 1.0
  %v1450 = vrcp.pop %v1449
  %v1451 = vmul.f32 1.0, %v1450
  %v1452 = vtanh.pop %v1445
  %v1453 = vmul.f32 %v1451, %v1263
  %1455 = vrot.lane.b32.xlu0 %v1452, 32
  %v1456 = vpop.permute.xlu0 %1455
  %v1458 = vmul.f32 %v1451, %v1456
  %1460 = vrot.lane.b32.xlu0 %v1458, 32
  %v1461 = vpop.permute.xlu0 %1460
  %v1463 = vadd.f32 %v1453, %v1461
  %v1464 = vtanh.pop %v1463
  %1466 = vrot.lane.b32.xlu0 %v1464, 32
  %v1467 = vpop.permute.xlu0 %1466
  %v1469 = vmul.f32 %v1451, %v1467
  %1471 = vrot.lane.b32.xlu0 %v1369, 64
  %v1472 = vpop.permute.xlu0 %1471
  %v1473 = vsel %vm376, %v1472, 0
  %1475 = vmatprep.subr.mxu0 0.0
  %1476 = vmatpush1.msra.mxu0 %v372
  %1477 = vmatprep.subr.mxu0 0.0
  %1478 = vmatpush1.msra.mxu0 %v373
  %1479 = vmatprep.subr.mxu0 0.0
  %1480 = vmatpush1.msra.mxu0 %v374
  %1481 = vmatprep.subr.mxu0 0.0
  %1482 = vmatpush1.msra.mxu0 %v375
  %1483 = vmatprep.subr.mxu0 0.0
  %1484 = vmatpush1.msra.mxu0 0.0
  %1485 = vmatprep.subr.mxu0 0.0
  %1486 = vmatpush1.msra.mxu0 0.0
  %1487 = vmatprep.subr.mxu0 0.0
  %1488 = vmatpush1.msra.mxu0 0.0
  %1489 = vmatprep.subr.mxu0 0.0
  %1490 = vmatpush1.msra.mxu0 0.0
  %1491 = vmatprep.subr.mxu0 0.0
  %1492 = vmatpush1.msra.mxu0 0.0
  %1493 = vmatprep.subr.mxu0 0.0
  %1494 = vmatpush1.msra.mxu0 0.0
  %1495 = vmatprep.subr.mxu0 0.0
  %1496 = vmatpush1.msra.mxu0 0.0
  %1497 = vmatprep.subr.mxu0 0.0
  %1498 = vmatpush1.msra.mxu0 0.0
  %1499 = vmatprep.subr.mxu0 0.0
  %1500 = vmatpush1.msra.mxu0 0.0
  %1501 = vmatprep.subr.mxu0 0.0
  %1502 = vmatpush1.msra.mxu0 0.0
  %1503 = vmatprep.subr.mxu0 0.0
  %1504 = vmatpush1.msra.mxu0 0.0
  %1505 = vmatprep.subr.mxu0 0.0
  %1506 = vmatpush1.msra.mxu0 0.0
  %1507 = vmatprep.subr.mxu0 0.0
  %1508 = vmatpush1.msra.mxu0 0.0
  %1509 = vmatprep.subr.mxu0 0.0
  %1510 = vmatpush1.msra.mxu0 0.0
  %1511 = vmatprep.subr.mxu0 0.0
  %1512 = vmatpush1.msra.mxu0 0.0
  %1513 = vmatprep.subr.mxu0 0.0
  %1514 = vmatpush1.msra.mxu0 0.0
  %1515 = vmatprep.subr.mxu0 0.0
  %1516 = vmatpush1.msra.mxu0 0.0
  %1517 = vmatprep.subr.mxu0 0.0
  %1518 = vmatpush1.msra.mxu0 0.0
  %1519 = vmatprep.subr.mxu0 0.0
  %1520 = vmatpush1.msra.mxu0 0.0
  %1521 = vmatprep.subr.mxu0 0.0
  %1522 = vmatpush1.msra.mxu0 0.0
  %1523 = vmatprep.subr.mxu0 0.0
  %1524 = vmatpush1.msra.mxu0 0.0
  %1525 = vmatprep.subr.mxu0 0.0
  %1526 = vmatpush1.msra.mxu0 0.0
  %1527 = vmatprep.subr.mxu0 0.0
  %1528 = vmatpush1.msra.mxu0 0.0
  %1529 = vmatprep.subr.mxu0 0.0
  %1530 = vmatpush1.msra.mxu0 0.0
  %1531 = vmatprep.subr.mxu0 0.0
  %1532 = vmatpush1.msra.mxu0 0.0
  %1533 = vmatprep.subr.mxu0 0.0
  %1534 = vmatpush1.msra.mxu0 0.0
  %1535 = vmatprep.subr.mxu0 0.0
  %1536 = vmatpush1.msra.mxu0 0.0
  %1537 = vmatprep.subr.mxu0 0.0
  %1538 = vmatpush1.msra.mxu0 0.0
  %1539 = vmatprep.mubr.f32.mxu0 0.0
  %1540 = vmatmul.mubr.f32.gmra.mrb[0].mxu0 %v1473
  %v1541 = vpop.f32.mrb[0].mxu0
  %v1542 = vadd.f32 0.0, %v1541
  %v1543 = vpop.f32.mrb[0].mxu0
  %1544 = vdwg.mxu0
  %v1545 = vadd.f32 %v336, %v1542
  %v1546 = vxor.u32 %v1545, 2147483648
  %v1547 = vmul.f32 %v1546, 1.442695
  %v1548 = vpow.pop %v1547
  %v1549 = vadd.f32 %v1548, 1.0
  %v1550 = vrcp.pop %v1549
  %v1551 = vmul.f32 1.0, %v1550
  %v1552 = vtanh.pop %v1545
  %v1553 = vmul.f32 %v1551, %v1363
  %1555 = vrot.lane.b32.xlu0 %v1552, 32
  %v1556 = vpop.permute.xlu0 %1555
  %v1558 = vmul.f32 %v1551, %v1556
  %1560 = vrot.lane.b32.xlu0 %v1558, 32
  %v1561 = vpop.permute.xlu0 %1560
  %v1563 = vadd.f32 %v1553, %v1561
  %v1564 = vtanh.pop %v1563
  %1566 = vrot.lane.b32.xlu0 %v1564, 32
  %v1567 = vpop.permute.xlu0 %1566
  %v1569 = vmul.f32 %v1551, %v1567
  %1571 = vrot.lane.b32.xlu0 %v1469, 64
  %v1572 = vpop.permute.xlu0 %1571
  %v1573 = vsel %vm376, %v1572, 0
  %1575 = vmatprep.subr.mxu0 0.0
  %1576 = vmatpush1.msra.mxu0 %v368
  %1577 = vmatprep.subr.mxu0 0.0
  %1578 = vmatpush1.msra.mxu0 %v369
  %1579 = vmatprep.subr.mxu0 0.0
  %1580 = vmatpush1.msra.mxu0 %v370
  %1581 = vmatprep.subr.mxu0 0.0
  %1582 = vmatpush1.msra.mxu0 %v371
  %1583 = vmatprep.subr.mxu0 0.0
  %1584 = vmatpush1.msra.mxu0 0.0
  %1585 = vmatprep.subr.mxu0 0.0
  %1586 = vmatpush1.msra.mxu0 0.0
  %1587 = vmatprep.subr.mxu0 0.0
  %1588 = vmatpush1.msra.mxu0 0.0
  %1589 = vmatprep.subr.mxu0 0.0
  %1590 = vmatpush1.msra.mxu0 0.0
  %1591 = vmatprep.subr.mxu0 0.0
  %1592 = vmatpush1.msra.mxu0 0.0
  %1593 = vmatprep.subr.mxu0 0.0
  %1594 = vmatpush1.msra.mxu0 0.0
  %1595 = vmatprep.subr.mxu0 0.0
  %1596 = vmatpush1.msra.mxu0 0.0
  %1597 = vmatprep.subr.mxu0 0.0
  %1598 = vmatpush1.msra.mxu0 0.0
  %1599 = vmatprep.subr.mxu0 0.0
  %1600 = vmatpush1.msra.mxu0 0.0
  %1601 = vmatprep.subr.mxu0 0.0
  %1602 = vmatpush1.msra.mxu0 0.0
  %1603 = vmatprep.subr.mxu0 0.0
  %1604 = vmatpush1.msra.mxu0 0.0
  %1605 = vmatprep.subr.mxu0 0.0
  %1606 = vmatpush1.msra.mxu0 0.0
  %1607 = vmatprep.subr.mxu0 0.0
  %1608 = vmatpush1.msra.mxu0 0.0
  %1609 = vmatprep.subr.mxu0 0.0
  %1610 = vmatpush1.msra.mxu0 0.0
  %1611 = vmatprep.subr.mxu0 0.0
  %1612 = vmatpush1.msra.mxu0 0.0
  %1613 = vmatprep.subr.mxu0 0.0
  %1614 = vmatpush1.msra.mxu0 0.0
  %1615 = vmatprep.subr.mxu0 0.0
  %1616 = vmatpush1.msra.mxu0 0.0
  %1617 = vmatprep.subr.mxu0 0.0
  %1618 = vmatpush1.msra.mxu0 0.0
  %1619 = vmatprep.subr.mxu0 0.0
  %1620 = vmatpush1.msra.mxu0 0.0
  %1621 = vmatprep.subr.mxu0 0.0
  %1622 = vmatpush1.msra.mxu0 0.0
  %1623 = vmatprep.subr.mxu0 0.0
  %1624 = vmatpush1.msra.mxu0 0.0
  %1625 = vmatprep.subr.mxu0 0.0
  %1626 = vmatpush1.msra.mxu0 0.0
  %1627 = vmatprep.subr.mxu0 0.0
  %1628 = vmatpush1.msra.mxu0 0.0
  %1629 = vmatprep.subr.mxu0 0.0
  %1630 = vmatpush1.msra.mxu0 0.0
  %1631 = vmatprep.subr.mxu0 0.0
  %1632 = vmatpush1.msra.mxu0 0.0
  %1633 = vmatprep.subr.mxu0 0.0
  %1634 = vmatpush1.msra.mxu0 0.0
  %1635 = vmatprep.subr.mxu0 0.0
  %1636 = vmatpush1.msra.mxu0 0.0
  %1637 = vmatprep.subr.mxu0 0.0
  %1638 = vmatpush1.msra.mxu0 0.0
  %1639 = vmatprep.mubr.f32.mxu0 0.0
  %1640 = vmatmul.mubr.f32.gmra.mrb[0].mxu0 %v1573
  %v1641 = vpop.f32.mrb[0].mxu0
  %v1642 = vadd.f32 0.0, %v1641
  %v1643 = vpop.f32.mrb[0].mxu0
  %1644 = vdwg.mxu0
  %v1645 = vadd.f32 %v358, %v1642
  %v1646 = vxor.u32 %v1645, 2147483648
  %v1647 = vmul.f32 %v1646, 1.442695
  %v1648 = vpow.pop %v1647
  %v1649 = vadd.f32 %v1648, 1.0
  %v1650 = vrcp.pop %v1649
  %v1651 = vmul.f32 1.0, %v1650
  %v1652 = vtanh.pop %v1645
  %v1653 = vmul.f32 %v1651, %v1463
  %1655 = vrot.lane.b32.xlu0 %v1652, 32
  %v1656 = vpop.permute.xlu0 %1655
  %v1658 = vmul.f32 %v1651, %v1656
  %1660 = vrot.lane.b32.xlu0 %v1658, 32
  %v1661 = vpop.permute.xlu0 %1660
  %v1663 = vadd.f32 %v1653, %v1661
  %v1664 = vtanh.pop %v1663
  %1666 = vrot.lane.b32.xlu0 %v1664, 32
  %v1667 = vpop.permute.xlu0 %1666
  %v1669 = vmul.f32 %v1651, %v1667
  %1671 = vrot.lane.b32.xlu0 %v1569, 64
  %v1672 = vpop.permute.xlu0 %1671
  %v1673 = vsel %vm376, %v1672, 0
  %1675 = vmatprep.subr.mxu0 0.0
  %1676 = vmatpush1.msra.mxu0 %v372
  %1677 = vmatprep.subr.mxu0 0.0
  %1678 = vmatpush1.msra.mxu0 %v373
  %1679 = vmatprep.subr.mxu0 0.0
  %1680 = vmatpush1.msra.mxu0 %v374
  %1681 = vmatprep.subr.mxu0 0.0
  %1682 = vmatpush1.msra.mxu0 %v375
  %1683 = vmatprep.subr.mxu0 0.0
  %1684 = vmatpush1.msra.mxu0 0.0
  %1685 = vmatprep.subr.mxu0 0.0
  %1686 = vmatpush1.msra.mxu0 0.0
  %1687 = vmatprep.subr.mxu0 0.0
  %1688 = vmatpush1.msra.mxu0 0.0
  %1689 = vmatprep.subr.mxu0 0.0
  %1690 = vmatpush1.msra.mxu0 0.0
  %1691 = vmatprep.subr.mxu0 0.0
  %1692 = vmatpush1.msra.mxu0 0.0
  %1693 = vmatprep.subr.mxu0 0.0
  %1694 = vmatpush1.msra.mxu0 0.0
  %1695 = vmatprep.subr.mxu0 0.0
  %1696 = vmatpush1.msra.mxu0 0.0
  %1697 = vmatprep.subr.mxu0 0.0
  %1698 = vmatpush1.msra.mxu0 0.0
  %1699 = vmatprep.subr.mxu0 0.0
  %1700 = vmatpush1.msra.mxu0 0.0
  %1701 = vmatprep.subr.mxu0 0.0
  %1702 = vmatpush1.msra.mxu0 0.0
  %1703 = vmatprep.subr.mxu0 0.0
  %1704 = vmatpush1.msra.mxu0 0.0
  %1705 = vmatprep.subr.mxu0 0.0
  %1706 = vmatpush1.msra.mxu0 0.0
  %1707 = vmatprep.subr.mxu0 0.0
  %1708 = vmatpush1.msra.mxu0 0.0
  %1709 = vmatprep.subr.mxu0 0.0
  %1710 = vmatpush1.msra.mxu0 0.0
  %1711 = vmatprep.subr.mxu0 0.0
  %1712 = vmatpush1.msra.mxu0 0.0
  %1713 = vmatprep.subr.mxu0 0.0
  %1714 = vmatpush1.msra.mxu0 0.0
  %1715 = vmatprep.subr.mxu0 0.0
  %1716 = vmatpush1.msra.mxu0 0.0
  %1717 = vmatprep.subr.mxu0 0.0
  %1718 = vmatpush1.msra.mxu0 0.0
  %1719 = vmatprep.subr.mxu0 0.0
  %1720 = vmatpush1.msra.mxu0 0.0
  %1721 = vmatprep.subr.mxu0 0.0
  %1722 = vmatpush1.msra.mxu0 0.0
  %1723 = vmatprep.subr.mxu0 0.0
  %1724 = vmatpush1.msra.mxu0 0.0
  %1725 = vmatprep.subr.mxu0 0.0
  %1726 = vmatpush1.msra.mxu0 0.0
  %1727 = vmatprep.subr.mxu0 0.0
  %1728 = vmatpush1.msra.mxu0 0.0
  %1729 = vmatprep.subr.mxu0 0.0
  %1730 = vmatpush1.msra.mxu0 0.0
  %1731 = vmatprep.subr.mxu0 0.0
  %1732 = vmatpush1.msra.mxu0 0.0
  %1733 = vmatprep.subr.mxu0 0.0
  %1734 = vmatpush1.msra.mxu0 0.0
  %1735 = vmatprep.subr.mxu0 0.0
  %1736 = vmatpush1.msra.mxu0 0.0
  %1737 = vmatprep.subr.mxu0 0.0
  %1738 = vmatpush1.msra.mxu0 0.0
  %1739 = vmatprep.mubr.f32.mxu0 0.0
  %1740 = vmatmul.mubr.f32.gmra.mrb[0].mxu0 %v1673
  %v1741 = vpop.f32.mrb[0].mxu0
  %v1742 = vadd.f32 0.0, %v1741
  %v1743 = vpop.f32.mrb[0].mxu0
  %1744 = vdwg.mxu0
  %v1745 = vadd.f32 %v330, %v1742
  %v1746 = vxor.u32 %v1745, 2147483648
  %v1747 = vmul.f32 %v1746, 1.442695
  %v1748 = vpow.pop %v1747
  %v1749 = vadd.f32 %v1748, 1.0
  %v1750 = vrcp.pop %v1749
  %v1751 = vmul.f32 1.0, %v1750
  %v1752 = vtanh.pop %v1745
  %v1753 = vmul.f32 %v1751, %v1563
  %1755 = vrot.lane.b32.xlu0 %v1752, 32
  %v1756 = vpop.permute.xlu0 %1755
  %v1758 = vmul.f32 %v1751, %v1756
  %1760 = vrot.lane.b32.xlu0 %v1758, 32
  %v1761 = vpop.permute.xlu0 %1760
  %v1763 = vadd.f32 %v1753, %v1761
  %v1764 = vtanh.pop %v1763
  %1766 = vrot.lane.b32.xlu0 %v1764, 32
  %v1767 = vpop.permute.xlu0 %1766
  %v1769 = vmul.f32 %v1751, %v1767
  %1771 = vrot.lane.b32.xlu0 %v1669, 64
  %v1772 = vpop.permute.xlu0 %1771
  %v1773 = vsel %vm376, %v1772, 0
  %1775 = vmatprep.subr.mxu0 0.0
  %1776 = vmatpush1.msra.mxu0 %v368
  %1777 = vmatprep.subr.mxu0 0.0
  %1778 = vmatpush1.msra.mxu0 %v369
  %1779 = vmatprep.subr.mxu0 0.0
  %1780 = vmatpush1.msra.mxu0 %v370
  %1781 = vmatprep.subr.mxu0 0.0
  %1782 = vmatpush1.msra.mxu0 %v371
  %1783 = vmatprep.subr.mxu0 0.0
  %1784 = vmatpush1.msra.mxu0 0.0
  %1785 = vmatprep.subr.mxu0 0.0
  %1786 = vmatpush1.msra.mxu0 0.0
  %1787 = vmatprep.subr.mxu0 0.0
  %1788 = vmatpush1.msra.mxu0 0.0
  %1789 = vmatprep.subr.mxu0 0.0
  %1790 = vmatpush1.msra.mxu0 0.0
  %1791 = vmatprep.subr.mxu0 0.0
  %1792 = vmatpush1.msra.mxu0 0.0
  %1793 = vmatprep.subr.mxu0 0.0
  %1794 = vmatpush1.msra.mxu0 0.0
  %1795 = vmatprep.subr.mxu0 0.0
  %1796 = vmatpush1.msra.mxu0 0.0
  %1797 = vmatprep.subr.mxu0 0.0
  %1798 = vmatpush1.msra.mxu0 0.0
  %1799 = vmatprep.subr.mxu0 0.0
  %1800 = vmatpush1.msra.mxu0 0.0
  %1801 = vmatprep.subr.mxu0 0.0
  %1802 = vmatpush1.msra.mxu0 0.0
  %1803 = vmatprep.subr.mxu0 0.0
  %1804 = vmatpush1.msra.mxu0 0.0
  %1805 = vmatprep.subr.mxu0 0.0
  %1806 = vmatpush1.msra.mxu0 0.0
  %1807 = vmatprep.subr.mxu0 0.0
  %1808 = vmatpush1.msra.mxu0 0.0
  %1809 = vmatprep.subr.mxu0 0.0
  %1810 = vmatpush1.msra.mxu0 0.0
  %1811 = vmatprep.subr.mxu0 0.0
  %1812 = vmatpush1.msra.mxu0 0.0
  %1813 = vmatprep.subr.mxu0 0.0
  %1814 = vmatpush1.msra.mxu0 0.0
  %1815 = vmatprep.subr.mxu0 0.0
  %1816 = vmatpush1.msra.mxu0 0.0
  %1817 = vmatprep.subr.mxu0 0.0
  %1818 = vmatpush1.msra.mxu0 0.0
  %1819 = vmatprep.subr.mxu0 0.0
  %1820 = vmatpush1.msra.mxu0 0.0
  %1821 = vmatprep.subr.mxu0 0.0
  %1822 = vmatpush1.msra.mxu0 0.0
  %1823 = vmatprep.subr.mxu0 0.0
  %1824 = vmatpush1.msra.mxu0 0.0
  %1825 = vmatprep.subr.mxu0 0.0
  %1826 = vmatpush1.msra.mxu0 0.0
  %1827 = vmatprep.subr.mxu0 0.0
  %1828 = vmatpush1.msra.mxu0 0.0
  %1829 = vmatprep.subr.mxu0 0.0
  %1830 = vmatpush1.msra.mxu0 0.0
  %1831 = vmatprep.subr.mxu0 0.0
  %1832 = vmatpush1.msra.mxu0 0.0
  %1833 = vmatprep.subr.mxu0 0.0
  %1834 = vmatpush1.msra.mxu0 0.0
  %1835 = vmatprep.subr.mxu0 0.0
  %1836 = vmatpush1.msra.mxu0 0.0
  %1837 = vmatprep.subr.mxu0 0.0
  %1838 = vmatpush1.msra.mxu0 0.0
  %1839 = vmatprep.mubr.f32.mxu0 0.0
  %1840 = vmatmul.mubr.f32.gmra.mrb[0].mxu0 %v1773
  %v1841 = vpop.f32.mrb[0].mxu0
  %v1842 = vadd.f32 0.0, %v1841
  %v1843 = vpop.f32.mrb[0].mxu0
  %1844 = vdwg.mxu0
  %v1845 = vadd.f32 %v364, %v1842
  %v1846 = vxor.u32 %v1845, 2147483648
  %v1847 = vmul.f32 %v1846, 1.442695
  %v1848 = vpow.pop %v1847
  %v1849 = vadd.f32 %v1848, 1.0
  %v1850 = vrcp.pop %v1849
  %v1851 = vmul.f32 1.0, %v1850
  %v1852 = vtanh.pop %v1845
  %v1853 = vmul.f32 %v1851, %v1663
  %1855 = vrot.lane.b32.xlu0 %v1852, 32
  %v1856 = vpop.permute.xlu0 %1855
  %v1858 = vmul.f32 %v1851, %v1856
  %1860 = vrot.lane.b32.xlu0 %v1858, 32
  %v1861 = vpop.permute.xlu0 %1860
  %v1863 = vadd.f32 %v1853, %v1861
  %v1864 = vtanh.pop %v1863
  %1866 = vrot.lane.b32.xlu0 %v1864, 32
  %v1867 = vpop.permute.xlu0 %1866
  %v1869 = vmul.f32 %v1851, %v1867
  %1871 = vrot.lane.b32.xlu0 %v1769, 64
  %v1872 = vpop.permute.xlu0 %1871
  %v1873 = vsel %vm376, %v1872, 0
  %1875 = vmatprep.subr.mxu0 0.0
  %1876 = vmatpush1.msra.mxu0 %v372
  %1877 = vmatprep.subr.mxu0 0.0
  %1878 = vmatpush1.msra.mxu0 %v373
  %1879 = vmatprep.subr.mxu0 0.0
  %1880 = vmatpush1.msra.mxu0 %v374
  %1881 = vmatprep.subr.mxu0 0.0
  %1882 = vmatpush1.msra.mxu0 %v375
  %1883 = vmatprep.subr.mxu0 0.0
  %1884 = vmatpush1.msra.mxu0 0.0
  %1885 = vmatprep.subr.mxu0 0.0
  %1886 = vmatpush1.msra.mxu0 0.0
  %1887 = vmatprep.subr.mxu0 0.0
  %1888 = vmatpush1.msra.mxu0 0.0
  %1889 = vmatprep.subr.mxu0 0.0
  %1890 = vmatpush1.msra.mxu0 0.0
  %1891 = vmatprep.subr.mxu0 0.0
  %1892 = vmatpush1.msra.mxu0 0.0
  %1893 = vmatprep.subr.mxu0 0.0
  %1894 = vmatpush1.msra.mxu0 0.0
  %1895 = vmatprep.subr.mxu0 0.0
  %1896 = vmatpush1.msra.mxu0 0.0
  %1897 = vmatprep.subr.mxu0 0.0
  %1898 = vmatpush1.msra.mxu0 0.0
  %1899 = vmatprep.subr.mxu0 0.0
  %1900 = vmatpush1.msra.mxu0 0.0
  %1901 = vmatprep.subr.mxu0 0.0
  %1902 = vmatpush1.msra.mxu0 0.0
  %1903 = vmatprep.subr.mxu0 0.0
  %1904 = vmatpush1.msra.mxu0 0.0
  %1905 = vmatprep.subr.mxu0 0.0
  %1906 = vmatpush1.msra.mxu0 0.0
  %1907 = vmatprep.subr.mxu0 0.0
  %1908 = vmatpush1.msra.mxu0 0.0
  %1909 = vmatprep.subr.mxu0 0.0
  %1910 = vmatpush1.msra.mxu0 0.0
  %1911 = vmatprep.subr.mxu0 0.0
  %1912 = vmatpush1.msra.mxu0 0.0
  %1913 = vmatprep.subr.mxu0 0.0
  %1914 = vmatpush1.msra.mxu0 0.0
  %1915 = vmatprep.subr.mxu0 0.0
  %1916 = vmatpush1.msra.mxu0 0.0
  %1917 = vmatprep.subr.mxu0 0.0
  %1918 = vmatpush1.msra.mxu0 0.0
  %1919 = vmatprep.subr.mxu0 0.0
  %1920 = vmatpush1.msra.mxu0 0.0
  %1921 = vmatprep.subr.mxu0 0.0
  %1922 = vmatpush1.msra.mxu0 0.0
  %1923 = vmatprep.subr.mxu0 0.0
  %1924 = vmatpush1.msra.mxu0 0.0
  %1925 = vmatprep.subr.mxu0 0.0
  %1926 = vmatpush1.msra.mxu0 0.0
  %1927 = vmatprep.subr.mxu0 0.0
  %1928 = vmatpush1.msra.mxu0 0.0
  %1929 = vmatprep.subr.mxu0 0.0
  %1930 = vmatpush1.msra.mxu0 0.0
  %1931 = vmatprep.subr.mxu0 0.0
  %1932 = vmatpush1.msra.mxu0 0.0
  %1933 = vmatprep.subr.mxu0 0.0
  %1934 = vmatpush1.msra.mxu0 0.0
  %1935 = vmatprep.subr.mxu0 0.0
  %1936 = vmatpush1.msra.mxu0 0.0
  %1937 = vmatprep.subr.mxu0 0.0
  %1938 = vmatpush1.msra.mxu0 0.0
  %1939 = vmatprep.mubr.f32.mxu0 0.0
  %1940 = vmatmul.mubr.f32.gmra.mrb[0].mxu0 %v1873
  %v1941 = vpop.f32.mrb[0].mxu0
  %v1942 = vadd.f32 0.0, %v1941
  %v1943 = vpop.f32.mrb[0].mxu0
  %1944 = vdwg.mxu0
  %v1945 = vadd.f32 %v324, %v1942
  %v1946 = vxor.u32 %v1945, 2147483648
  %v1947 = vmul.f32 %v1946, 1.442695
  %v1948 = vpow.pop %v1947
  %v1949 = vadd.f32 %v1948, 1.0
  %v1950 = vrcp.pop %v1949
  %v1951 = vmul.f32 1.0, %v1950
  %v1952 = vtanh.pop %v1945
  %v1953 = vmul.f32 %v1951, %v1763
  %1955 = vrot.lane.b32.xlu0 %v1952, 32
  %v1956 = vpop.permute.xlu0 %1955
  %v1958 = vmul.f32 %v1951, %v1956
  %1960 = vrot.lane.b32.xlu0 %v1958, 32
  %v1961 = vpop.permute.xlu0 %1960
  %v1963 = vadd.f32 %v1953, %v1961
  %v1964 = vtanh.pop %v1963
  %1966 = vrot.lane.b32.xlu0 %v1964, 32
  %v1967 = vpop.permute.xlu0 %1966
  %v1969 = vmul.f32 %v1951, %v1967
  %v1970 = vld [vmem:[%s6] sm:$0xff]
  %v1971 = vld [vmem:[%s6 + $0x8] sm:$0xff]
  %v1972 = vld [vmem:[%s6 + $0x10] sm:$0xff]
  %v1973 = vld [vmem:[%s6 + $0x18] sm:$0xff]
  %v1974 = vld [vmem:[%s6 + $0x20] sm:$0xff]
  %v1975 = vld [vmem:[%s6 + $0x28] sm:$0xff]
  %v1976 = vld [vmem:[%s6 + $0x30] sm:$0xff]
  %v1977 = vld [vmem:[%s6 + $0x38] sm:$0xff]
  %s1978 = scalar_lea.vmem %s6, 64
  %v1979 = vld [vmem:[%s1978] sm:$0xff]
  %v1980 = vld [vmem:[%s1978 + $0x8] sm:$0xff]
  %v1981 = vld [vmem:[%s1978 + $0x10] sm:$0xff]
  %v1982 = vld [vmem:[%s1978 + $0x18] sm:$0xff]
  %v1983 = vld [vmem:[%s1978 + $0x20] sm:$0xff]
  %v1984 = vld [vmem:[%s1978 + $0x28] sm:$0xff]
  %v1985 = vld [vmem:[%s1978 + $0x30] sm:$0xff]
  %v1986 = vld [vmem:[%s1978 + $0x38] sm:$0xff]
  %1988 = vrot.lane.b32.xlu0 %v1969, 64
  %v1989 = vpop.permute.xlu0 %1988
  %v1990 = vsel %vm376, %v1989, 0
  %1992 = vmatprep.subr.mxu0 %v1980
  %1993 = vmatpush1.msra.mxu0 %v1979
  %1994 = vmatprep.subr.mxu0 %v1982
  %1995 = vmatpush1.msra.mxu0 %v1981
  %1996 = vmatprep.subr.mxu0 %v1984
  %1997 = vmatpush1.msra.mxu0 %v1983
  %1998 = vmatprep.subr.mxu0 %v1986
  %1999 = vmatpush1.msra.mxu0 %v1985
  %2000 = vmatprep.subr.mxu0 0.0
  %2001 = vmatpush1.msra.mxu0 0.0
  %2002 = vmatprep.subr.mxu0 0.0
  %2003 = vmatpush1.msra.mxu0 0.0
  %2004 = vmatprep.subr.mxu0 0.0
  %2005 = vmatpush1.msra.mxu0 0.0
  %2006 = vmatprep.subr.mxu0 0.0
  %2007 = vmatpush1.msra.mxu0 0.0
  %2008 = vmatprep.subr.mxu0 0.0
  %2009 = vmatpush1.msra.mxu0 0.0
  %2010 = vmatprep.subr.mxu0 0.0
  %2011 = vmatpush1.msra.mxu0 0.0
  %2012 = vmatprep.subr.mxu0 0.0
  %2013 = vmatpush1.msra.mxu0 0.0
  %2014 = vmatprep.subr.mxu0 0.0
  %2015 = vmatpush1.msra.mxu0 0.0
  %2016 = vmatprep.subr.mxu0 0.0
  %2017 = vmatpush1.msra.mxu0 0.0
  %2018 = vmatprep.subr.mxu0 0.0
  %2019 = vmatpush1.msra.mxu0 0.0
  %2020 = vmatprep.subr.mxu0 0.0
  %2021 = vmatpush1.msra.mxu0 0.0
  %2022 = vmatprep.subr.mxu0 0.0
  %2023 = vmatpush1.msra.mxu0 0.0
  %2024 = vmatprep.subr.mxu0 0.0
  %2025 = vmatpush1.msra.mxu0 0.0
  %2026 = vmatprep.subr.mxu0 0.0
  %2027 = vmatpush1.msra.mxu0 0.0
  %2028 = vmatprep.subr.mxu0 0.0
  %2029 = vmatpush1.msra.mxu0 0.0
  %2030 = vmatprep.subr.mxu0 0.0
  %2031 = vmatpush1.msra.mxu0 0.0
  %2032 = vmatprep.subr.mxu0 0.0
  %2033 = vmatpush1.msra.mxu0 0.0
  %2034 = vmatprep.subr.mxu0 0.0
  %2035 = vmatpush1.msra.mxu0 0.0
  %2036 = vmatprep.subr.mxu0 0.0
  %2037 = vmatpush1.msra.mxu0 0.0
  %2038 = vmatprep.subr.mxu0 0.0
  %2039 = vmatpush1.msra.mxu0 0.0
  %2040 = vmatprep.subr.mxu0 0.0
  %2041 = vmatpush1.msra.mxu0 0.0
  %2042 = vmatprep.subr.mxu0 0.0
  %2043 = vmatpush1.msra.mxu0 0.0
  %2044 = vmatprep.subr.mxu0 0.0
  %2045 = vmatpush1.msra.mxu0 0.0
  %2046 = vmatprep.subr.mxu0 0.0
  %2047 = vmatpush1.msra.mxu0 0.0
  %2048 = vmatprep.subr.mxu0 0.0
  %2049 = vmatpush1.msra.mxu0 0.0
  %2050 = vmatprep.subr.mxu0 0.0
  %2051 = vmatpush1.msra.mxu0 0.0
  %2052 = vmatprep.subr.mxu0 0.0
  %2053 = vmatpush1.msra.mxu0 0.0
  %2054 = vmatprep.subr.mxu0 0.0
  %2055 = vmatpush1.msra.mxu0 0.0
  %2056 = vmatprep.mubr.f32.mxu0 0.0
  %2057 = vmatmul.mubr.f32.gmra.mrb[0].mxu0 %v1990
  %v2058 = vpop.f32.mrb[0].mxu0
  %v2059 = vadd.f32 0.0, %v2058
  %v2060 = vpop.f32.mrb[0].mxu0
  %v2061 = vadd.f32 0.0, %v2060
  %2062 = vmatprep.mubr.f32.mxu0 0.0
  %2063 = vmatmul.mubr.f32.gmra.mrb[0].mxu0 %v1873
  %v2064 = vpop.f32.mrb[0].mxu0
  %v2065 = vadd.f32 0.0, %v2064
  %v2066 = vpop.f32.mrb[0].mxu0
  %v2067 = vadd.f32 0.0, %v2066
  %2068 = vmatprep.mubr.f32.mxu0 0.0
  %2069 = vmatmul.mubr.f32.gmra.mrb[0].mxu0 %v1673
  %v2070 = vpop.f32.mrb[0].mxu0
  %v2071 = vadd.f32 0.0, %v2070
  %v2072 = vpop.f32.mrb[0].mxu0
  %v2073 = vadd.f32 0.0, %v2072
  %2074 = vmatprep.mubr.f32.mxu0 0.0
  %2075 = vmatmul.mubr.f32.gmra.mrb[0].mxu0 %v1473
  %v2076 = vpop.f32.mrb[0].mxu0
  %v2077 = vadd.f32 0.0, %v2076
  %v2078 = vpop.f32.mrb[0].mxu0
  %v2079 = vadd.f32 0.0, %v2078
  %2080 = vmatprep.mubr.f32.mxu0 0.0
  %2081 = vmatmul.mubr.f32.gmra.mrb[0].mxu0 %v1273
  %v2082 = vpop.f32.mrb[0].mxu0
  %v2083 = vadd.f32 0.0, %v2082
  %v2084 = vpop.f32.mrb[0].mxu0
  %v2085 = vadd.f32 0.0, %v2084
  %2086 = vmatprep.mubr.f32.mxu0 0.0
  %2087 = vmatmul.mubr.f32.gmra.mrb[0].mxu0 %v1073
  %v2088 = vpop.f32.mrb[0].mxu0
  %v2089 = vadd.f32 0.0, %v2088
  %v2090 = vpop.f32.mrb[0].mxu0
  %v2091 = vadd.f32 0.0, %v2090
  %2092 = vmatprep.mubr.f32.mxu0 0.0
  %2093 = vmatmul.mubr.f32.gmra.mrb[0].mxu0 %v873
  %v2094 = vpop.f32.mrb[0].mxu0
  %v2095 = vadd.f32 0.0, %v2094
  %v2096 = vpop.f32.mrb[0].mxu0
  %v2097 = vadd.f32 0.0, %v2096
  %2098 = vmatprep.mubr.f32.mxu0 0.0
  %2099 = vmatmul.mubr.f32.gmra.mrb[0].mxu0 %v673
  %v2100 = vpop.f32.mrb[0].mxu0
  %v2101 = vadd.f32 0.0, %v2100
  %v2102 = vpop.f32.mrb[0].mxu0
  %v2103 = vadd.f32 0.0, %v2102
  %2104 = vdwg.mxu0
  %2106 = vrot.lane.b32.xlu0 %v1869, 64
  %v2107 = vpop.permute.xlu0 %2106
  %v2108 = vsel %vm376, %v2107, 0
  %2110 = vmatprep.subr.mxu0 %v1971
  %2111 = vmatpush1.msra.mxu0 %v1970
  %2112 = vmatprep.subr.mxu0 %v1973
  %2113 = vmatpush1.msra.mxu0 %v1972
  %2114 = vmatprep.subr.mxu0 %v1975
  %2115 = vmatpush1.msra.mxu0 %v1974
  %2116 = vmatprep.subr.mxu0 %v1977
  %2117 = vmatpush1.msra.mxu0 %v1976
  %2118 = vmatprep.subr.mxu0 0.0
  %2119 = vmatpush1.msra.mxu0 0.0
  %2120 = vmatprep.subr.mxu0 0.0
  %2121 = vmatpush1.msra.mxu0 0.0
  %2122 = vmatprep.subr.mxu0 0.0
  %2123 = vmatpush1.msra.mxu0 0.0
  %2124 = vmatprep.subr.mxu0 0.0
  %2125 = vmatpush1.msra.mxu0 0.0
  %2126 = vmatprep.subr.mxu0 0.0
  %2127 = vmatpush1.msra.mxu0 0.0
  %2128 = vmatprep.subr.mxu0 0.0
  %2129 = vmatpush1.msra.mxu0 0.0
  %2130 = vmatprep.subr.mxu0 0.0
  %2131 = vmatpush1.msra.mxu0 0.0
  %2132 = vmatprep.subr.mxu0 0.0
  %2133 = vmatpush1.msra.mxu0 0.0
  %2134 = vmatprep.subr.mxu0 0.0
  %2135 = vmatpush1.msra.mxu0 0.0
  %2136 = vmatprep.subr.mxu0 0.0
  %2137 = vmatpush1.msra.mxu0 0.0
  %2138 = vmatprep.subr.mxu0 0.0
  %2139 = vmatpush1.msra.mxu0 0.0
  %2140 = vmatprep.subr.mxu0 0.0
  %2141 = vmatpush1.msra.mxu0 0.0
  %2142 = vmatprep.subr.mxu0 0.0
  %2143 = vmatpush1.msra.mxu0 0.0
  %2144 = vmatprep.subr.mxu0 0.0
  %2145 = vmatpush1.msra.mxu0 0.0
  %2146 = vmatprep.subr.mxu0 0.0
  %2147 = vmatpush1.msra.mxu0 0.0
  %2148 = vmatprep.subr.mxu0 0.0
  %2149 = vmatpush1.msra.mxu0 0.0
  %2150 = vmatprep.subr.mxu0 0.0
  %2151 = vmatpush1.msra.mxu0 0.0
  %2152 = vmatprep.subr.mxu0 0.0
  %2153 = vmatpush1.msra.mxu0 0.0
  %2154 = vmatprep.subr.mxu0 0.0
  %2155 = vmatpush1.msra.mxu0 0.0
  %2156 = vmatprep.subr.mxu0 0.0
  %2157 = vmatpush1.msra.mxu0 0.0
  %2158 = vmatprep.subr.mxu0 0.0
  %2159 = vmatpush1.msra.mxu0 0.0
  %2160 = vmatprep.subr.mxu0 0.0
  %2161 = vmatpush1.msra.mxu0 0.0
  %2162 = vmatprep.subr.mxu0 0.0
  %2163 = vmatpush1.msra.mxu0 0.0
  %2164 = vmatprep.subr.mxu0 0.0
  %2165 = vmatpush1.msra.mxu0 0.0
  %2166 = vmatprep.subr.mxu0 0.0
  %2167 = vmatpush1.msra.mxu0 0.0
  %2168 = vmatprep.subr.mxu0 0.0
  %2169 = vmatpush1.msra.mxu0 0.0
  %2170 = vmatprep.subr.mxu0 0.0
  %2171 = vmatpush1.msra.mxu0 0.0
  %2172 = vmatprep.subr.mxu0 0.0
  %2173 = vmatpush1.msra.mxu0 0.0
  %2174 = vmatprep.mubr.f32.mxu0 0.0
  %2175 = vmatmul.mubr.f32.gmra.mrb[0].mxu0 %v573
  %v2176 = vpop.f32.mrb[0].mxu0
  %v2177 = vadd.f32 %v2059, %v2176
  %v2178 = vpop.f32.mrb[0].mxu0
  %v2179 = vadd.f32 %v2061, %v2178
  %2180 = vmatprep.mubr.f32.mxu0 0.0
  %2181 = vmatmul.mubr.f32.gmra.mrb[0].mxu0 %v773
  %v2182 = vpop.f32.mrb[0].mxu0
  %v2183 = vadd.f32 %v2065, %v2182
  %v2184 = vpop.f32.mrb[0].mxu0
  %v2185 = vadd.f32 %v2067, %v2184
  %2186 = vmatprep.mubr.f32.mxu0 0.0
  %2187 = vmatmul.mubr.f32.gmra.mrb[0].mxu0 %v973
  %v2188 = vpop.f32.mrb[0].mxu0
  %v2189 = vadd.f32 %v2071, %v2188
  %v2190 = vpop.f32.mrb[0].mxu0
  %v2191 = vadd.f32 %v2073, %v2190
  %2192 = vmatprep.mubr.f32.mxu0 0.0
  %2193 = vmatmul.mubr.f32.gmra.mrb[0].mxu0 %v1173
  %v2194 = vpop.f32.mrb[0].mxu0
  %v2195 = vadd.f32 %v2077, %v2194
  %v2196 = vpop.f32.mrb[0].mxu0
  %v2197 = vadd.f32 %v2079, %v2196
  %2198 = vmatprep.mubr.f32.mxu0 0.0
  %2199 = vmatmul.mubr.f32.gmra.mrb[0].mxu0 %v1373
  %v2200 = vpop.f32.mrb[0].mxu0
  %v2201 = vadd.f32 %v2083, %v2200
  %v2202 = vpop.f32.mrb[0].mxu0
  %v2203 = vadd.f32 %v2085, %v2202
  %2204 = vmatprep.mubr.f32.mxu0 0.0
  %2205 = vmatmul.mubr.f32.gmra.mrb[0].mxu0 %v1573
  %v2206 = vpop.f32.mrb[0].mxu0
  %v2207 = vadd.f32 %v2089, %v2206
  %v2208 = vpop.f32.mrb[0].mxu0
  %v2209 = vadd.f32 %v2091, %v2208
  %2210 = vmatprep.mubr.f32.mxu0 0.0
  %2211 = vmatmul.mubr.f32.gmra.mrb[0].mxu0 %v1773
  %v2212 = vpop.f32.mrb[0].mxu0
  %v2213 = vadd.f32 %v2095, %v2212
  %v2214 = vpop.f32.mrb[0].mxu0
  %v2215 = vadd.f32 %v2097, %v2214
  %2216 = vmatprep.mubr.f32.mxu0 0.0
  %2217 = vmatmul.mubr.f32.gmra.mrb[0].mxu0 %v2108
  %v2218 = vpop.f32.mrb[0].mxu0
  %v2219 = vadd.f32 %v2101, %v2218
  %v2220 = vpop.f32.mrb[0].mxu0
  %v2221 = vadd.f32 %v2103, %v2220
  %2222 = vdwg.mxu0
  %v2223 = vld [vmem:[%s9] sm:$0x3]
  %v2225 = vlaneseq
  %v2226 = vshrl.u32 %v2225, 7
  %v2227 = vsub.s32 0, %v2226
  %v2228 = vrot.slane %v2223, %v2227
  %v2229 = vlaneseq
  %v2230 = vshrl.u32 %v2229, 7
  %v2231 = vsub.s32 1, %v2230
  %v2232 = vrot.slane %v2223, %v2231
  %v2235 = vadd.f32 %v2177, %v2228
  %v2236 = vadd.f32 %v2179, %v2232
  %v2237 = vadd.f32 %v2183, %v2228
  %v2238 = vadd.f32 %v2185, %v2232
  %v2239 = vadd.f32 %v2189, %v2228
  %v2240 = vadd.f32 %v2191, %v2232
  %v2241 = vadd.f32 %v2195, %v2228
  %v2242 = vadd.f32 %v2197, %v2232
  %v2243 = vadd.f32 %v2201, %v2228
  %v2244 = vadd.f32 %v2203, %v2232
  %v2245 = vadd.f32 %v2207, %v2228
  %v2246 = vadd.f32 %v2209, %v2232
  %v2247 = vadd.f32 %v2213, %v2228
  %v2248 = vadd.f32 %v2215, %v2232
  %v2249 = vadd.f32 %v2219, %v2228
  %v2250 = vadd.f32 %v2221, %v2232
  %v2251 = vld [vmem:[%s7] sm:$0xff]
  %v2252 = vld [vmem:[%s7 + $0x8] sm:$0xff]
  %v2253 = vld [vmem:[%s7 + $0x10] sm:$0xff]
  %v2254 = vld [vmem:[%s7 + $0x18] sm:$0xff]
  %v2255 = vld [vmem:[%s8] sm:$0xff]
  %v2256 = vld [vmem:[%s8 + $0x8] sm:$0xff]
  %v2257 = vld [vmem:[%s8 + $0x10] sm:$0xff]
  %v2258 = vld [vmem:[%s8 + $0x18] sm:$0xff]
  %2259 = vmatprep.subr.mxu0 0.0
  %2260 = vmatpush1.msra.mxu0 %v2251
  %2261 = vmatprep.subr.mxu0 0.0
  %2262 = vmatpush1.msra.mxu0 %v2252
  %2263 = vmatprep.subr.mxu0 0.0
  %2264 = vmatpush1.msra.mxu0 %v2253
  %2265 = vmatprep.subr.mxu0 0.0
  %2266 = vmatpush1.msra.mxu0 %v2254
  %2267 = vmatprep.subr.mxu0 0.0
  %2268 = vmatpush1.msra.mxu0 0.0
  %2269 = vmatprep.subr.mxu0 0.0
  %2270 = vmatpush1.msra.mxu0 0.0
  %2271 = vmatprep.subr.mxu0 0.0
  %2272 = vmatpush1.msra.mxu0 0.0
  %2273 = vmatprep.subr.mxu0 0.0
  %2274 = vmatpush1.msra.mxu0 0.0
  %2275 = vmatprep.subr.mxu0 0.0
  %2276 = vmatpush1.msra.mxu0 0.0
  %2277 = vmatprep.subr.mxu0 0.0
  %2278 = vmatpush1.msra.mxu0 0.0
  %2279 = vmatprep.subr.mxu0 0.0
  %2280 = vmatpush1.msra.mxu0 0.0
  %2281 = vmatprep.subr.mxu0 0.0
  %2282 = vmatpush1.msra.mxu0 0.0
  %2283 = vmatprep.subr.mxu0 0.0
  %2284 = vmatpush1.msra.mxu0 0.0
  %2285 = vmatprep.subr.mxu0 0.0
  %2286 = vmatpush1.msra.mxu0 0.0
  %2287 = vmatprep.subr.mxu0 0.0
  %2288 = vmatpush1.msra.mxu0 0.0
  %2289 = vmatprep.subr.mxu0 0.0
  %2290 = vmatpush1.msra.mxu0 0.0
  %2291 = vmatprep.subr.mxu0 0.0
  %2292 = vmatpush1.msra.mxu0 0.0
  %2293 = vmatprep.subr.mxu0 0.0
  %2294 = vmatpush1.msra.mxu0 0.0
  %2295 = vmatprep.subr.mxu0 0.0
  %2296 = vmatpush1.msra.mxu0 0.0
  %2297 = vmatprep.subr.mxu0 0.0
  %2298 = vmatpush1.msra.mxu0 0.0
  %2299 = vmatprep.subr.mxu0 0.0
  %2300 = vmatpush1.msra.mxu0 0.0
  %2301 = vmatprep.subr.mxu0 0.0
  %2302 = vmatpush1.msra.mxu0 0.0
  %2303 = vmatprep.subr.mxu0 0.0
  %2304 = vmatpush1.msra.mxu0 0.0
  %2305 = vmatprep.subr.mxu0 0.0
  %2306 = vmatpush1.msra.mxu0 0.0
  %2307 = vmatprep.subr.mxu0 0.0
  %2308 = vmatpush1.msra.mxu0 0.0
  %2309 = vmatprep.subr.mxu0 0.0
  %2310 = vmatpush1.msra.mxu0 0.0
  %2311 = vmatprep.subr.mxu0 0.0
  %2312 = vmatpush1.msra.mxu0 0.0
  %2313 = vmatprep.subr.mxu0 0.0
  %2314 = vmatpush1.msra.mxu0 0.0
  %2315 = vmatprep.subr.mxu0 0.0
  %2316 = vmatpush1.msra.mxu0 0.0
  %2317 = vmatprep.subr.mxu0 0.0
  %2318 = vmatpush1.msra.mxu0 0.0
  %2319 = vmatprep.subr.mxu0 0.0
  %2320 = vmatpush1.msra.mxu0 0.0
  %2321 = vmatprep.subr.mxu0 0.0
  %2322 = vmatpush1.msra.mxu0 0.0
  %2323 = vmatprep.mubr.f32.mxu0 0.0
  %2324 = vmatmul.mubr.f32.gmra.mrb[0].mxu0 %v378
  %v2325 = vpop.f32.mrb[0].mxu0
  %v2326 = vadd.f32 0.0, %v2325
  %v2327 = vpop.f32.mrb[0].mxu0
  %2328 = vdwg.mxu0
  %v2329 = vadd.f32 %v2235, %v2326
  %v2330 = vxor.u32 %v2329, 2147483648
  %v2331 = vmul.f32 %v2330, 1.442695
  %v2332 = vpow.pop %v2331
  %v2333 = vadd.f32 %v2332, 1.0
  %v2334 = vrcp.pop %v2333
  %v2335 = vmul.f32 1.0, %v2334
  %v2336 = vtanh.pop %v2329
  %v2337 = vmul.f32 %v2335, 0.0
  %2339 = vrot.lane.b32.xlu0 %v2336, 32
  %v2340 = vpop.permute.xlu0 %2339
  %v2342 = vmul.f32 %v2335, %v2340
  %2344 = vrot.lane.b32.xlu0 %v2342, 32
  %v2345 = vpop.permute.xlu0 %2344
  %v2347 = vadd.f32 %v2337, %v2345
  %v2348 = vtanh.pop %v2347
  %2350 = vrot.lane.b32.xlu0 %v2348, 32
  %v2351 = vpop.permute.xlu0 %2350
  %v2353 = vmul.f32 %v2335, %v2351
  %2354 = vmatprep.subr.mxu0 0.0
  %2355 = vmatpush1.msra.mxu0 %v2255
  %2356 = vmatprep.subr.mxu0 0.0
  %2357 = vmatpush1.msra.mxu0 %v2256
  %2358 = vmatprep.subr.mxu0 0.0
  %2359 = vmatpush1.msra.mxu0 %v2257
  %2360 = vmatprep.subr.mxu0 0.0
  %2361 = vmatpush1.msra.mxu0 %v2258
  %2362 = vmatprep.subr.mxu0 0.0
  %2363 = vmatpush1.msra.mxu0 0.0
  %2364 = vmatprep.subr.mxu0 0.0
  %2365 = vmatpush1.msra.mxu0 0.0
  %2366 = vmatprep.subr.mxu0 0.0
  %2367 = vmatpush1.msra.mxu0 0.0
  %2368 = vmatprep.subr.mxu0 0.0
  %2369 = vmatpush1.msra.mxu0 0.0
  %2370 = vmatprep.subr.mxu0 0.0
  %2371 = vmatpush1.msra.mxu0 0.0
  %2372 = vmatprep.subr.mxu0 0.0
  %2373 = vmatpush1.msra.mxu0 0.0
  %2374 = vmatprep.subr.mxu0 0.0
  %2375 = vmatpush1.msra.mxu0 0.0
  %2376 = vmatprep.subr.mxu0 0.0
  %2377 = vmatpush1.msra.mxu0 0.0
  %2378 = vmatprep.subr.mxu0 0.0
  %2379 = vmatpush1.msra.mxu0 0.0
  %2380 = vmatprep.subr.mxu0 0.0
  %2381 = vmatpush1.msra.mxu0 0.0
  %2382 = vmatprep.subr.mxu0 0.0
  %2383 = vmatpush1.msra.mxu0 0.0
  %2384 = vmatprep.subr.mxu0 0.0
  %2385 = vmatpush1.msra.mxu0 0.0
  %2386 = vmatprep.subr.mxu0 0.0
  %2387 = vmatpush1.msra.mxu0 0.0
  %2388 = vmatprep.subr.mxu0 0.0
  %2389 = vmatpush1.msra.mxu0 0.0
  %2390 = vmatprep.subr.mxu0 0.0
  %2391 = vmatpush1.msra.mxu0 0.0
  %2392 = vmatprep.subr.mxu0 0.0
  %2393 = vmatpush1.msra.mxu0 0.0
  %2394 = vmatprep.subr.mxu0 0.0
  %2395 = vmatpush1.msra.mxu0 0.0
  %2396 = vmatprep.subr.mxu0 0.0
  %2397 = vmatpush1.msra.mxu0 0.0
  %2398 = vmatprep.subr.mxu0 0.0
  %2399 = vmatpush1.msra.mxu0 0.0
  %2400 = vmatprep.subr.mxu0 0.0
  %2401 = vmatpush1.msra.mxu0 0.0
  %2402 = vmatprep.subr.mxu0 0.0
  %2403 = vmatpush1.msra.mxu0 0.0
  %2404 = vmatprep.subr.mxu0 0.0
  %2405 = vmatpush1.msra.mxu0 0.0
  %2406 = vmatprep.subr.mxu0 0.0
  %2407 = vmatpush1.msra.mxu0 0.0
  %2408 = vmatprep.subr.mxu0 0.0
  %2409 = vmatpush1.msra.mxu0 0.0
  %2410 = vmatprep.subr.mxu0 0.0
  %2411 = vmatpush1.msra.mxu0 0.0
  %2412 = vmatprep.subr.mxu0 0.0
  %2413 = vmatpush1.msra.mxu0 0.0
  %2414 = vmatprep.subr.mxu0 0.0
  %2415 = vmatpush1.msra.mxu0 0.0
  %2416 = vmatprep.subr.mxu0 0.0
  %2417 = vmatpush1.msra.mxu0 0.0
  %2418 = vmatprep.mubr.f32.mxu0 0.0
  %2419 = vmatmul.mubr.f32.gmra.mrb[0].mxu0 %v378
  %v2420 = vpop.f32.mrb[0].mxu0
  %v2421 = vadd.f32 0.0, %v2420
  %v2422 = vpop.f32.mrb[0].mxu0
  %2423 = vdwg.mxu0
  %v2424 = vadd.f32 %v2250, %v2421
  %v2425 = vxor.u32 %v2424, 2147483648
  %v2426 = vmul.f32 %v2425, 1.442695
  %v2427 = vpow.pop %v2426
  %v2428 = vadd.f32 %v2427, 1.0
  %v2429 = vrcp.pop %v2428
  %v2430 = vmul.f32 1.0, %v2429
  %v2431 = vtanh.pop %v2424
  %v2432 = vmul.f32 %v2430, 0.0
  %2434 = vrot.lane.b32.xlu0 %v2431, 32
  %v2435 = vpop.permute.xlu0 %2434
  %v2437 = vmul.f32 %v2430, %v2435
  %2439 = vrot.lane.b32.xlu0 %v2437, 32
  %v2440 = vpop.permute.xlu0 %2439
  %v2442 = vadd.f32 %v2432, %v2440
  %v2443 = vtanh.pop %v2442
  %2445 = vrot.lane.b32.xlu0 %v2443, 32
  %v2446 = vpop.permute.xlu0 %2445
  %v2448 = vmul.f32 %v2430, %v2446
  %2450 = vrot.lane.b32.xlu0 %v2353, 64
  %v2451 = vpop.permute.xlu0 %2450
  %v2452 = vsel %vm376, %v2451, 0
  %2454 = vmatprep.subr.mxu0 0.0
  %2455 = vmatpush1.msra.mxu0 %v2251
  %2456 = vmatprep.subr.mxu0 0.0
  %2457 = vmatpush1.msra.mxu0 %v2252
  %2458 = vmatprep.subr.mxu0 0.0
  %2459 = vmatpush1.msra.mxu0 %v2253
  %2460 = vmatprep.subr.mxu0 0.0
  %2461 = vmatpush1.msra.mxu0 %v2254
  %2462 = vmatprep.subr.mxu0 0.0
  %2463 = vmatpush1.msra.mxu0 0.0
  %2464 = vmatprep.subr.mxu0 0.0
  %2465 = vmatpush1.msra.mxu0 0.0
  %2466 = vmatprep.subr.mxu0 0.0
  %2467 = vmatpush1.msra.mxu0 0.0
  %2468 = vmatprep.subr.mxu0 0.0
  %2469 = vmatpush1.msra.mxu0 0.0
  %2470 = vmatprep.subr.mxu0 0.0
  %2471 = vmatpush1.msra.mxu0 0.0
  %2472 = vmatprep.subr.mxu0 0.0
  %2473 = vmatpush1.msra.mxu0 0.0
  %2474 = vmatprep.subr.mxu0 0.0
  %2475 = vmatpush1.msra.mxu0 0.0
  %2476 = vmatprep.subr.mxu0 0.0
  %2477 = vmatpush1.msra.mxu0 0.0
  %2478 = vmatprep.subr.mxu0 0.0
  %2479 = vmatpush1.msra.mxu0 0.0
  %2480 = vmatprep.subr.mxu0 0.0
  %2481 = vmatpush1.msra.mxu0 0.0
  %2482 = vmatprep.subr.mxu0 0.0
  %2483 = vmatpush1.msra.mxu0 0.0
  %2484 = vmatprep.subr.mxu0 0.0
  %2485 = vmatpush1.msra.mxu0 0.0
  %2486 = vmatprep.subr.mxu0 0.0
  %2487 = vmatpush1.msra.mxu0 0.0
  %2488 = vmatprep.subr.mxu0 0.0
  %2489 = vmatpush1.msra.mxu0 0.0
  %2490 = vmatprep.subr.mxu0 0.0
  %2491 = vmatpush1.msra.mxu0 0.0
  %2492 = vmatprep.subr.mxu0 0.0
  %2493 = vmatpush1.msra.mxu0 0.0
  %2494 = vmatprep.subr.mxu0 0.0
  %2495 = vmatpush1.msra.mxu0 0.0
  %2496 = vmatprep.subr.mxu0 0.0
  %2497 = vmatpush1.msra.mxu0 0.0
  %2498 = vmatprep.subr.mxu0 0.0
  %2499 = vmatpush1.msra.mxu0 0.0
  %2500 = vmatprep.subr.mxu0 0.0
  %2501 = vmatpush1.msra.mxu0 0.0
  %2502 = vmatprep.subr.mxu0 0.0
  %2503 = vmatpush1.msra.mxu0 0.0
  %2504 = vmatprep.subr.mxu0 0.0
  %2505 = vmatpush1.msra.mxu0 0.0
  %2506 = vmatprep.subr.mxu0 0.0
  %2507 = vmatpush1.msra.mxu0 0.0
  %2508 = vmatprep.subr.mxu0 0.0
  %2509 = vmatpush1.msra.mxu0 0.0
  %2510 = vmatprep.subr.mxu0 0.0
  %2511 = vmatpush1.msra.mxu0 0.0
  %2512 = vmatprep.subr.mxu0 0.0
  %2513 = vmatpush1.msra.mxu0 0.0
  %2514 = vmatprep.subr.mxu0 0.0
  %2515 = vmatpush1.msra.mxu0 0.0
  %2516 = vmatprep.subr.mxu0 0.0
  %2517 = vmatpush1.msra.mxu0 0.0
  %2518 = vmatprep.mubr.f32.mxu0 0.0
  %2519 = vmatmul.mubr.f32.gmra.mrb[0].mxu0 %v2452
  %v2520 = vpop.f32.mrb[0].mxu0
  %v2521 = vadd.f32 0.0, %v2520
  %v2522 = vpop.f32.mrb[0].mxu0
  %2523 = vdwg.mxu0
  %v2524 = vadd.f32 %v2237, %v2521
  %v2525 = vxor.u32 %v2524, 2147483648
  %v2526 = vmul.f32 %v2525, 1.442695
  %v2527 = vpow.pop %v2526
  %v2528 = vadd.f32 %v2527, 1.0
  %v2529 = vrcp.pop %v2528
  %v2530 = vmul.f32 1.0, %v2529
  %v2531 = vtanh.pop %v2524
  %v2532 = vmul.f32 %v2530, %v2347
  %2534 = vrot.lane.b32.xlu0 %v2531, 32
  %v2535 = vpop.permute.xlu0 %2534
  %v2537 = vmul.f32 %v2530, %v2535
  %2539 = vrot.lane.b32.xlu0 %v2537, 32
  %v2540 = vpop.permute.xlu0 %2539
  %v2542 = vadd.f32 %v2532, %v2540
  %v2543 = vtanh.pop %v2542
  %2545 = vrot.lane.b32.xlu0 %v2543, 32
  %v2546 = vpop.permute.xlu0 %2545
  %v2548 = vmul.f32 %v2530, %v2546
  %2550 = vrot.lane.b32.xlu0 %v2448, 64
  %v2551 = vpop.permute.xlu0 %2550
  %v2552 = vsel %vm376, %v2551, 0
  %2554 = vmatprep.subr.mxu0 0.0
  %2555 = vmatpush1.msra.mxu0 %v2255
  %2556 = vmatprep.subr.mxu0 0.0
  %2557 = vmatpush1.msra.mxu0 %v2256
  %2558 = vmatprep.subr.mxu0 0.0
  %2559 = vmatpush1.msra.mxu0 %v2257
  %2560 = vmatprep.subr.mxu0 0.0
  %2561 = vmatpush1.msra.mxu0 %v2258
  %2562 = vmatprep.subr.mxu0 0.0
  %2563 = vmatpush1.msra.mxu0 0.0
  %2564 = vmatprep.subr.mxu0 0.0
  %2565 = vmatpush1.msra.mxu0 0.0
  %2566 = vmatprep.subr.mxu0 0.0
  %2567 = vmatpush1.msra.mxu0 0.0
  %2568 = vmatprep.subr.mxu0 0.0
  %2569 = vmatpush1.msra.mxu0 0.0
  %2570 = vmatprep.subr.mxu0 0.0
  %2571 = vmatpush1.msra.mxu0 0.0
  %2572 = vmatprep.subr.mxu0 0.0
  %2573 = vmatpush1.msra.mxu0 0.0
  %2574 = vmatprep.subr.mxu0 0.0
  %2575 = vmatpush1.msra.mxu0 0.0
  %2576 = vmatprep.subr.mxu0 0.0
  %2577 = vmatpush1.msra.mxu0 0.0
  %2578 = vmatprep.subr.mxu0 0.0
  %2579 = vmatpush1.msra.mxu0 0.0
  %2580 = vmatprep.subr.mxu0 0.0
  %2581 = vmatpush1.msra.mxu0 0.0
  %2582 = vmatprep.subr.mxu0 0.0
  %2583 = vmatpush1.msra.mxu0 0.0
  %2584 = vmatprep.subr.mxu0 0.0
  %2585 = vmatpush1.msra.mxu0 0.0
  %2586 = vmatprep.subr.mxu0 0.0
  %2587 = vmatpush1.msra.mxu0 0.0
  %2588 = vmatprep.subr.mxu0 0.0
  %2589 = vmatpush1.msra.mxu0 0.0
  %2590 = vmatprep.subr.mxu0 0.0
  %2591 = vmatpush1.msra.mxu0 0.0
  %2592 = vmatprep.subr.mxu0 0.0
  %2593 = vmatpush1.msra.mxu0 0.0
  %2594 = vmatprep.subr.mxu0 0.0
  %2595 = vmatpush1.msra.mxu0 0.0
  %2596 = vmatprep.subr.mxu0 0.0
  %2597 = vmatpush1.msra.mxu0 0.0
  %2598 = vmatprep.subr.mxu0 0.0
  %2599 = vmatpush1.msra.mxu0 0.0
  %2600 = vmatprep.subr.mxu0 0.0
  %2601 = vmatpush1.msra.mxu0 0.0
  %2602 = vmatprep.subr.mxu0 0.0
  %2603 = vmatpush1.msra.mxu0 0.0
  %2604 = vmatprep.subr.mxu0 0.0
  %2605 = vmatpush1.msra.mxu0 0.0
  %2606 = vmatprep.subr.mxu0 0.0
  %2607 = vmatpush1.msra.mxu0 0.0
  %2608 = vmatprep.subr.mxu0 0.0
  %2609 = vmatpush1.msra.mxu0 0.0
  %2610 = vmatprep.subr.mxu0 0.0
  %2611 = vmatpush1.msra.mxu0 0.0
  %2612 = vmatprep.subr.mxu0 0.0
  %2613 = vmatpush1.msra.mxu0 0.0
  %2614 = vmatprep.subr.mxu0 0.0
  %2615 = vmatpush1.msra.mxu0 0.0
  %2616 = vmatprep.subr.mxu0 0.0
  %2617 = vmatpush1.msra.mxu0 0.0
  %2618 = vmatprep.mubr.f32.mxu0 0.0
  %2619 = vmatmul.mubr.f32.gmra.mrb[0].mxu0 %v2552
  %v2620 = vpop.f32.mrb[0].mxu0
  %v2621 = vadd.f32 0.0, %v2620
  %v2622 = vpop.f32.mrb[0].mxu0
  %2623 = vdwg.mxu0
  %v2624 = vadd.f32 %v2248, %v2621
  %v2625 = vxor.u32 %v2624, 2147483648
  %v2626 = vmul.f32 %v2625, 1.442695
  %v2627 = vpow.pop %v2626
  %v2628 = vadd.f32 %v2627, 1.0
  %v2629 = vrcp.pop %v2628
  %v2630 = vmul.f32 1.0, %v2629
  %v2631 = vtanh.pop %v2624
  %v2632 = vmul.f32 %v2630, %v2442
  %2634 = vrot.lane.b32.xlu0 %v2631, 32
  %v2635 = vpop.permute.xlu0 %2634
  %v2637 = vmul.f32 %v2630, %v2635
  %2639 = vrot.lane.b32.xlu0 %v2637, 32
  %v2640 = vpop.permute.xlu0 %2639
  %v2642 = vadd.f32 %v2632, %v2640
  %v2643 = vtanh.pop %v2642
  %2645 = vrot.lane.b32.xlu0 %v2643, 32
  %v2646 = vpop.permute.xlu0 %2645
  %v2648 = vmul.f32 %v2630, %v2646
  %2650 = vrot.lane.b32.xlu0 %v2548, 64
  %v2651 = vpop.permute.xlu0 %2650
  %v2652 = vsel %vm376, %v2651, 0
  %2654 = vmatprep.subr.mxu0 0.0
  %2655 = vmatpush1.msra.mxu0 %v2251
  %2656 = vmatprep.subr.mxu0 0.0
  %2657 = vmatpush1.msra.mxu0 %v2252
  %2658 = vmatprep.subr.mxu0 0.0
  %2659 = vmatpush1.msra.mxu0 %v2253
  %2660 = vmatprep.subr.mxu0 0.0
  %2661 = vmatpush1.msra.mxu0 %v2254
  %2662 = vmatprep.subr.mxu0 0.0
  %2663 = vmatpush1.msra.mxu0 0.0
  %2664 = vmatprep.subr.mxu0 0.0
  %2665 = vmatpush1.msra.mxu0 0.0
  %2666 = vmatprep.subr.mxu0 0.0
  %2667 = vmatpush1.msra.mxu0 0.0
  %2668 = vmatprep.subr.mxu0 0.0
  %2669 = vmatpush1.msra.mxu0 0.0
  %2670 = vmatprep.subr.mxu0 0.0
  %2671 = vmatpush1.msra.mxu0 0.0
  %2672 = vmatprep.subr.mxu0 0.0
  %2673 = vmatpush1.msra.mxu0 0.0
  %2674 = vmatprep.subr.mxu0 0.0
  %2675 = vmatpush1.msra.mxu0 0.0
  %2676 = vmatprep.subr.mxu0 0.0
  %2677 = vmatpush1.msra.mxu0 0.0
  %2678 = vmatprep.subr.mxu0 0.0
  %2679 = vmatpush1.msra.mxu0 0.0
  %2680 = vmatprep.subr.mxu0 0.0
  %2681 = vmatpush1.msra.mxu0 0.0
  %2682 = vmatprep.subr.mxu0 0.0
  %2683 = vmatpush1.msra.mxu0 0.0
  %2684 = vmatprep.subr.mxu0 0.0
  %2685 = vmatpush1.msra.mxu0 0.0
  %2686 = vmatprep.subr.mxu0 0.0
  %2687 = vmatpush1.msra.mxu0 0.0
  %2688 = vmatprep.subr.mxu0 0.0
  %2689 = vmatpush1.msra.mxu0 0.0
  %2690 = vmatprep.subr.mxu0 0.0
  %2691 = vmatpush1.msra.mxu0 0.0
  %2692 = vmatprep.subr.mxu0 0.0
  %2693 = vmatpush1.msra.mxu0 0.0
  %2694 = vmatprep.subr.mxu0 0.0
  %2695 = vmatpush1.msra.mxu0 0.0
  %2696 = vmatprep.subr.mxu0 0.0
  %2697 = vmatpush1.msra.mxu0 0.0
  %2698 = vmatprep.subr.mxu0 0.0
  %2699 = vmatpush1.msra.mxu0 0.0
  %2700 = vmatprep.subr.mxu0 0.0
  %2701 = vmatpush1.msra.mxu0 0.0
  %2702 = vmatprep.subr.mxu0 0.0
  %2703 = vmatpush1.msra.mxu0 0.0
  %2704 = vmatprep.subr.mxu0 0.0
  %2705 = vmatpush1.msra.mxu0 0.0
  %2706 = vmatprep.subr.mxu0 0.0
  %2707 = vmatpush1.msra.mxu0 0.0
  %2708 = vmatprep.subr.mxu0 0.0
  %2709 = vmatpush1.msra.mxu0 0.0
  %2710 = vmatprep.subr.mxu0 0.0
  %2711 = vmatpush1.msra.mxu0 0.0
  %2712 = vmatprep.subr.mxu0 0.0
  %2713 = vmatpush1.msra.mxu0 0.0
  %2714 = vmatprep.subr.mxu0 0.0
  %2715 = vmatpush1.msra.mxu0 0.0
  %2716 = vmatprep.subr.mxu0 0.0
  %2717 = vmatpush1.msra.mxu0 0.0
  %2718 = vmatprep.mubr.f32.mxu0 0.0
  %2719 = vmatmul.mubr.f32.gmra.mrb[0].mxu0 %v2652
  %v2720 = vpop.f32.mrb[0].mxu0
  %v2721 = vadd.f32 0.0, %v2720
  %v2722 = vpop.f32.mrb[0].mxu0
  %2723 = vdwg.mxu0
  %v2724 = vadd.f32 %v2239, %v2721
  %v2725 = vxor.u32 %v2724, 2147483648
  %v2726 = vmul.f32 %v2725, 1.442695
  %v2727 = vpow.pop %v2726
  %v2728 = vadd.f32 %v2727, 1.0
  %v2729 = vrcp.pop %v2728
  %v2730 = vmul.f32 1.0, %v2729
  %v2731 = vtanh.pop %v2724
  %v2732 = vmul.f32 %v2730, %v2542
  %2734 = vrot.lane.b32.xlu0 %v2731, 32
  %v2735 = vpop.permute.xlu0 %2734
  %v2737 = vmul.f32 %v2730, %v2735
  %2739 = vrot.lane.b32.xlu0 %v2737, 32
  %v2740 = vpop.permute.xlu0 %2739
  %v2742 = vadd.f32 %v2732, %v2740
  %v2743 = vtanh.pop %v2742
  %2745 = vrot.lane.b32.xlu0 %v2743, 32
  %v2746 = vpop.permute.xlu0 %2745
  %v2748 = vmul.f32 %v2730, %v2746
  %2750 = vrot.lane.b32.xlu0 %v2648, 64
  %v2751 = vpop.permute.xlu0 %2750
  %v2752 = vsel %vm376, %v2751, 0
  %2754 = vmatprep.subr.mxu0 0.0
  %2755 = vmatpush1.msra.mxu0 %v2255
  %2756 = vmatprep.subr.mxu0 0.0
  %2757 = vmatpush1.msra.mxu0 %v2256
  %2758 = vmatprep.subr.mxu0 0.0
  %2759 = vmatpush1.msra.mxu0 %v2257
  %2760 = vmatprep.subr.mxu0 0.0
  %2761 = vmatpush1.msra.mxu0 %v2258
  %2762 = vmatprep.subr.mxu0 0.0
  %2763 = vmatpush1.msra.mxu0 0.0
  %2764 = vmatprep.subr.mxu0 0.0
  %2765 = vmatpush1.msra.mxu0 0.0
  %2766 = vmatprep.subr.mxu0 0.0
  %2767 = vmatpush1.msra.mxu0 0.0
  %2768 = vmatprep.subr.mxu0 0.0
  %2769 = vmatpush1.msra.mxu0 0.0
  %2770 = vmatprep.subr.mxu0 0.0
  %2771 = vmatpush1.msra.mxu0 0.0
  %2772 = vmatprep.subr.mxu0 0.0
  %2773 = vmatpush1.msra.mxu0 0.0
  %2774 = vmatprep.subr.mxu0 0.0
  %2775 = vmatpush1.msra.mxu0 0.0
  %2776 = vmatprep.subr.mxu0 0.0
  %2777 = vmatpush1.msra.mxu0 0.0
  %2778 = vmatprep.subr.mxu0 0.0
  %2779 = vmatpush1.msra.mxu0 0.0
  %2780 = vmatprep.subr.mxu0 0.0
  %2781 = vmatpush1.msra.mxu0 0.0
  %2782 = vmatprep.subr.mxu0 0.0
  %2783 = vmatpush1.msra.mxu0 0.0
  %2784 = vmatprep.subr.mxu0 0.0
  %2785 = vmatpush1.msra.mxu0 0.0
  %2786 = vmatprep.subr.mxu0 0.0
  %2787 = vmatpush1.msra.mxu0 0.0
  %2788 = vmatprep.subr.mxu0 0.0
  %2789 = vmatpush1.msra.mxu0 0.0
  %2790 = vmatprep.subr.mxu0 0.0
  %2791 = vmatpush1.msra.mxu0 0.0
  %2792 = vmatprep.subr.mxu0 0.0
  %2793 = vmatpush1.msra.mxu0 0.0
  %2794 = vmatprep.subr.mxu0 0.0
  %2795 = vmatpush1.msra.mxu0 0.0
  %2796 = vmatprep.subr.mxu0 0.0
  %2797 = vmatpush1.msra.mxu0 0.0
  %2798 = vmatprep.subr.mxu0 0.0
  %2799 = vmatpush1.msra.mxu0 0.0
  %2800 = vmatprep.subr.mxu0 0.0
  %2801 = vmatpush1.msra.mxu0 0.0
  %2802 = vmatprep.subr.mxu0 0.0
  %2803 = vmatpush1.msra.mxu0 0.0
  %2804 = vmatprep.subr.mxu0 0.0
  %2805 = vmatpush1.msra.mxu0 0.0
  %2806 = vmatprep.subr.mxu0 0.0
  %2807 = vmatpush1.msra.mxu0 0.0
  %2808 = vmatprep.subr.mxu0 0.0
  %2809 = vmatpush1.msra.mxu0 0.0
  %2810 = vmatprep.subr.mxu0 0.0
  %2811 = vmatpush1.msra.mxu0 0.0
  %2812 = vmatprep.subr.mxu0 0.0
  %2813 = vmatpush1.msra.mxu0 0.0
  %2814 = vmatprep.subr.mxu0 0.0
  %2815 = vmatpush1.msra.mxu0 0.0
  %2816 = vmatprep.subr.mxu0 0.0
  %2817 = vmatpush1.msra.mxu0 0.0
  %2818 = vmatprep.mubr.f32.mxu0 0.0
  %2819 = vmatmul.mubr.f32.gmra.mrb[0].mxu0 %v2752
  %v2820 = vpop.f32.mrb[0].mxu0
  %v2821 = vadd.f32 0.0, %v2820
  %v2822 = vpop.f32.mrb[0].mxu0
  %2823 = vdwg.mxu0
  %v2824 = vadd.f32 %v2246, %v2821
  %v2825 = vxor.u32 %v2824, 2147483648
  %v2826 = vmul.f32 %v2825, 1.442695
  %v2827 = vpow.pop %v2826
  %v2828 = vadd.f32 %v2827, 1.0
  %v2829 = vrcp.pop %v2828
  %v2830 = vmul.f32 1.0, %v2829
  %v2831 = vtanh.pop %v2824
  %v2832 = vmul.f32 %v2830, %v2642
  %2834 = vrot.lane.b32.xlu0 %v2831, 32
  %v2835 = vpop.permute.xlu0 %2834
  %v2837 = vmul.f32 %v2830, %v2835
  %2839 = vrot.lane.b32.xlu0 %v2837, 32
  %v2840 = vpop.permute.xlu0 %2839
  %v2842 = vadd.f32 %v2832, %v2840
  %v2843 = vtanh.pop %v2842
  %2845 = vrot.lane.b32.xlu0 %v2843, 32
  %v2846 = vpop.permute.xlu0 %2845
  %v2848 = vmul.f32 %v2830, %v2846
  %2850 = vrot.lane.b32.xlu0 %v2748, 64
  %v2851 = vpop.permute.xlu0 %2850
  %v2852 = vsel %vm376, %v2851, 0
  %2854 = vmatprep.subr.mxu0 0.0
  %2855 = vmatpush1.msra.mxu0 %v2251
  %2856 = vmatprep.subr.mxu0 0.0
  %2857 = vmatpush1.msra.mxu0 %v2252
  %2858 = vmatprep.subr.mxu0 0.0
  %2859 = vmatpush1.msra.mxu0 %v2253
  %2860 = vmatprep.subr.mxu0 0.0
  %2861 = vmatpush1.msra.mxu0 %v2254
  %2862 = vmatprep.subr.mxu0 0.0
  %2863 = vmatpush1.msra.mxu0 0.0
  %2864 = vmatprep.subr.mxu0 0.0
  %2865 = vmatpush1.msra.mxu0 0.0
  %2866 = vmatprep.subr.mxu0 0.0
  %2867 = vmatpush1.msra.mxu0 0.0
  %2868 = vmatprep.subr.mxu0 0.0
  %2869 = vmatpush1.msra.mxu0 0.0
  %2870 = vmatprep.subr.mxu0 0.0
  %2871 = vmatpush1.msra.mxu0 0.0
  %2872 = vmatprep.subr.mxu0 0.0
  %2873 = vmatpush1.msra.mxu0 0.0
  %2874 = vmatprep.subr.mxu0 0.0
  %2875 = vmatpush1.msra.mxu0 0.0
  %2876 = vmatprep.subr.mxu0 0.0
  %2877 = vmatpush1.msra.mxu0 0.0
  %2878 = vmatprep.subr.mxu0 0.0
  %2879 = vmatpush1.msra.mxu0 0.0
  %2880 = vmatprep.subr.mxu0 0.0
  %2881 = vmatpush1.msra.mxu0 0.0
  %2882 = vmatprep.subr.mxu0 0.0
  %2883 = vmatpush1.msra.mxu0 0.0
  %2884 = vmatprep.subr.mxu0 0.0
  %2885 = vmatpush1.msra.mxu0 0.0
  %2886 = vmatprep.subr.mxu0 0.0
  %2887 = vmatpush1.msra.mxu0 0.0
  %2888 = vmatprep.subr.mxu0 0.0
  %2889 = vmatpush1.msra.mxu0 0.0
  %2890 = vmatprep.subr.mxu0 0.0
  %2891 = vmatpush1.msra.mxu0 0.0
  %2892 = vmatprep.subr.mxu0 0.0
  %2893 = vmatpush1.msra.mxu0 0.0
  %2894 = vmatprep.subr.mxu0 0.0
  %2895 = vmatpush1.msra.mxu0 0.0
  %2896 = vmatprep.subr.mxu0 0.0
  %2897 = vmatpush1.msra.mxu0 0.0
  %2898 = vmatprep.subr.mxu0 0.0
  %2899 = vmatpush1.msra.mxu0 0.0
  %2900 = vmatprep.subr.mxu0 0.0
  %2901 = vmatpush1.msra.mxu0 0.0
  %2902 = vmatprep.subr.mxu0 0.0
  %2903 = vmatpush1.msra.mxu0 0.0
  %2904 = vmatprep.subr.mxu0 0.0
  %2905 = vmatpush1.msra.mxu0 0.0
  %2906 = vmatprep.subr.mxu0 0.0
  %2907 = vmatpush1.msra.mxu0 0.0
  %2908 = vmatprep.subr.mxu0 0.0
  %2909 = vmatpush1.msra.mxu0 0.0
  %2910 = vmatprep.subr.mxu0 0.0
  %2911 = vmatpush1.msra.mxu0 0.0
  %2912 = vmatprep.subr.mxu0 0.0
  %2913 = vmatpush1.msra.mxu0 0.0
  %2914 = vmatprep.subr.mxu0 0.0
  %2915 = vmatpush1.msra.mxu0 0.0
  %2916 = vmatprep.subr.mxu0 0.0
  %2917 = vmatpush1.msra.mxu0 0.0
  %2918 = vmatprep.mubr.f32.mxu0 0.0
  %2919 = vmatmul.mubr.f32.gmra.mrb[0].mxu0 %v2852
  %v2920 = vpop.f32.mrb[0].mxu0
  %v2921 = vadd.f32 0.0, %v2920
  %v2922 = vpop.f32.mrb[0].mxu0
  %2923 = vdwg.mxu0
  %v2924 = vadd.f32 %v2241, %v2921
  %v2925 = vxor.u32 %v2924, 2147483648
  %v2926 = vmul.f32 %v2925, 1.442695
  %v2927 = vpow.pop %v2926
  %v2928 = vadd.f32 %v2927, 1.0
  %v2929 = vrcp.pop %v2928
  %v2930 = vmul.f32 1.0, %v2929
  %v2931 = vtanh.pop %v2924
  %v2932 = vmul.f32 %v2930, %v2742
  %2934 = vrot.lane.b32.xlu0 %v2931, 32
  %v2935 = vpop.permute.xlu0 %2934
  %v2937 = vmul.f32 %v2930, %v2935
  %2939 = vrot.lane.b32.xlu0 %v2937, 32
  %v2940 = vpop.permute.xlu0 %2939
  %v2942 = vadd.f32 %v2932, %v2940
  %v2943 = vtanh.pop %v2942
  %2945 = vrot.lane.b32.xlu0 %v2943, 32
  %v2946 = vpop.permute.xlu0 %2945
  %v2948 = vmul.f32 %v2930, %v2946
  %2950 = vrot.lane.b32.xlu0 %v2848, 64
  %v2951 = vpop.permute.xlu0 %2950
  %v2952 = vsel %vm376, %v2951, 0
  %2954 = vmatprep.subr.mxu0 0.0
  %2955 = vmatpush1.msra.mxu0 %v2255
  %2956 = vmatprep.subr.mxu0 0.0
  %2957 = vmatpush1.msra.mxu0 %v2256
  %2958 = vmatprep.subr.mxu0 0.0
  %2959 = vmatpush1.msra.mxu0 %v2257
  %2960 = vmatprep.subr.mxu0 0.0
  %2961 = vmatpush1.msra.mxu0 %v2258
  %2962 = vmatprep.subr.mxu0 0.0
  %2963 = vmatpush1.msra.mxu0 0.0
  %2964 = vmatprep.subr.mxu0 0.0
  %2965 = vmatpush1.msra.mxu0 0.0
  %2966 = vmatprep.subr.mxu0 0.0
  %2967 = vmatpush1.msra.mxu0 0.0
  %2968 = vmatprep.subr.mxu0 0.0
  %2969 = vmatpush1.msra.mxu0 0.0
  %2970 = vmatprep.subr.mxu0 0.0
  %2971 = vmatpush1.msra.mxu0 0.0
  %2972 = vmatprep.subr.mxu0 0.0
  %2973 = vmatpush1.msra.mxu0 0.0
  %2974 = vmatprep.subr.mxu0 0.0
  %2975 = vmatpush1.msra.mxu0 0.0
  %2976 = vmatprep.subr.mxu0 0.0
  %2977 = vmatpush1.msra.mxu0 0.0
  %2978 = vmatprep.subr.mxu0 0.0
  %2979 = vmatpush1.msra.mxu0 0.0
  %2980 = vmatprep.subr.mxu0 0.0
  %2981 = vmatpush1.msra.mxu0 0.0
  %2982 = vmatprep.subr.mxu0 0.0
  %2983 = vmatpush1.msra.mxu0 0.0
  %2984 = vmatprep.subr.mxu0 0.0
  %2985 = vmatpush1.msra.mxu0 0.0
  %2986 = vmatprep.subr.mxu0 0.0
  %2987 = vmatpush1.msra.mxu0 0.0
  %2988 = vmatprep.subr.mxu0 0.0
  %2989 = vmatpush1.msra.mxu0 0.0
  %2990 = vmatprep.subr.mxu0 0.0
  %2991 = vmatpush1.msra.mxu0 0.0
  %2992 = vmatprep.subr.mxu0 0.0
  %2993 = vmatpush1.msra.mxu0 0.0
  %2994 = vmatprep.subr.mxu0 0.0
  %2995 = vmatpush1.msra.mxu0 0.0
  %2996 = vmatprep.subr.mxu0 0.0
  %2997 = vmatpush1.msra.mxu0 0.0
  %2998 = vmatprep.subr.mxu0 0.0
  %2999 = vmatpush1.msra.mxu0 0.0
  %3000 = vmatprep.subr.mxu0 0.0
  %3001 = vmatpush1.msra.mxu0 0.0
  %3002 = vmatprep.subr.mxu0 0.0
  %3003 = vmatpush1.msra.mxu0 0.0
  %3004 = vmatprep.subr.mxu0 0.0
  %3005 = vmatpush1.msra.mxu0 0.0
  %3006 = vmatprep.subr.mxu0 0.0
  %3007 = vmatpush1.msra.mxu0 0.0
  %3008 = vmatprep.subr.mxu0 0.0
  %3009 = vmatpush1.msra.mxu0 0.0
  %3010 = vmatprep.subr.mxu0 0.0
  %3011 = vmatpush1.msra.mxu0 0.0
  %3012 = vmatprep.subr.mxu0 0.0
  %3013 = vmatpush1.msra.mxu0 0.0
  %3014 = vmatprep.subr.mxu0 0.0
  %3015 = vmatpush1.msra.mxu0 0.0
  %3016 = vmatprep.subr.mxu0 0.0
  %3017 = vmatpush1.msra.mxu0 0.0
  %3018 = vmatprep.mubr.f32.mxu0 0.0
  %3019 = vmatmul.mubr.f32.gmra.mrb[0].mxu0 %v2952
  %v3020 = vpop.f32.mrb[0].mxu0
  %v3021 = vadd.f32 0.0, %v3020
  %v3022 = vpop.f32.mrb[0].mxu0
  %3023 = vdwg.mxu0
  %v3024 = vadd.f32 %v2244, %v3021
  %v3025 = vxor.u32 %v3024, 2147483648
  %v3026 = vmul.f32 %v3025, 1.442695
  %v3027 = vpow.pop %v3026
  %v3028 = vadd.f32 %v3027, 1.0
  %v3029 = vrcp.pop %v3028
  %v3030 = vmul.f32 1.0, %v3029
  %v3031 = vtanh.pop %v3024
  %v3032 = vmul.f32 %v3030, %v2842
  %3034 = vrot.lane.b32.xlu0 %v3031, 32
  %v3035 = vpop.permute.xlu0 %3034
  %v3037 = vmul.f32 %v3030, %v3035
  %3039 = vrot.lane.b32.xlu0 %v3037, 32
  %v3040 = vpop.permute.xlu0 %3039
  %v3042 = vadd.f32 %v3032, %v3040
  %v3043 = vtanh.pop %v3042
  %3045 = vrot.lane.b32.xlu0 %v3043, 32
  %v3046 = vpop.permute.xlu0 %3045
  %v3048 = vmul.f32 %v3030, %v3046
  %3050 = vrot.lane.b32.xlu0 %v2948, 64
  %v3051 = vpop.permute.xlu0 %3050
  %v3052 = vsel %vm376, %v3051, 0
  %3054 = vmatprep.subr.mxu0 0.0
  %3055 = vmatpush1.msra.mxu0 %v2251
  %3056 = vmatprep.subr.mxu0 0.0
  %3057 = vmatpush1.msra.mxu0 %v2252
  %3058 = vmatprep.subr.mxu0 0.0
  %3059 = vmatpush1.msra.mxu0 %v2253
  %3060 = vmatprep.subr.mxu0 0.0
  %3061 = vmatpush1.msra.mxu0 %v2254
  %3062 = vmatprep.subr.mxu0 0.0
  %3063 = vmatpush1.msra.mxu0 0.0
  %3064 = vmatprep.subr.mxu0 0.0
  %3065 = vmatpush1.msra.mxu0 0.0
  %3066 = vmatprep.subr.mxu0 0.0
  %3067 = vmatpush1.msra.mxu0 0.0
  %3068 = vmatprep.subr.mxu0 0.0
  %3069 = vmatpush1.msra.mxu0 0.0
  %3070 = vmatprep.subr.mxu0 0.0
  %3071 = vmatpush1.msra.mxu0 0.0
  %3072 = vmatprep.subr.mxu0 0.0
  %3073 = vmatpush1.msra.mxu0 0.0
  %3074 = vmatprep.subr.mxu0 0.0
  %3075 = vmatpush1.msra.mxu0 0.0
  %3076 = vmatprep.subr.mxu0 0.0
  %3077 = vmatpush1.msra.mxu0 0.0
  %3078 = vmatprep.subr.mxu0 0.0
  %3079 = vmatpush1.msra.mxu0 0.0
  %3080 = vmatprep.subr.mxu0 0.0
  %3081 = vmatpush1.msra.mxu0 0.0
  %3082 = vmatprep.subr.mxu0 0.0
  %3083 = vmatpush1.msra.mxu0 0.0
  %3084 = vmatprep.subr.mxu0 0.0
  %3085 = vmatpush1.msra.mxu0 0.0
  %3086 = vmatprep.subr.mxu0 0.0
  %3087 = vmatpush1.msra.mxu0 0.0
  %3088 = vmatprep.subr.mxu0 0.0
  %3089 = vmatpush1.msra.mxu0 0.0
  %3090 = vmatprep.subr.mxu0 0.0
  %3091 = vmatpush1.msra.mxu0 0.0
  %3092 = vmatprep.subr.mxu0 0.0
  %3093 = vmatpush1.msra.mxu0 0.0
  %3094 = vmatprep.subr.mxu0 0.0
  %3095 = vmatpush1.msra.mxu0 0.0
  %3096 = vmatprep.subr.mxu0 0.0
  %3097 = vmatpush1.msra.mxu0 0.0
  %3098 = vmatprep.subr.mxu0 0.0
  %3099 = vmatpush1.msra.mxu0 0.0
  %3100 = vmatprep.subr.mxu0 0.0
  %3101 = vmatpush1.msra.mxu0 0.0
  %3102 = vmatprep.subr.mxu0 0.0
  %3103 = vmatpush1.msra.mxu0 0.0
  %3104 = vmatprep.subr.mxu0 0.0
  %3105 = vmatpush1.msra.mxu0 0.0
  %3106 = vmatprep.subr.mxu0 0.0
  %3107 = vmatpush1.msra.mxu0 0.0
  %3108 = vmatprep.subr.mxu0 0.0
  %3109 = vmatpush1.msra.mxu0 0.0
  %3110 = vmatprep.subr.mxu0 0.0
  %3111 = vmatpush1.msra.mxu0 0.0
  %3112 = vmatprep.subr.mxu0 0.0
  %3113 = vmatpush1.msra.mxu0 0.0
  %3114 = vmatprep.subr.mxu0 0.0
  %3115 = vmatpush1.msra.mxu0 0.0
  %3116 = vmatprep.subr.mxu0 0.0
  %3117 = vmatpush1.msra.mxu0 0.0
  %3118 = vmatprep.mubr.f32.mxu0 0.0
  %3119 = vmatmul.mubr.f32.gmra.mrb[0].mxu0 %v3052
  %v3120 = vpop.f32.mrb[0].mxu0
  %v3121 = vadd.f32 0.0, %v3120
  %v3122 = vpop.f32.mrb[0].mxu0
  %3123 = vdwg.mxu0
  %v3124 = vadd.f32 %v2243, %v3121
  %v3125 = vxor.u32 %v3124, 2147483648
  %v3126 = vmul.f32 %v3125, 1.442695
  %v3127 = vpow.pop %v3126
  %v3128 = vadd.f32 %v3127, 1.0
  %v3129 = vrcp.pop %v3128
  %v3130 = vmul.f32 1.0, %v3129
  %v3131 = vtanh.pop %v3124
  %v3132 = vmul.f32 %v3130, %v2942
  %3134 = vrot.lane.b32.xlu0 %v3131, 32
  %v3135 = vpop.permute.xlu0 %3134
  %v3137 = vmul.f32 %v3130, %v3135
  %3139 = vrot.lane.b32.xlu0 %v3137, 32
  %v3140 = vpop.permute.xlu0 %3139
  %v3142 = vadd.f32 %v3132, %v3140
  %v3143 = vtanh.pop %v3142
  %3145 = vrot.lane.b32.xlu0 %v3143, 32
  %v3146 = vpop.permute.xlu0 %3145
  %v3148 = vmul.f32 %v3130, %v3146
  %3150 = vrot.lane.b32.xlu0 %v3048, 64
  %v3151 = vpop.permute.xlu0 %3150
  %v3152 = vsel %vm376, %v3151, 0
  %3154 = vmatprep.subr.mxu0 0.0
  %3155 = vmatpush1.msra.mxu0 %v2255
  %3156 = vmatprep.subr.mxu0 0.0
  %3157 = vmatpush1.msra.mxu0 %v2256
  %3158 = vmatprep.subr.mxu0 0.0
  %3159 = vmatpush1.msra.mxu0 %v2257
  %3160 = vmatprep.subr.mxu0 0.0
  %3161 = vmatpush1.msra.mxu0 %v2258
  %3162 = vmatprep.subr.mxu0 0.0
  %3163 = vmatpush1.msra.mxu0 0.0
  %3164 = vmatprep.subr.mxu0 0.0
  %3165 = vmatpush1.msra.mxu0 0.0
  %3166 = vmatprep.subr.mxu0 0.0
  %3167 = vmatpush1.msra.mxu0 0.0
  %3168 = vmatprep.subr.mxu0 0.0
  %3169 = vmatpush1.msra.mxu0 0.0
  %3170 = vmatprep.subr.mxu0 0.0
  %3171 = vmatpush1.msra.mxu0 0.0
  %3172 = vmatprep.subr.mxu0 0.0
  %3173 = vmatpush1.msra.mxu0 0.0
  %3174 = vmatprep.subr.mxu0 0.0
  %3175 = vmatpush1.msra.mxu0 0.0
  %3176 = vmatprep.subr.mxu0 0.0
  %3177 = vmatpush1.msra.mxu0 0.0
  %3178 = vmatprep.subr.mxu0 0.0
  %3179 = vmatpush1.msra.mxu0 0.0
  %3180 = vmatprep.subr.mxu0 0.0
  %3181 = vmatpush1.msra.mxu0 0.0
  %3182 = vmatprep.subr.mxu0 0.0
  %3183 = vmatpush1.msra.mxu0 0.0
  %3184 = vmatprep.subr.mxu0 0.0
  %3185 = vmatpush1.msra.mxu0 0.0
  %3186 = vmatprep.subr.mxu0 0.0
  %3187 = vmatpush1.msra.mxu0 0.0
  %3188 = vmatprep.subr.mxu0 0.0
  %3189 = vmatpush1.msra.mxu0 0.0
  %3190 = vmatprep.subr.mxu0 0.0
  %3191 = vmatpush1.msra.mxu0 0.0
  %3192 = vmatprep.subr.mxu0 0.0
  %3193 = vmatpush1.msra.mxu0 0.0
  %3194 = vmatprep.subr.mxu0 0.0
  %3195 = vmatpush1.msra.mxu0 0.0
  %3196 = vmatprep.subr.mxu0 0.0
  %3197 = vmatpush1.msra.mxu0 0.0
  %3198 = vmatprep.subr.mxu0 0.0
  %3199 = vmatpush1.msra.mxu0 0.0
  %3200 = vmatprep.subr.mxu0 0.0
  %3201 = vmatpush1.msra.mxu0 0.0
  %3202 = vmatprep.subr.mxu0 0.0
  %3203 = vmatpush1.msra.mxu0 0.0
  %3204 = vmatprep.subr.mxu0 0.0
  %3205 = vmatpush1.msra.mxu0 0.0
  %3206 = vmatprep.subr.mxu0 0.0
  %3207 = vmatpush1.msra.mxu0 0.0
  %3208 = vmatprep.subr.mxu0 0.0
  %3209 = vmatpush1.msra.mxu0 0.0
  %3210 = vmatprep.subr.mxu0 0.0
  %3211 = vmatpush1.msra.mxu0 0.0
  %3212 = vmatprep.subr.mxu0 0.0
  %3213 = vmatpush1.msra.mxu0 0.0
  %3214 = vmatprep.subr.mxu0 0.0
  %3215 = vmatpush1.msra.mxu0 0.0
  %3216 = vmatprep.subr.mxu0 0.0
  %3217 = vmatpush1.msra.mxu0 0.0
  %3218 = vmatprep.mubr.f32.mxu0 0.0
  %3219 = vmatmul.mubr.f32.gmra.mrb[0].mxu0 %v3152
  %v3220 = vpop.f32.mrb[0].mxu0
  %v3221 = vadd.f32 0.0, %v3220
  %v3222 = vpop.f32.mrb[0].mxu0
  %3223 = vdwg.mxu0
  %v3224 = vadd.f32 %v2242, %v3221
  %v3225 = vxor.u32 %v3224, 2147483648
  %v3226 = vmul.f32 %v3225, 1.442695
  %v3227 = vpow.pop %v3226
  %v3228 = vadd.f32 %v3227, 1.0
  %v3229 = vrcp.pop %v3228
  %v3230 = vmul.f32 1.0, %v3229
  %v3231 = vtanh.pop %v3224
  %v3232 = vmul.f32 %v3230, %v3042
  %3234 = vrot.lane.b32.xlu0 %v3231, 32
  %v3235 = vpop.permute.xlu0 %3234
  %v3237 = vmul.f32 %v3230, %v3235
  %3239 = vrot.lane.b32.xlu0 %v3237, 32
  %v3240 = vpop.permute.xlu0 %3239
  %v3242 = vadd.f32 %v3232, %v3240
  %v3243 = vtanh.pop %v3242
  %3245 = vrot.lane.b32.xlu0 %v3243, 32
  %v3246 = vpop.permute.xlu0 %3245
  %v3248 = vmul.f32 %v3230, %v3246
  %3250 = vrot.lane.b32.xlu0 %v3148, 64
  %v3251 = vpop.permute.xlu0 %3250
  %v3252 = vsel %vm376, %v3251, 0
  %3254 = vmatprep.subr.mxu0 0.0
  %3255 = vmatpush1.msra.mxu0 %v2251
  %3256 = vmatprep.subr.mxu0 0.0
  %3257 = vmatpush1.msra.mxu0 %v2252
  %3258 = vmatprep.subr.mxu0 0.0
  %3259 = vmatpush1.msra.mxu0 %v2253
  %3260 = vmatprep.subr.mxu0 0.0
  %3261 = vmatpush1.msra.mxu0 %v2254
  %3262 = vmatprep.subr.mxu0 0.0
  %3263 = vmatpush1.msra.mxu0 0.0
  %3264 = vmatprep.subr.mxu0 0.0
  %3265 = vmatpush1.msra.mxu0 0.0
  %3266 = vmatprep.subr.mxu0 0.0
  %3267 = vmatpush1.msra.mxu0 0.0
  %3268 = vmatprep.subr.mxu0 0.0
  %3269 = vmatpush1.msra.mxu0 0.0
  %3270 = vmatprep.subr.mxu0 0.0
  %3271 = vmatpush1.msra.mxu0 0.0
  %3272 = vmatprep.subr.mxu0 0.0
  %3273 = vmatpush1.msra.mxu0 0.0
  %3274 = vmatprep.subr.mxu0 0.0
  %3275 = vmatpush1.msra.mxu0 0.0
  %3276 = vmatprep.subr.mxu0 0.0
  %3277 = vmatpush1.msra.mxu0 0.0
  %3278 = vmatprep.subr.mxu0 0.0
  %3279 = vmatpush1.msra.mxu0 0.0
  %3280 = vmatprep.subr.mxu0 0.0
  %3281 = vmatpush1.msra.mxu0 0.0
  %3282 = vmatprep.subr.mxu0 0.0
  %3283 = vmatpush1.msra.mxu0 0.0
  %3284 = vmatprep.subr.mxu0 0.0
  %3285 = vmatpush1.msra.mxu0 0.0
  %3286 = vmatprep.subr.mxu0 0.0
  %3287 = vmatpush1.msra.mxu0 0.0
  %3288 = vmatprep.subr.mxu0 0.0
  %3289 = vmatpush1.msra.mxu0 0.0
  %3290 = vmatprep.subr.mxu0 0.0
  %3291 = vmatpush1.msra.mxu0 0.0
  %3292 = vmatprep.subr.mxu0 0.0
  %3293 = vmatpush1.msra.mxu0 0.0
  %3294 = vmatprep.subr.mxu0 0.0
  %3295 = vmatpush1.msra.mxu0 0.0
  %3296 = vmatprep.subr.mxu0 0.0
  %3297 = vmatpush1.msra.mxu0 0.0
  %3298 = vmatprep.subr.mxu0 0.0
  %3299 = vmatpush1.msra.mxu0 0.0
  %3300 = vmatprep.subr.mxu0 0.0
  %3301 = vmatpush1.msra.mxu0 0.0
  %3302 = vmatprep.subr.mxu0 0.0
  %3303 = vmatpush1.msra.mxu0 0.0
  %3304 = vmatprep.subr.mxu0 0.0
  %3305 = vmatpush1.msra.mxu0 0.0
  %3306 = vmatprep.subr.mxu0 0.0
  %3307 = vmatpush1.msra.mxu0 0.0
  %3308 = vmatprep.subr.mxu0 0.0
  %3309 = vmatpush1.msra.mxu0 0.0
  %3310 = vmatprep.subr.mxu0 0.0
  %3311 = vmatpush1.msra.mxu0 0.0
  %3312 = vmatprep.subr.mxu0 0.0
  %3313 = vmatpush1.msra.mxu0 0.0
  %3314 = vmatprep.subr.mxu0 0.0
  %3315 = vmatpush1.msra.mxu0 0.0
  %3316 = vmatprep.subr.mxu0 0.0
  %3317 = vmatpush1.msra.mxu0 0.0
  %3318 = vmatprep.mubr.f32.mxu0 0.0
  %3319 = vmatmul.mubr.f32.gmra.mrb[0].mxu0 %v3252
  %v3320 = vpop.f32.mrb[0].mxu0
  %v3321 = vadd.f32 0.0, %v3320
  %v3322 = vpop.f32.mrb[0].mxu0
  %3323 = vdwg.mxu0
  %v3324 = vadd.f32 %v2245, %v3321
  %v3325 = vxor.u32 %v3324, 2147483648
  %v3326 = vmul.f32 %v3325, 1.442695
  %v3327 = vpow.pop %v3326
  %v3328 = vadd.f32 %v3327, 1.0
  %v3329 = vrcp.pop %v3328
  %v3330 = vmul.f32 1.0, %v3329
  %v3331 = vtanh.pop %v3324
  %v3332 = vmul.f32 %v3330, %v3142
  %3334 = vrot.lane.b32.xlu0 %v3331, 32
  %v3335 = vpop.permute.xlu0 %3334
  %v3337 = vmul.f32 %v3330, %v3335
  %3339 = vrot.lane.b32.xlu0 %v3337, 32
  %v3340 = vpop.permute.xlu0 %3339
  %v3342 = vadd.f32 %v3332, %v3340
  %v3343 = vtanh.pop %v3342
  %3345 = vrot.lane.b32.xlu0 %v3343, 32
  %v3346 = vpop.permute.xlu0 %3345
  %v3348 = vmul.f32 %v3330, %v3346
  %3350 = vrot.lane.b32.xlu0 %v3248, 64
  %v3351 = vpop.permute.xlu0 %3350
  %v3352 = vsel %vm376, %v3351, 0
  %3354 = vmatprep.subr.mxu0 0.0
  %3355 = vmatpush1.msra.mxu0 %v2255
  %3356 = vmatprep.subr.mxu0 0.0
  %3357 = vmatpush1.msra.mxu0 %v2256
  %3358 = vmatprep.subr.mxu0 0.0
  %3359 = vmatpush1.msra.mxu0 %v2257
  %3360 = vmatprep.subr.mxu0 0.0
  %3361 = vmatpush1.msra.mxu0 %v2258
  %3362 = vmatprep.subr.mxu0 0.0
  %3363 = vmatpush1.msra.mxu0 0.0
  %3364 = vmatprep.subr.mxu0 0.0
  %3365 = vmatpush1.msra.mxu0 0.0
  %3366 = vmatprep.subr.mxu0 0.0
  %3367 = vmatpush1.msra.mxu0 0.0
  %3368 = vmatprep.subr.mxu0 0.0
  %3369 = vmatpush1.msra.mxu0 0.0
  %3370 = vmatprep.subr.mxu0 0.0
  %3371 = vmatpush1.msra.mxu0 0.0
  %3372 = vmatprep.subr.mxu0 0.0
  %3373 = vmatpush1.msra.mxu0 0.0
  %3374 = vmatprep.subr.mxu0 0.0
  %3375 = vmatpush1.msra.mxu0 0.0
  %3376 = vmatprep.subr.mxu0 0.0
  %3377 = vmatpush1.msra.mxu0 0.0
  %3378 = vmatprep.subr.mxu0 0.0
  %3379 = vmatpush1.msra.mxu0 0.0
  %3380 = vmatprep.subr.mxu0 0.0
  %3381 = vmatpush1.msra.mxu0 0.0
  %3382 = vmatprep.subr.mxu0 0.0
  %3383 = vmatpush1.msra.mxu0 0.0
  %3384 = vmatprep.subr.mxu0 0.0
  %3385 = vmatpush1.msra.mxu0 0.0
  %3386 = vmatprep.subr.mxu0 0.0
  %3387 = vmatpush1.msra.mxu0 0.0
  %3388 = vmatprep.subr.mxu0 0.0
  %3389 = vmatpush1.msra.mxu0 0.0
  %3390 = vmatprep.subr.mxu0 0.0
  %3391 = vmatpush1.msra.mxu0 0.0
  %3392 = vmatprep.subr.mxu0 0.0
  %3393 = vmatpush1.msra.mxu0 0.0
  %3394 = vmatprep.subr.mxu0 0.0
  %3395 = vmatpush1.msra.mxu0 0.0
  %3396 = vmatprep.subr.mxu0 0.0
  %3397 = vmatpush1.msra.mxu0 0.0
  %3398 = vmatprep.subr.mxu0 0.0
  %3399 = vmatpush1.msra.mxu0 0.0
  %3400 = vmatprep.subr.mxu0 0.0
  %3401 = vmatpush1.msra.mxu0 0.0
  %3402 = vmatprep.subr.mxu0 0.0
  %3403 = vmatpush1.msra.mxu0 0.0
  %3404 = vmatprep.subr.mxu0 0.0
  %3405 = vmatpush1.msra.mxu0 0.0
  %3406 = vmatprep.subr.mxu0 0.0
  %3407 = vmatpush1.msra.mxu0 0.0
  %3408 = vmatprep.subr.mxu0 0.0
  %3409 = vmatpush1.msra.mxu0 0.0
  %3410 = vmatprep.subr.mxu0 0.0
  %3411 = vmatpush1.msra.mxu0 0.0
  %3412 = vmatprep.subr.mxu0 0.0
  %3413 = vmatpush1.msra.mxu0 0.0
  %3414 = vmatprep.subr.mxu0 0.0
  %3415 = vmatpush1.msra.mxu0 0.0
  %3416 = vmatprep.subr.mxu0 0.0
  %3417 = vmatpush1.msra.mxu0 0.0
  %3418 = vmatprep.mubr.f32.mxu0 0.0
  %3419 = vmatmul.mubr.f32.gmra.mrb[0].mxu0 %v3352
  %v3420 = vpop.f32.mrb[0].mxu0
  %v3421 = vadd.f32 0.0, %v3420
  %v3422 = vpop.f32.mrb[0].mxu0
  %3423 = vdwg.mxu0
  %v3424 = vadd.f32 %v2240, %v3421
  %v3425 = vxor.u32 %v3424, 2147483648
  %v3426 = vmul.f32 %v3425, 1.442695
  %v3427 = vpow.pop %v3426
  %v3428 = vadd.f32 %v3427, 1.0
  %v3429 = vrcp.pop %v3428
  %v3430 = vmul.f32 1.0, %v3429
  %v3431 = vtanh.pop %v3424
  %v3432 = vmul.f32 %v3430, %v3242
  %3434 = vrot.lane.b32.xlu0 %v3431, 32
  %v3435 = vpop.permute.xlu0 %3434
  %v3437 = vmul.f32 %v3430, %v3435
  %3439 = vrot.lane.b32.xlu0 %v3437, 32
  %v3440 = vpop.permute.xlu0 %3439
  %v3442 = vadd.f32 %v3432, %v3440
  %v3443 = vtanh.pop %v3442
  %3445 = vrot.lane.b32.xlu0 %v3443, 32
  %v3446 = vpop.permute.xlu0 %3445
  %v3448 = vmul.f32 %v3430, %v3446
  %3450 = vrot.lane.b32.xlu0 %v3348, 64
  %v3451 = vpop.permute.xlu0 %3450
  %v3452 = vsel %vm376, %v3451, 0
  %3454 = vmatprep.subr.mxu0 0.0
  %3455 = vmatpush1.msra.mxu0 %v2251
  %3456 = vmatprep.subr.mxu0 0.0
  %3457 = vmatpush1.msra.mxu0 %v2252
  %3458 = vmatprep.subr.mxu0 0.0
  %3459 = vmatpush1.msra.mxu0 %v2253
  %3460 = vmatprep.subr.mxu0 0.0
  %3461 = vmatpush1.msra.mxu0 %v2254
  %3462 = vmatprep.subr.mxu0 0.0
  %3463 = vmatpush1.msra.mxu0 0.0
  %3464 = vmatprep.subr.mxu0 0.0
  %3465 = vmatpush1.msra.mxu0 0.0
  %3466 = vmatprep.subr.mxu0 0.0
  %3467 = vmatpush1.msra.mxu0 0.0
  %3468 = vmatprep.subr.mxu0 0.0
  %3469 = vmatpush1.msra.mxu0 0.0
  %3470 = vmatprep.subr.mxu0 0.0
  %3471 = vmatpush1.msra.mxu0 0.0
  %3472 = vmatprep.subr.mxu0 0.0
  %3473 = vmatpush1.msra.mxu0 0.0
  %3474 = vmatprep.subr.mxu0 0.0
  %3475 = vmatpush1.msra.mxu0 0.0
  %3476 = vmatprep.subr.mxu0 0.0
  %3477 = vmatpush1.msra.mxu0 0.0
  %3478 = vmatprep.subr.mxu0 0.0
  %3479 = vmatpush1.msra.mxu0 0.0
  %3480 = vmatprep.subr.mxu0 0.0
  %3481 = vmatpush1.msra.mxu0 0.0
  %3482 = vmatprep.subr.mxu0 0.0
  %3483 = vmatpush1.msra.mxu0 0.0
  %3484 = vmatprep.subr.mxu0 0.0
  %3485 = vmatpush1.msra.mxu0 0.0
  %3486 = vmatprep.subr.mxu0 0.0
  %3487 = vmatpush1.msra.mxu0 0.0
  %3488 = vmatprep.subr.mxu0 0.0
  %3489 = vmatpush1.msra.mxu0 0.0
  %3490 = vmatprep.subr.mxu0 0.0
  %3491 = vmatpush1.msra.mxu0 0.0
  %3492 = vmatprep.subr.mxu0 0.0
  %3493 = vmatpush1.msra.mxu0 0.0
  %3494 = vmatprep.subr.mxu0 0.0
  %3495 = vmatpush1.msra.mxu0 0.0
  %3496 = vmatprep.subr.mxu0 0.0
  %3497 = vmatpush1.msra.mxu0 0.0
  %3498 = vmatprep.subr.mxu0 0.0
  %3499 = vmatpush1.msra.mxu0 0.0
  %3500 = vmatprep.subr.mxu0 0.0
  %3501 = vmatpush1.msra.mxu0 0.0
  %3502 = vmatprep.subr.mxu0 0.0
  %3503 = vmatpush1.msra.mxu0 0.0
  %3504 = vmatprep.subr.mxu0 0.0
  %3505 = vmatpush1.msra.mxu0 0.0
  %3506 = vmatprep.subr.mxu0 0.0
  %3507 = vmatpush1.msra.mxu0 0.0
  %3508 = vmatprep.subr.mxu0 0.0
  %3509 = vmatpush1.msra.mxu0 0.0
  %3510 = vmatprep.subr.mxu0 0.0
  %3511 = vmatpush1.msra.mxu0 0.0
  %3512 = vmatprep.subr.mxu0 0.0
  %3513 = vmatpush1.msra.mxu0 0.0
  %3514 = vmatprep.subr.mxu0 0.0
  %3515 = vmatpush1.msra.mxu0 0.0
  %3516 = vmatprep.subr.mxu0 0.0
  %3517 = vmatpush1.msra.mxu0 0.0
  %3518 = vmatprep.mubr.f32.mxu0 0.0
  %3519 = vmatmul.mubr.f32.gmra.mrb[0].mxu0 %v3452
  %v3520 = vpop.f32.mrb[0].mxu0
  %v3521 = vadd.f32 0.0, %v3520
  %v3522 = vpop.f32.mrb[0].mxu0
  %3523 = vdwg.mxu0
  %v3524 = vadd.f32 %v2247, %v3521
  %v3525 = vxor.u32 %v3524, 2147483648
  %v3526 = vmul.f32 %v3525, 1.442695
  %v3527 = vpow.pop %v3526
  %v3528 = vadd.f32 %v3527, 1.0
  %v3529 = vrcp.pop %v3528
  %v3530 = vmul.f32 1.0, %v3529
  %v3531 = vtanh.pop %v3524
  %v3532 = vmul.f32 %v3530, %v3342
  %3534 = vrot.lane.b32.xlu0 %v3531, 32
  %v3535 = vpop.permute.xlu0 %3534
  %v3537 = vmul.f32 %v3530, %v3535
  %3539 = vrot.lane.b32.xlu0 %v3537, 32
  %v3540 = vpop.permute.xlu0 %3539
  %v3542 = vadd.f32 %v3532, %v3540
  %v3543 = vtanh.pop %v3542
  %3545 = vrot.lane.b32.xlu0 %v3543, 32
  %v3546 = vpop.permute.xlu0 %3545
  %v3548 = vmul.f32 %v3530, %v3546
  %3550 = vrot.lane.b32.xlu0 %v3448, 64
  %v3551 = vpop.permute.xlu0 %3550
  %v3552 = vsel %vm376, %v3551, 0
  %3554 = vmatprep.subr.mxu0 0.0
  %3555 = vmatpush1.msra.mxu0 %v2255
  %3556 = vmatprep.subr.mxu0 0.0
  %3557 = vmatpush1.msra.mxu0 %v2256
  %3558 = vmatprep.subr.mxu0 0.0
  %3559 = vmatpush1.msra.mxu0 %v2257
  %3560 = vmatprep.subr.mxu0 0.0
  %3561 = vmatpush1.msra.mxu0 %v2258
  %3562 = vmatprep.subr.mxu0 0.0
  %3563 = vmatpush1.msra.mxu0 0.0
  %3564 = vmatprep.subr.mxu0 0.0
  %3565 = vmatpush1.msra.mxu0 0.0
  %3566 = vmatprep.subr.mxu0 0.0
  %3567 = vmatpush1.msra.mxu0 0.0
  %3568 = vmatprep.subr.mxu0 0.0
  %3569 = vmatpush1.msra.mxu0 0.0
  %3570 = vmatprep.subr.mxu0 0.0
  %3571 = vmatpush1.msra.mxu0 0.0
  %3572 = vmatprep.subr.mxu0 0.0
  %3573 = vmatpush1.msra.mxu0 0.0
  %3574 = vmatprep.subr.mxu0 0.0
  %3575 = vmatpush1.msra.mxu0 0.0
  %3576 = vmatprep.subr.mxu0 0.0
  %3577 = vmatpush1.msra.mxu0 0.0
  %3578 = vmatprep.subr.mxu0 0.0
  %3579 = vmatpush1.msra.mxu0 0.0
  %3580 = vmatprep.subr.mxu0 0.0
  %3581 = vmatpush1.msra.mxu0 0.0
  %3582 = vmatprep.subr.mxu0 0.0
  %3583 = vmatpush1.msra.mxu0 0.0
  %3584 = vmatprep.subr.mxu0 0.0
  %3585 = vmatpush1.msra.mxu0 0.0
  %3586 = vmatprep.subr.mxu0 0.0
  %3587 = vmatpush1.msra.mxu0 0.0
  %3588 = vmatprep.subr.mxu0 0.0
  %3589 = vmatpush1.msra.mxu0 0.0
  %3590 = vmatprep.subr.mxu0 0.0
  %3591 = vmatpush1.msra.mxu0 0.0
  %3592 = vmatprep.subr.mxu0 0.0
  %3593 = vmatpush1.msra.mxu0 0.0
  %3594 = vmatprep.subr.mxu0 0.0
  %3595 = vmatpush1.msra.mxu0 0.0
  %3596 = vmatprep.subr.mxu0 0.0
  %3597 = vmatpush1.msra.mxu0 0.0
  %3598 = vmatprep.subr.mxu0 0.0
  %3599 = vmatpush1.msra.mxu0 0.0
  %3600 = vmatprep.subr.mxu0 0.0
  %3601 = vmatpush1.msra.mxu0 0.0
  %3602 = vmatprep.subr.mxu0 0.0
  %3603 = vmatpush1.msra.mxu0 0.0
  %3604 = vmatprep.subr.mxu0 0.0
  %3605 = vmatpush1.msra.mxu0 0.0
  %3606 = vmatprep.subr.mxu0 0.0
  %3607 = vmatpush1.msra.mxu0 0.0
  %3608 = vmatprep.subr.mxu0 0.0
  %3609 = vmatpush1.msra.mxu0 0.0
  %3610 = vmatprep.subr.mxu0 0.0
  %3611 = vmatpush1.msra.mxu0 0.0
  %3612 = vmatprep.subr.mxu0 0.0
  %3613 = vmatpush1.msra.mxu0 0.0
  %3614 = vmatprep.subr.mxu0 0.0
  %3615 = vmatpush1.msra.mxu0 0.0
  %3616 = vmatprep.subr.mxu0 0.0
  %3617 = vmatpush1.msra.mxu0 0.0
  %3618 = vmatprep.mubr.f32.mxu0 0.0
  %3619 = vmatmul.mubr.f32.gmra.mrb[0].mxu0 %v3552
  %v3620 = vpop.f32.mrb[0].mxu0
  %v3621 = vadd.f32 0.0, %v3620
  %v3622 = vpop.f32.mrb[0].mxu0
  %3623 = vdwg.mxu0
  %v3624 = vadd.f32 %v2238, %v3621
  %v3625 = vxor.u32 %v3624, 2147483648
  %v3626 = vmul.f32 %v3625, 1.442695
  %v3627 = vpow.pop %v3626
  %v3628 = vadd.f32 %v3627, 1.0
  %v3629 = vrcp.pop %v3628
  %v3630 = vmul.f32 1.0, %v3629
  %v3631 = vtanh.pop %v3624
  %v3632 = vmul.f32 %v3630, %v3442
  %3634 = vrot.lane.b32.xlu0 %v3631, 32
  %v3635 = vpop.permute.xlu0 %3634
  %v3637 = vmul.f32 %v3630, %v3635
  %3639 = vrot.lane.b32.xlu0 %v3637, 32
  %v3640 = vpop.permute.xlu0 %3639
  %v3642 = vadd.f32 %v3632, %v3640
  %v3643 = vtanh.pop %v3642
  %3645 = vrot.lane.b32.xlu0 %v3643, 32
  %v3646 = vpop.permute.xlu0 %3645
  %v3648 = vmul.f32 %v3630, %v3646
  %3650 = vrot.lane.b32.xlu0 %v3548, 64
  %v3651 = vpop.permute.xlu0 %3650
  %v3652 = vsel %vm376, %v3651, 0
  %3654 = vmatprep.subr.mxu0 0.0
  %3655 = vmatpush1.msra.mxu0 %v2251
  %3656 = vmatprep.subr.mxu0 0.0
  %3657 = vmatpush1.msra.mxu0 %v2252
  %3658 = vmatprep.subr.mxu0 0.0
  %3659 = vmatpush1.msra.mxu0 %v2253
  %3660 = vmatprep.subr.mxu0 0.0
  %3661 = vmatpush1.msra.mxu0 %v2254
  %3662 = vmatprep.subr.mxu0 0.0
  %3663 = vmatpush1.msra.mxu0 0.0
  %3664 = vmatprep.subr.mxu0 0.0
  %3665 = vmatpush1.msra.mxu0 0.0
  %3666 = vmatprep.subr.mxu0 0.0
  %3667 = vmatpush1.msra.mxu0 0.0
  %3668 = vmatprep.subr.mxu0 0.0
  %3669 = vmatpush1.msra.mxu0 0.0
  %3670 = vmatprep.subr.mxu0 0.0
  %3671 = vmatpush1.msra.mxu0 0.0
  %3672 = vmatprep.subr.mxu0 0.0
  %3673 = vmatpush1.msra.mxu0 0.0
  %3674 = vmatprep.subr.mxu0 0.0
  %3675 = vmatpush1.msra.mxu0 0.0
  %3676 = vmatprep.subr.mxu0 0.0
  %3677 = vmatpush1.msra.mxu0 0.0
  %3678 = vmatprep.subr.mxu0 0.0
  %3679 = vmatpush1.msra.mxu0 0.0
  %3680 = vmatprep.subr.mxu0 0.0
  %3681 = vmatpush1.msra.mxu0 0.0
  %3682 = vmatprep.subr.mxu0 0.0
  %3683 = vmatpush1.msra.mxu0 0.0
  %3684 = vmatprep.subr.mxu0 0.0
  %3685 = vmatpush1.msra.mxu0 0.0
  %3686 = vmatprep.subr.mxu0 0.0
  %3687 = vmatpush1.msra.mxu0 0.0
  %3688 = vmatprep.subr.mxu0 0.0
  %3689 = vmatpush1.msra.mxu0 0.0
  %3690 = vmatprep.subr.mxu0 0.0
  %3691 = vmatpush1.msra.mxu0 0.0
  %3692 = vmatprep.subr.mxu0 0.0
  %3693 = vmatpush1.msra.mxu0 0.0
  %3694 = vmatprep.subr.mxu0 0.0
  %3695 = vmatpush1.msra.mxu0 0.0
  %3696 = vmatprep.subr.mxu0 0.0
  %3697 = vmatpush1.msra.mxu0 0.0
  %3698 = vmatprep.subr.mxu0 0.0
  %3699 = vmatpush1.msra.mxu0 0.0
  %3700 = vmatprep.subr.mxu0 0.0
  %3701 = vmatpush1.msra.mxu0 0.0
  %3702 = vmatprep.subr.mxu0 0.0
  %3703 = vmatpush1.msra.mxu0 0.0
  %3704 = vmatprep.subr.mxu0 0.0
  %3705 = vmatpush1.msra.mxu0 0.0
  %3706 = vmatprep.subr.mxu0 0.0
  %3707 = vmatpush1.msra.mxu0 0.0
  %3708 = vmatprep.subr.mxu0 0.0
  %3709 = vmatpush1.msra.mxu0 0.0
  %3710 = vmatprep.subr.mxu0 0.0
  %3711 = vmatpush1.msra.mxu0 0.0
  %3712 = vmatprep.subr.mxu0 0.0
  %3713 = vmatpush1.msra.mxu0 0.0
  %3714 = vmatprep.subr.mxu0 0.0
  %3715 = vmatpush1.msra.mxu0 0.0
  %3716 = vmatprep.subr.mxu0 0.0
  %3717 = vmatpush1.msra.mxu0 0.0
  %3718 = vmatprep.mubr.f32.mxu0 0.0
  %3719 = vmatmul.mubr.f32.gmra.mrb[0].mxu0 %v3652
  %v3720 = vpop.f32.mrb[0].mxu0
  %v3721 = vadd.f32 0.0, %v3720
  %v3722 = vpop.f32.mrb[0].mxu0
  %3723 = vdwg.mxu0
  %v3724 = vadd.f32 %v2249, %v3721
  %v3725 = vxor.u32 %v3724, 2147483648
  %v3726 = vmul.f32 %v3725, 1.442695
  %v3727 = vpow.pop %v3726
  %v3728 = vadd.f32 %v3727, 1.0
  %v3729 = vrcp.pop %v3728
  %v3730 = vmul.f32 1.0, %v3729
  %v3731 = vtanh.pop %v3724
  %v3732 = vmul.f32 %v3730, %v3542
  %3734 = vrot.lane.b32.xlu0 %v3731, 32
  %v3735 = vpop.permute.xlu0 %3734
  %v3737 = vmul.f32 %v3730, %v3735
  %3739 = vrot.lane.b32.xlu0 %v3737, 32
  %v3740 = vpop.permute.xlu0 %3739
  %v3742 = vadd.f32 %v3732, %v3740
  %v3743 = vtanh.pop %v3742
  %3745 = vrot.lane.b32.xlu0 %v3743, 32
  %v3746 = vpop.permute.xlu0 %3745
  %v3748 = vmul.f32 %v3730, %v3746
  %3750 = vrot.lane.b32.xlu0 %v3648, 64
  %v3751 = vpop.permute.xlu0 %3750
  %v3752 = vsel %vm376, %v3751, 0
  %3754 = vmatprep.subr.mxu0 0.0
  %3755 = vmatpush1.msra.mxu0 %v2255
  %3756 = vmatprep.subr.mxu0 0.0
  %3757 = vmatpush1.msra.mxu0 %v2256
  %3758 = vmatprep.subr.mxu0 0.0
  %3759 = vmatpush1.msra.mxu0 %v2257
  %3760 = vmatprep.subr.mxu0 0.0
  %3761 = vmatpush1.msra.mxu0 %v2258
  %3762 = vmatprep.subr.mxu0 0.0
  %3763 = vmatpush1.msra.mxu0 0.0
  %3764 = vmatprep.subr.mxu0 0.0
  %3765 = vmatpush1.msra.mxu0 0.0
  %3766 = vmatprep.subr.mxu0 0.0
  %3767 = vmatpush1.msra.mxu0 0.0
  %3768 = vmatprep.subr.mxu0 0.0
  %3769 = vmatpush1.msra.mxu0 0.0
  %3770 = vmatprep.subr.mxu0 0.0
  %3771 = vmatpush1.msra.mxu0 0.0
  %3772 = vmatprep.subr.mxu0 0.0
  %3773 = vmatpush1.msra.mxu0 0.0
  %3774 = vmatprep.subr.mxu0 0.0
  %3775 = vmatpush1.msra.mxu0 0.0
  %3776 = vmatprep.subr.mxu0 0.0
  %3777 = vmatpush1.msra.mxu0 0.0
  %3778 = vmatprep.subr.mxu0 0.0
  %3779 = vmatpush1.msra.mxu0 0.0
  %3780 = vmatprep.subr.mxu0 0.0
  %3781 = vmatpush1.msra.mxu0 0.0
  %3782 = vmatprep.subr.mxu0 0.0
  %3783 = vmatpush1.msra.mxu0 0.0
  %3784 = vmatprep.subr.mxu0 0.0
  %3785 = vmatpush1.msra.mxu0 0.0
  %3786 = vmatprep.subr.mxu0 0.0
  %3787 = vmatpush1.msra.mxu0 0.0
  %3788 = vmatprep.subr.mxu0 0.0
  %3789 = vmatpush1.msra.mxu0 0.0
  %3790 = vmatprep.subr.mxu0 0.0
  %3791 = vmatpush1.msra.mxu0 0.0
  %3792 = vmatprep.subr.mxu0 0.0
  %3793 = vmatpush1.msra.mxu0 0.0
  %3794 = vmatprep.subr.mxu0 0.0
  %3795 = vmatpush1.msra.mxu0 0.0
  %3796 = vmatprep.subr.mxu0 0.0
  %3797 = vmatpush1.msra.mxu0 0.0
  %3798 = vmatprep.subr.mxu0 0.0
  %3799 = vmatpush1.msra.mxu0 0.0
  %3800 = vmatprep.subr.mxu0 0.0
  %3801 = vmatpush1.msra.mxu0 0.0
  %3802 = vmatprep.subr.mxu0 0.0
  %3803 = vmatpush1.msra.mxu0 0.0
  %3804 = vmatprep.subr.mxu0 0.0
  %3805 = vmatpush1.msra.mxu0 0.0
  %3806 = vmatprep.subr.mxu0 0.0
  %3807 = vmatpush1.msra.mxu0 0.0
  %3808 = vmatprep.subr.mxu0 0.0
  %3809 = vmatpush1.msra.mxu0 0.0
  %3810 = vmatprep.subr.mxu0 0.0
  %3811 = vmatpush1.msra.mxu0 0.0
  %3812 = vmatprep.subr.mxu0 0.0
  %3813 = vmatpush1.msra.mxu0 0.0
  %3814 = vmatprep.subr.mxu0 0.0
  %3815 = vmatpush1.msra.mxu0 0.0
  %3816 = vmatprep.subr.mxu0 0.0
  %3817 = vmatpush1.msra.mxu0 0.0
  %3818 = vmatprep.mubr.f32.mxu0 0.0
  %3819 = vmatmul.mubr.f32.gmra.mrb[0].mxu0 %v3752
  %v3820 = vpop.f32.mrb[0].mxu0
  %v3821 = vadd.f32 0.0, %v3820
  %v3822 = vpop.f32.mrb[0].mxu0
  %3823 = vdwg.mxu0
  %v3824 = vadd.f32 %v2236, %v3821
  %v3825 = vxor.u32 %v3824, 2147483648
  %v3826 = vmul.f32 %v3825, 1.442695
  %v3827 = vpow.pop %v3826
  %v3828 = vadd.f32 %v3827, 1.0
  %v3829 = vrcp.pop %v3828
  %v3830 = vmul.f32 1.0, %v3829
  %v3831 = vtanh.pop %v3824
  %v3832 = vmul.f32 %v3830, %v3642
  %3834 = vrot.lane.b32.xlu0 %v3831, 32
  %v3835 = vpop.permute.xlu0 %3834
  %v3837 = vmul.f32 %v3830, %v3835
  %3839 = vrot.lane.b32.xlu0 %v3837, 32
  %v3840 = vpop.permute.xlu0 %3839
  %v3842 = vadd.f32 %v3832, %v3840
  %v3843 = vtanh.pop %v3842
  %3845 = vrot.lane.b32.xlu0 %v3843, 32
  %v3846 = vpop.permute.xlu0 %3845
  %v3848 = vmul.f32 %v3830, %v3846
  %v3849 = vld [vmem:[%s10] sm:$0xff]
  %v3850 = vld [vmem:[%s10 + $0x8] sm:$0xff]
  %v3851 = vld [vmem:[%s10 + $0x10] sm:$0xff]
  %v3852 = vld [vmem:[%s10 + $0x18] sm:$0xff]
  %s3853 = scalar_lea.vmem %s10, 32
  %v3854 = vld [vmem:[%s3853] sm:$0xff]
  %v3855 = vld [vmem:[%s3853 + $0x8] sm:$0xff]
  %v3856 = vld [vmem:[%s3853 + $0x10] sm:$0xff]
  %v3857 = vld [vmem:[%s3853 + $0x18] sm:$0xff]
  %3859 = vrot.lane.b32.xlu0 %v3848, 64
  %v3860 = vpop.permute.xlu0 %3859
  %v3861 = vsel %vm376, %v3860, 0
  %3863 = vmatprep.subr.mxu0 0.0
  %3864 = vmatpush1.msra.mxu0 %v3854
  %3865 = vmatprep.subr.mxu0 0.0
  %3866 = vmatpush1.msra.mxu0 %v3855
  %3867 = vmatprep.subr.mxu0 0.0
  %3868 = vmatpush1.msra.mxu0 %v3856
  %3869 = vmatprep.subr.mxu0 0.0
  %3870 = vmatpush1.msra.mxu0 %v3857
  %3871 = vmatprep.subr.mxu0 0.0
  %3872 = vmatpush1.msra.mxu0 0.0
  %3873 = vmatprep.subr.mxu0 0.0
  %3874 = vmatpush1.msra.mxu0 0.0
  %3875 = vmatprep.subr.mxu0 0.0
  %3876 = vmatpush1.msra.mxu0 0.0
  %3877 = vmatprep.subr.mxu0 0.0
  %3878 = vmatpush1.msra.mxu0 0.0
  %3879 = vmatprep.subr.mxu0 0.0
  %3880 = vmatpush1.msra.mxu0 0.0
  %3881 = vmatprep.subr.mxu0 0.0
  %3882 = vmatpush1.msra.mxu0 0.0
  %3883 = vmatprep.subr.mxu0 0.0
  %3884 = vmatpush1.msra.mxu0 0.0
  %3885 = vmatprep.subr.mxu0 0.0
  %3886 = vmatpush1.msra.mxu0 0.0
  %3887 = vmatprep.subr.mxu0 0.0
  %3888 = vmatpush1.msra.mxu0 0.0
  %3889 = vmatprep.subr.mxu0 0.0
  %3890 = vmatpush1.msra.mxu0 0.0
  %3891 = vmatprep.subr.mxu0 0.0
  %3892 = vmatpush1.msra.mxu0 0.0
  %3893 = vmatprep.subr.mxu0 0.0
  %3894 = vmatpush1.msra.mxu0 0.0
  %3895 = vmatprep.subr.mxu0 0.0
  %3896 = vmatpush1.msra.mxu0 0.0
  %3897 = vmatprep.subr.mxu0 0.0
  %3898 = vmatpush1.msra.mxu0 0.0
  %3899 = vmatprep.subr.mxu0 0.0
  %3900 = vmatpush1.msra.mxu0 0.0
  %3901 = vmatprep.subr.mxu0 0.0
  %3902 = vmatpush1.msra.mxu0 0.0
  %3903 = vmatprep.subr.mxu0 0.0
  %3904 = vmatpush1.msra.mxu0 0.0
  %3905 = vmatprep.subr.mxu0 0.0
  %3906 = vmatpush1.msra.mxu0 0.0
  %3907 = vmatprep.subr.mxu0 0.0
  %3908 = vmatpush1.msra.mxu0 0.0
  %3909 = vmatprep.subr.mxu0 0.0
  %3910 = vmatpush1.msra.mxu0 0.0
  %3911 = vmatprep.subr.mxu0 0.0
  %3912 = vmatpush1.msra.mxu0 0.0
  %3913 = vmatprep.subr.mxu0 0.0
  %3914 = vmatpush1.msra.mxu0 0.0
  %3915 = vmatprep.subr.mxu0 0.0
  %3916 = vmatpush1.msra.mxu0 0.0
  %3917 = vmatprep.subr.mxu0 0.0
  %3918 = vmatpush1.msra.mxu0 0.0
  %3919 = vmatprep.subr.mxu0 0.0
  %3920 = vmatpush1.msra.mxu0 0.0
  %3921 = vmatprep.subr.mxu0 0.0
  %3922 = vmatpush1.msra.mxu0 0.0
  %3923 = vmatprep.subr.mxu0 0.0
  %3924 = vmatpush1.msra.mxu0 0.0
  %3925 = vmatprep.subr.mxu0 0.0
  %3926 = vmatpush1.msra.mxu0 0.0
  %3927 = vmatprep.mubr.f32.mxu0 0.0
  %3928 = vmatmul.mubr.f32.gmra.mrb[0].mxu0 %v3861
  %v3929 = vpop.f32.mrb[0].mxu0
  %v3930 = vadd.f32 0.0, %v3929
  %v3931 = vpop.f32.mrb[0].mxu0
  %3932 = vdwg.mxu0
  %3934 = vrot.lane.b32.xlu0 %v3748, 64
  %v3935 = vpop.permute.xlu0 %3934
  %v3936 = vsel %vm376, %v3935, 0
  %3938 = vmatprep.subr.mxu0 0.0
  %3939 = vmatpush1.msra.mxu0 %v3849
  %3940 = vmatprep.subr.mxu0 0.0
  %3941 = vmatpush1.msra.mxu0 %v3850
  %3942 = vmatprep.subr.mxu0 0.0
  %3943 = vmatpush1.msra.mxu0 %v3851
  %3944 = vmatprep.subr.mxu0 0.0
  %3945 = vmatpush1.msra.mxu0 %v3852
  %3946 = vmatprep.subr.mxu0 0.0
  %3947 = vmatpush1.msra.mxu0 0.0
  %3948 = vmatprep.subr.mxu0 0.0
  %3949 = vmatpush1.msra.mxu0 0.0
  %3950 = vmatprep.subr.mxu0 0.0
  %3951 = vmatpush1.msra.mxu0 0.0
  %3952 = vmatprep.subr.mxu0 0.0
  %3953 = vmatpush1.msra.mxu0 0.0
  %3954 = vmatprep.subr.mxu0 0.0
  %3955 = vmatpush1.msra.mxu0 0.0
  %3956 = vmatprep.subr.mxu0 0.0
  %3957 = vmatpush1.msra.mxu0 0.0
  %3958 = vmatprep.subr.mxu0 0.0
  %3959 = vmatpush1.msra.mxu0 0.0
  %3960 = vmatprep.subr.mxu0 0.0
  %3961 = vmatpush1.msra.mxu0 0.0
  %3962 = vmatprep.subr.mxu0 0.0
  %3963 = vmatpush1.msra.mxu0 0.0
  %3964 = vmatprep.subr.mxu0 0.0
  %3965 = vmatpush1.msra.mxu0 0.0
  %3966 = vmatprep.subr.mxu0 0.0
  %3967 = vmatpush1.msra.mxu0 0.0
  %3968 = vmatprep.subr.mxu0 0.0
  %3969 = vmatpush1.msra.mxu0 0.0
  %3970 = vmatprep.subr.mxu0 0.0
  %3971 = vmatpush1.msra.mxu0 0.0
  %3972 = vmatprep.subr.mxu0 0.0
  %3973 = vmatpush1.msra.mxu0 0.0
  %3974 = vmatprep.subr.mxu0 0.0
  %3975 = vmatpush1.msra.mxu0 0.0
  %3976 = vmatprep.subr.mxu0 0.0
  %3977 = vmatpush1.msra.mxu0 0.0
  %3978 = vmatprep.subr.mxu0 0.0
  %3979 = vmatpush1.msra.mxu0 0.0
  %3980 = vmatprep.subr.mxu0 0.0
  %3981 = vmatpush1.msra.mxu0 0.0
  %3982 = vmatprep.subr.mxu0 0.0
  %3983 = vmatpush1.msra.mxu0 0.0
  %3984 = vmatprep.subr.mxu0 0.0
  %3985 = vmatpush1.msra.mxu0 0.0
  %3986 = vmatprep.subr.mxu0 0.0
  %3987 = vmatpush1.msra.mxu0 0.0
  %3988 = vmatprep.subr.mxu0 0.0
  %3989 = vmatpush1.msra.mxu0 0.0
  %3990 = vmatprep.subr.mxu0 0.0
  %3991 = vmatpush1.msra.mxu0 0.0
  %3992 = vmatprep.subr.mxu0 0.0
  %3993 = vmatpush1.msra.mxu0 0.0
  %3994 = vmatprep.subr.mxu0 0.0
  %3995 = vmatpush1.msra.mxu0 0.0
  %3996 = vmatprep.subr.mxu0 0.0
  %3997 = vmatpush1.msra.mxu0 0.0
  %3998 = vmatprep.subr.mxu0 0.0
  %3999 = vmatpush1.msra.mxu0 0.0
  %4000 = vmatprep.subr.mxu0 0.0
  %4001 = vmatpush1.msra.mxu0 0.0
  %4002 = vmatprep.mubr.f32.mxu0 0.0
  %4003 = vmatmul.mubr.f32.gmra.mrb[0].mxu0 %v3936
  %v4004 = vpop.f32.mrb[0].mxu0
  %v4005 = vadd.f32 %v3930, %v4004
  %v4006 = vpop.f32.mrb[0].mxu0
  %4007 = vdwg.mxu0
  %v4008 = vld [vmem:[#allocation2] sm:$0x1]
  %v4010 = vlaneseq
  %v4011 = vshrl.u32 %v4010, 7
  %v4012 = vsub.s32 0, %v4011
  %v4013 = vrot.slane %v4008, %v4012
  %v4015 = vadd.f32 %v4005, %v4013
  %vm4016 = vcmask 7168
  %4017 = vst.msk [vmem:[%s12] sm:$0xff] %vm4016, %v4015
  // Predicated region
  $region50: #{sentiment_forward.1} parent=0 // pred_check
    _
  $region51: #{sentiment_forward.1} parent=0 // pred_check_branch
    %4019 = sbr.rel (0) target = $region53
  $region52: #{sentiment_forward.1} parent=0 // pred_region
    _
  $region53: #{sentiment_forward.1} parent=0 // pred_fallthru
    _
  // Predicated region
  $region54: #{sentiment_forward.1} parent=0 // pred_check
    _
  $region55: #{sentiment_forward.1} parent=0 // pred_check_branch
    %4021 = sbr.rel (0) target = $region57
  $region56: #{sentiment_forward.1} parent=0 // pred_region
    _
  $region57: #{sentiment_forward.1} parent=0 // pred_fallthru
    _

</llo_original>
